<compile_context>
chip_gen: v6e
topology: v6e:2x2x1
jax: 0.10.0
libtpu: 0.0.40
codegen_flags: <defaults>
</compile_context>

<pallas_src>
import math

import jax
import jax.numpy as jnp
import numpy as np
from jax import lax
from jax.experimental import pallas as pl
from jax.experimental.pallas import tpu as pltpu


# ------------------------------ Pallas kernel -------------------------------

def net_kernel(x_ref, w1_ref, b1_ref, w2_ref, b2_ref, fcw_ref, fcb_ref, o_ref):
    bt = x_ref.shape[0]

    # ---- conv1 (1 -> 10, k=5) as one banded MXU matmul ----------------------
    xb = x_ref[...].astype(jnp.bfloat16)                        # (bt, 28, 28)
    # Height-direction "im2col" only: 5 wide (28-lane) concats, lanes = (i, w).
    hp1 = jnp.concatenate([xb[:, i:i + 24, :] for i in range(5)], axis=2)
    hp1 = hp1.reshape(bt * 24, 5 * 28)                          # rows = (b, oh)
    y1 = jnp.dot(hp1, w1_ref[...], preferred_element_type=jnp.float32)
    y1 = y1 + b1_ref[...]                 # (bt*24, 240), lanes = (p, ow2, c)

    # 2x2 max-pool + relu: row-pair max (height) then lane-half max (width).
    t1 = y1.reshape(bt * 12, 2, 240)
    h1 = jnp.maximum(t1[:, 0], t1[:, 1])                        # (bt*12, 240)
    h1 = jnp.maximum(jnp.maximum(h1[:, :120], h1[:, 120:]), 0.0)
    h1 = h1.astype(jnp.bfloat16)          # (bt*12, 120), lanes = (ow2, c)

    # ---- conv2 (10 -> 20, k=5) as one banded MXU matmul ---------------------
    h1 = h1.reshape(bt, 12, 120)
    hp2 = jnp.concatenate([h1[:, i:i + 8, :] for i in range(5)], axis=2)
    hp2 = hp2.reshape(bt * 8, 5 * 120)                          # rows = (b, oy)
    y2 = jnp.dot(hp2, w2_ref[...], preferred_element_type=jnp.float32)
    y2 = y2 + b2_ref[...]                 # (bt*8, 160), lanes = (p, ox2, c)

    t2 = y2.reshape(bt * 4, 2, 160)
    h2 = jnp.maximum(t2[:, 0], t2[:, 1])                        # (bt*4, 160)
    h2 = jnp.maximum(jnp.maximum(h2[:, :80], h2[:, 80:]), 0.0)  # (bt*4, 80)

    # ---- fc (320 -> 10), fused: features never leave VMEM -------------------
    h2 = h2.reshape(bt, 4, 80)
    flat = jnp.concatenate([h2[:, r, :] for r in range(4)], axis=1)  # (bt, 320)
    out = jnp.dot(flat.astype(jnp.bfloat16), fcw_ref[...],
                  preferred_element_type=jnp.float32) + fcb_ref[...]
    o_ref[...] = out.astype(o_ref.dtype)


# ------------------------------ tiling helpers ------------------------------

_PER_ROW_VMEM = 512 * 1024   # generous lane-padded VMEM accounting per batch row


def _vmem_capacity_bytes():
    try:
        return int(pltpu.get_tpu_info().vmem_capacity_bytes)
    except Exception:
        return 64 * 1024 * 1024   # assume the tightest budget (v7x-sized)


def _round_up(n, m):
    return -(-n // m) * m


def _tile_batch(batch, vmem_cap):
    """Pick (batch_tile, padded_batch).

    The tile is a multiple of 8, sized so the per-step footprint stays inside
    roughly half of physical VMEM (=> ~64 rows on v7x, ~128 on v5e/v6e), and
    odd batches are padded up instead of degrading to tiny tiles.
    """
    budget = max(8 * _PER_ROW_VMEM, vmem_cap // 2)
    bt_cap = max(8, min(128, (budget // _PER_ROW_VMEM) // 8 * 8))
    b8 = _round_up(batch, 8)
    if b8 <= bt_cap:
        return b8, b8                      # one large step (small batches)
    n_steps = -(-b8 // bt_cap)             # balanced, near-maximal tiles
    bt = _round_up(-(-b8 // n_steps), 8)
    return bt, n_steps * bt


# --------------------------------- wrapper ----------------------------------

def net_forward(x_nchw, prep):
    batch = x_nchw.shape[0]
    vmem_cap = _vmem_capacity_bytes()
    bt, b_pad = _tile_batch(batch, vmem_cap)

    # NCHW (B,1,28,28) -> (B,28,28): metadata only (C == 1); width in lanes.
    x = x_nchw.reshape(batch, 28, 28)
    if b_pad != batch:
        x = jnp.pad(x, ((0, b_pad - batch), (0, 0), (0, 0)))

    out = pl.pallas_call(
        net_kernel,
        out_shape=jax.ShapeDtypeStruct((b_pad, 10), jnp.float32),
        grid=(b_pad // bt,),
        in_specs=[
            pl.BlockSpec((bt, 28, 28), lambda i: (i, 0, 0)),
            pl.BlockSpec((140, 240), lambda i: (0, 0)),   # conv1 banded weight
            pl.BlockSpec((1, 240), lambda i: (0, 0)),     # conv1 banded bias
            pl.BlockSpec((600, 160), lambda i: (0, 0)),   # conv2 banded weight
            pl.BlockSpec((1, 160), lambda i: (0, 0)),     # conv2 banded bias
            pl.BlockSpec((320, 10), lambda i: (0, 0)),    # fc weight
            pl.BlockSpec((1, 10), lambda i: (0, 0)),      # fc bias
        ],
        out_specs=pl.BlockSpec((bt, 10), lambda i: (i, 0)),
        compiler_params=pltpu.CompilerParams(
            dimension_semantics=("parallel",),
            vmem_limit_bytes=int(vmem_cap * 0.85),
        ),
    )(x, prep["w1"], prep["b1"], prep["w2"], prep["b2"],
      prep["fc_w"], prep["fc_b"])

    return out[:batch]


# ------------------------------- parameters ---------------------------------

def init_params(key):
    """Deterministic init mimicking PyTorch's uniform(+-1/sqrt(fan_in))."""
    ks = jax.random.split(key, 6)

    def u(k, shape, fan_in):
        bound = 1.0 / math.sqrt(fan_in)
        return jax.random.uniform(k, shape, jnp.float32, -bound, bound)

    return {
        "conv1_w": u(ks[0], (10, 1, 5, 5), 1 * 5 * 5),
        "conv1_b": u(ks[1], (10,), 1 * 5 * 5),
        "conv2_w": u(ks[2], (20, 10, 5, 5), 10 * 5 * 5),
        "conv2_b": u(ks[3], (20,), 10 * 5 * 5),
        "fc_w":    u(ks[4], (10, 320), 320),
        "fc_b":    u(ks[5], (10,), 320),
    }


def _band_conv_weight(w_oihw, in_w):
    """Banded weight for 'valid conv as a single matmul over the width axis'.

    K rows are ordered (row-shift i, input_x, cin); N columns are ordered
    (out_x parity, out_x // 2, cout) so the width max-pool is a lane-half max.
    """
    w = np.asarray(w_oihw, dtype=np.float32)
    cout, cin, kh, kw = w.shape
    out_w = in_w - kw + 1
    half = out_w // 2
    band = np.zeros((kh * in_w * cin, out_w * cout), dtype=np.float32)
    for i in range(kh):
        for ox in range(out_w):
            n0 = ((ox % 2) * half + ox // 2) * cout
            for j in range(kw):
                k0 = (i * in_w + ox + j) * cin
                band[k0:k0 + cin, n0:n0 + cout] = w[:, :, i, j].T
    return band


def prepare_params(params):
    """One-time (hoisted) conversion of PyTorch-layout params to kernel layouts."""
    w1 = _band_conv_weight(params["conv1_w"], in_w=28)          # (140, 240)
    w2 = _band_conv_weight(params["conv2_w"], in_w=12)          # (600, 160)
    b1 = np.tile(np.asarray(params["conv1_b"], np.float32), 24).reshape(1, 240)
    b2 = np.tile(np.asarray(params["conv2_b"], np.float32), 8).reshape(1, 160)

    # torch's NCHW flatten (c, h, w) is folded into the fc weight so the
    # kernel's (h, w, c)-ordered features feed it directly.
    fc_w = np.asarray(params["fc_w"], np.float32).reshape(10, 20, 4, 4)
    fc_w = np.transpose(fc_w, (2, 3, 1, 0)).reshape(320, 10)
    fc_b = np.asarray(params["fc_b"], np.float32).reshape(1, 10)

    return {
        "w1": jnp.asarray(w1, jnp.bfloat16),
        "b1": jnp.asarray(b1, jnp.float32),
        "w2": jnp.asarray(w2, jnp.bfloat16),
        "b2": jnp.asarray(b2, jnp.float32),
        "fc_w": jnp.asarray(fc_w, jnp.bfloat16),
        "fc_b": jnp.asarray(fc_b, jnp.float32),
    }


# ------------------------------ pure-JAX reference ---------------------------

def _maxpool2(y):  # NCHW 2x2 max pool
    b, c, h, w = y.shape
    return y.reshape(b, c, h // 2, 2, w // 2, 2).max(axis=(3, 5))


def net_reference(x_nchw, params):
    dn = ("NCHW", "OIHW", "NCHW")
    y = lax.conv_general_dilated(x_nchw, params["conv1_w"], (1, 1), "VALID",
                                 dimension_numbers=dn)
    y = jnp.maximum(_maxpool2(y + params["conv1_b"][None, :, None, None]), 0.0)
    y = lax.conv_general_dilated(y, params["conv2_w"], (1, 1), "VALID",
                                 dimension_numbers=dn)
    y = jnp.maximum(_maxpool2(y + params["conv2_b"][None, :, None, None]), 0.0)
    y = y.reshape(x_nchw.shape[0], -1)
    return y @ params["fc_w"].T + params["fc_b"]


if __name__ == "__main__":
    key = jax.random.PRNGKey(0)
    k_params, k_x = jax.random.split(key)
    params = init_params(k_params)
    prep = prepare_params(params)

    # fc expects 320 = 20*4*4 features -> spatial input must be 28x28.
    x = jax.random.normal(k_x, (2, 1, 28, 28), dtype=jnp.float32)

    out = jax.jit(net_forward)(x, prep)
    out = jax.block_until_ready(out)
    assert out.shape == (2, 10) and out.dtype == jnp.float32
    assert bool(jnp.all(jnp.isfinite(out)))

    # Sanity check vs. an f32 XLA reference (loose tol: bf16 MXU operands).
    ref = net_reference(x, params)
    err = float(jnp.max(jnp.abs(out - ref)))
    assert err < 0.15, f"mismatch vs reference: max abs err = {err}"

    print("KERNEL_OK")
</pallas_src>

<mosaic_0001>
module attributes {stable_mosaic.version = 11 : i64} {
  func.func @net_kernel(%arg0: i32, %arg1: memref<8x28x28xf32, #tpu.memory_space<vmem>>, %arg2: memref<140x240xbf16, #tpu.memory_space<vmem>>, %arg3: memref<1x240xf32, #tpu.memory_space<vmem>>, %arg4: memref<600x160xbf16, #tpu.memory_space<vmem>>, %arg5: memref<1x160xf32, #tpu.memory_space<vmem>>, %arg6: memref<320x10xbf16, #tpu.memory_space<vmem>>, %arg7: memref<1x10xf32, #tpu.memory_space<vmem>>, %arg8: memref<8x10xf32, #tpu.memory_space<vmem>>) attributes {dimension_semantics = [#tpu.dimension_semantics<parallel>], iteration_bounds = array<i64: 1>, scalar_prefetch = 0 : i64, scratch_operands = 0 : i64, tpu.core_type = #tpu.core_type<tc>, window_params = [{transform_indices = @transform_0, window_bounds = array<i64: 8, 28, 28>}, {pipeline_mode = #tpu.pipeline_mode<synchronous>, transform_indices = @transform_1, window_bounds = array<i64: 140, 240>}, {pipeline_mode = #tpu.pipeline_mode<synchronous>, transform_indices = @transform_2, window_bounds = array<i64: 1, 240>}, {pipeline_mode = #tpu.pipeline_mode<synchronous>, transform_indices = @transform_3, window_bounds = array<i64: 600, 160>}, {pipeline_mode = #tpu.pipeline_mode<synchronous>, transform_indices = @transform_4, window_bounds = array<i64: 1, 160>}, {pipeline_mode = #tpu.pipeline_mode<synchronous>, transform_indices = @transform_5, window_bounds = array<i64: 320, 10>}, {pipeline_mode = #tpu.pipeline_mode<synchronous>, transform_indices = @transform_6, window_bounds = array<i64: 1, 10>}, {transform_indices = @transform_7, window_bounds = array<i64: 8, 10>}]} {
    %c0 = arith.constant 0 : index
    %c0_0 = arith.constant 0 : index
    %c0_1 = arith.constant 0 : index
    %0 = vector.load %arg1[%c0, %c0_0, %c0_1] : memref<8x28x28xf32, #tpu.memory_space<vmem>>, vector<8x28x28xf32>
    %1 = arith.truncf %0 : vector<8x28x28xf32> to vector<8x28x28xbf16>
    %2 = vector.extract_strided_slice %1 {offsets = [0, 0, 0], sizes = [8, 24, 28], strides = [1, 1, 1]} : vector<8x28x28xbf16> to vector<8x24x28xbf16>
    %3 = vector.extract_strided_slice %1 {offsets = [0, 1, 0], sizes = [8, 24, 28], strides = [1, 1, 1]} : vector<8x28x28xbf16> to vector<8x24x28xbf16>
    %4 = vector.extract_strided_slice %1 {offsets = [0, 2, 0], sizes = [8, 24, 28], strides = [1, 1, 1]} : vector<8x28x28xbf16> to vector<8x24x28xbf16>
    %5 = vector.extract_strided_slice %1 {offsets = [0, 3, 0], sizes = [8, 24, 28], strides = [1, 1, 1]} : vector<8x28x28xbf16> to vector<8x24x28xbf16>
    %6 = vector.extract_strided_slice %1 {offsets = [0, 4, 0], sizes = [8, 24, 28], strides = [1, 1, 1]} : vector<8x28x28xbf16> to vector<8x24x28xbf16>
    %7 = tpu.concatenate %2, %3, %4, %5, %6 in 2 : vector<8x24x28xbf16>, vector<8x24x28xbf16>, vector<8x24x28xbf16>, vector<8x24x28xbf16>, vector<8x24x28xbf16> -> vector<8x24x140xbf16>
    %8 = vector.shape_cast %7 : vector<8x24x140xbf16> to vector<192x140xbf16>
    %c0_2 = arith.constant 0 : index
    %c0_3 = arith.constant 0 : index
    %9 = vector.load %arg2[%c0_2, %c0_3] : memref<140x240xbf16, #tpu.memory_space<vmem>>, vector<140x240xbf16>
    %cst = arith.constant dense<0.000000e+00> : vector<192x240xf32>
    %10 = tpu.matmul %8, %9, %cst {dimension_numbers = #tpu.dot_dimension_numbers<[1], [0], [0], [1], [0, 0, 1, 1], [], []>} : vector<192x140xbf16>, vector<140x240xbf16>, vector<192x240xf32> -> vector<192x240xf32>
    %c0_4 = arith.constant 0 : index
    %c0_5 = arith.constant 0 : index
    %11 = vector.load %arg3[%c0_4, %c0_5] : memref<1x240xf32, #tpu.memory_space<vmem>>, vector<1x240xf32>
    %12 = vector.broadcast %11 : vector<1x240xf32> to vector<192x240xf32>
    %13 = arith.addf %10, %12 : vector<192x240xf32>
    %14 = vector.shape_cast %13 : vector<192x240xf32> to vector<96x2x240xf32>
    %15 = vector.extract_strided_slice %14 {offsets = [0, 0, 0], sizes = [96, 1, 240], strides = [1, 1, 1]} : vector<96x2x240xf32> to vector<96x1x240xf32>
    %16 = vector.shape_cast %15 : vector<96x1x240xf32> to vector<96x240xf32>
    %17 = vector.extract_strided_slice %14 {offsets = [0, 1, 0], sizes = [96, 1, 240], strides = [1, 1, 1]} : vector<96x2x240xf32> to vector<96x1x240xf32>
    %18 = vector.shape_cast %17 : vector<96x1x240xf32> to vector<96x240xf32>
    %19 = arith.maximumf %16, %18 : vector<96x240xf32>
    %20 = vector.extract_strided_slice %19 {offsets = [0, 0], sizes = [96, 120], strides = [1, 1]} : vector<96x240xf32> to vector<96x120xf32>
    %21 = vector.extract_strided_slice %19 {offsets = [0, 120], sizes = [96, 120], strides = [1, 1]} : vector<96x240xf32> to vector<96x120xf32>
    %22 = arith.maximumf %20, %21 : vector<96x120xf32>
    %cst_6 = arith.constant 0.000000e+00 : f32
    %23 = vector.broadcast %cst_6 : f32 to vector<96x120xf32>
    %24 = arith.maximumf %22, %23 : vector<96x120xf32>
    %25 = arith.truncf %24 : vector<96x120xf32> to vector<96x120xbf16>
    %26 = vector.shape_cast %25 : vector<96x120xbf16> to vector<8x12x120xbf16>
    %27 = vector.extract_strided_slice %26 {offsets = [0, 0, 0], sizes = [8, 8, 120], strides = [1, 1, 1]} : vector<8x12x120xbf16> to vector<8x8x120xbf16>
    %28 = vector.extract_strided_slice %26 {offsets = [0, 1, 0], sizes = [8, 8, 120], strides = [1, 1, 1]} : vector<8x12x120xbf16> to vector<8x8x120xbf16>
    %29 = vector.extract_strided_slice %26 {offsets = [0, 2, 0], sizes = [8, 8, 120], strides = [1, 1, 1]} : vector<8x12x120xbf16> to vector<8x8x120xbf16>
    %30 = vector.extract_strided_slice %26 {offsets = [0, 3, 0], sizes = [8, 8, 120], strides = [1, 1, 1]} : vector<8x12x120xbf16> to vector<8x8x120xbf16>
    %31 = vector.extract_strided_slice %26 {offsets = [0, 4, 0], sizes = [8, 8, 120], strides = [1, 1, 1]} : vector<8x12x120xbf16> to vector<8x8x120xbf16>
    %32 = tpu.concatenate %27, %28, %29, %30, %31 in 2 : vector<8x8x120xbf16>, vector<8x8x120xbf16>, vector<8x8x120xbf16>, vector<8x8x120xbf16>, vector<8x8x120xbf16> -> vector<8x8x600xbf16>
    %33 = vector.shape_cast %32 : vector<8x8x600xbf16> to vector<64x600xbf16>
    %c0_7 = arith.constant 0 : index
    %c0_8 = arith.constant 0 : index
    %34 = vector.load %arg4[%c0_7, %c0_8] : memref<600x160xbf16, #tpu.memory_space<vmem>>, vector<600x160xbf16>
    %cst_9 = arith.constant dense<0.000000e+00> : vector<64x160xf32>
    %35 = tpu.matmul %33, %34, %cst_9 {dimension_numbers = #tpu.dot_dimension_numbers<[1], [0], [0], [1], [0, 0, 1, 1], [], []>} : vector<64x600xbf16>, vector<600x160xbf16>, vector<64x160xf32> -> vector<64x160xf32>
    %c0_10 = arith.constant 0 : index
    %c0_11 = arith.constant 0 : index
    %36 = vector.load %arg5[%c0_10, %c0_11] : memref<1x160xf32, #tpu.memory_space<vmem>>, vector<1x160xf32>
    %37 = vector.broadcast %36 : vector<1x160xf32> to vector<64x160xf32>
    %38 = arith.addf %35, %37 : vector<64x160xf32>
    %39 = vector.shape_cast %38 : vector<64x160xf32> to vector<32x2x160xf32>
    %40 = vector.extract_strided_slice %39 {offsets = [0, 0, 0], sizes = [32, 1, 160], strides = [1, 1, 1]} : vector<32x2x160xf32> to vector<32x1x160xf32>
    %41 = vector.shape_cast %40 : vector<32x1x160xf32> to vector<32x160xf32>
    %42 = vector.extract_strided_slice %39 {offsets = [0, 1, 0], sizes = [32, 1, 160], strides = [1, 1, 1]} : vector<32x2x160xf32> to vector<32x1x160xf32>
    %43 = vector.shape_cast %42 : vector<32x1x160xf32> to vector<32x160xf32>
    %44 = arith.maximumf %41, %43 : vector<32x160xf32>
    %45 = vector.extract_strided_slice %44 {offsets = [0, 0], sizes = [32, 80], strides = [1, 1]} : vector<32x160xf32> to vector<32x80xf32>
    %46 = vector.extract_strided_slice %44 {offsets = [0, 80], sizes = [32, 80], strides = [1, 1]} : vector<32x160xf32> to vector<32x80xf32>
    %47 = arith.maximumf %45, %46 : vector<32x80xf32>
    %cst_12 = arith.constant 0.000000e+00 : f32
    %48 = vector.broadcast %cst_12 : f32 to vector<32x80xf32>
    %49 = arith.maximumf %47, %48 : vector<32x80xf32>
    %50 = vector.shape_cast %49 : vector<32x80xf32> to vector<8x4x80xf32>
    %51 = vector.extract_strided_slice %50 {offsets = [0, 0, 0], sizes = [8, 1, 80], strides = [1, 1, 1]} : vector<8x4x80xf32> to vector<8x1x80xf32>
    %52 = vector.shape_cast %51 : vector<8x1x80xf32> to vector<8x80xf32>
    %53 = vector.extract_strided_slice %50 {offsets = [0, 1, 0], sizes = [8, 1, 80], strides = [1, 1, 1]} : vector<8x4x80xf32> to vector<8x1x80xf32>
    %54 = vector.shape_cast %53 : vector<8x1x80xf32> to vector<8x80xf32>
    %55 = vector.extract_strided_slice %50 {offsets = [0, 2, 0], sizes = [8, 1, 80], strides = [1, 1, 1]} : vector<8x4x80xf32> to vector<8x1x80xf32>
    %56 = vector.shape_cast %55 : vector<8x1x80xf32> to vector<8x80xf32>
    %57 = vector.extract_strided_slice %50 {offsets = [0, 3, 0], sizes = [8, 1, 80], strides = [1, 1, 1]} : vector<8x4x80xf32> to vector<8x1x80xf32>
    %58 = vector.shape_cast %57 : vector<8x1x80xf32> to vector<8x80xf32>
    %59 = tpu.concatenate %52, %54, %56, %58 in 1 : vector<8x80xf32>, vector<8x80xf32>, vector<8x80xf32>, vector<8x80xf32> -> vector<8x320xf32>
    %60 = arith.truncf %59 : vector<8x320xf32> to vector<8x320xbf16>
    %c0_13 = arith.constant 0 : index
    %c0_14 = arith.constant 0 : index
    %61 = vector.load %arg6[%c0_13, %c0_14] : memref<320x10xbf16, #tpu.memory_space<vmem>>, vector<320x10xbf16>
    %cst_15 = arith.constant dense<0.000000e+00> : vector<8x10xf32>
    %62 = tpu.matmul %60, %61, %cst_15 {dimension_numbers = #tpu.dot_dimension_numbers<[1], [0], [0], [1], [0, 0, 1, 1], [], []>} : vector<8x320xbf16>, vector<320x10xbf16>, vector<8x10xf32> -> vector<8x10xf32>
    %c0_16 = arith.constant 0 : index
    %c0_17 = arith.constant 0 : index
    %63 = vector.load %arg7[%c0_16, %c0_17] : memref<1x10xf32, #tpu.memory_space<vmem>>, vector<1x10xf32>
    %64 = vector.broadcast %63 : vector<1x10xf32> to vector<8x10xf32>
    %65 = arith.addf %62, %64 : vector<8x10xf32>
    %c0_18 = arith.constant 0 : index
    %c0_19 = arith.constant 0 : index
    %66 = vector.load %arg8[%c0_18, %c0_19] : memref<8x10xf32, #tpu.memory_space<vmem>>, vector<8x10xf32>
    tpu.vector_store %arg8[%c0_18, %c0_19], %65 {strides = array<i32>} : memref<8x10xf32, #tpu.memory_space<vmem>>, vector<8x10xf32>,
    return
  }
  func.func @transform_0(%arg0: i32) -> (i32, i32, i32) {
    %c0_i32 = arith.constant 0 : i32
    %c0_i32_0 = arith.constant 0 : i32
    %c0_i32_1 = arith.constant 0 : i32
    return %arg0, %c0_i32, %c0_i32_0 : i32, i32, i32
  }
  func.func @transform_1(%arg0: i32) -> (i32, i32) {
    %c0_i32 = arith.constant 0 : i32
    %c0_i32_0 = arith.constant 0 : i32
    %c0_i32_1 = arith.constant 0 : i32
    return %c0_i32, %c0_i32_0 : i32, i32
  }
  func.func @transform_2(%arg0: i32) -> (i32, i32) {
    %c0_i32 = arith.constant 0 : i32
    %c0_i32_0 = arith.constant 0 : i32
    %c0_i32_1 = arith.constant 0 : i32
    return %c0_i32, %c0_i32_0 : i32, i32
  }
  func.func @transform_3(%arg0: i32) -> (i32, i32) {
    %c0_i32 = arith.constant 0 : i32
    %c0_i32_0 = arith.constant 0 : i32
    %c0_i32_1 = arith.constant 0 : i32
    return %c0_i32, %c0_i32_0 : i32, i32
  }
  func.func @transform_4(%arg0: i32) -> (i32, i32) {
    %c0_i32 = arith.constant 0 : i32
    %c0_i32_0 = arith.constant 0 : i32
    %c0_i32_1 = arith.constant 0 : i32
    return %c0_i32, %c0_i32_0 : i32, i32
  }
  func.func @transform_5(%arg0: i32) -> (i32, i32) {
    %c0_i32 = arith.constant 0 : i32
    %c0_i32_0 = arith.constant 0 : i32
    %c0_i32_1 = arith.constant 0 : i32
    return %c0_i32, %c0_i32_0 : i32, i32
  }
  func.func @transform_6(%arg0: i32) -> (i32, i32) {
    %c0_i32 = arith.constant 0 : i32
    %c0_i32_0 = arith.constant 0 : i32
    %c0_i32_1 = arith.constant 0 : i32
    return %c0_i32, %c0_i32_0 : i32, i32
  }
  func.func @transform_7(%arg0: i32) -> (i32, i32) {
    %c0_i32 = arith.constant 0 : i32
    %c0_i32_0 = arith.constant 0 : i32
    return %arg0, %c0_i32 : i32, i32
  }
}

</mosaic_0001>

<llo_original>
// kernel: net_forward.1
$region0: #{net_forward.1}
  #allocation0 [shape = 'u32[]', space=smem, size = 0x4, offset = 0x4, fixed_abs, tag = 'smem constant byte address 0x4 - core index']
  #allocation1 [shape = 'u32[144,128]{1,0:T(1,128)}', space=vmem, size = 0x12000, scoped, tag = 'internal scratch']
  %s0 = inlined_call_operand.vmem [shape: f32[8,28,28], index: 0, kind: input, shape index: {}]
  %s1 = inlined_call_operand.vmem [shape: bf16[140,240], index: 1, kind: input, shape index: {}]
  %s2 = inlined_call_operand.vmem [shape: f32[1,240], index: 2, kind: input, shape index: {}]
  %s3 = inlined_call_operand.vmem [shape: bf16[600,160], index: 3, kind: input, shape index: {}]
  %s4 = inlined_call_operand.vmem [shape: f32[1,160], index: 4, kind: input, shape index: {}]
  %s5 = inlined_call_operand.vmem [shape: bf16[320,10], index: 5, kind: input, shape index: {}]
  %s6 = inlined_call_operand.vmem [shape: f32[1,10], index: 6, kind: input, shape index: {}]
  %s7 = inlined_call_operand.vmem [shape: f32[8,10], index: 7, kind: output, shape index: {}]
  %s8 = sld [smem:[#allocation0]]
  $region38: #{net_forward.1} parent=0
    _
  %s10 = ssub.s32 1, %s8
  %s11 = scalar_select 0, %s10, %s8
  // Predicated region
  $region2: #{net_forward.1} parent=0 // pred_check
    _
  $region3: #{net_forward.1} parent=0 // pred_check_branch
    %13 = sbr.rel (0) target = $region5
  $region4: #{net_forward.1} parent=0 // pred_region
    _
  $region5: #{net_forward.1} parent=0 // pred_fallthru
    _
  // Predicated region
  $region6: #{net_forward.1} parent=0 // pred_check
    _
  $region7: #{net_forward.1} parent=0 // pred_check_branch
    %15 = sbr.rel (0) target = $region9
  $region8: #{net_forward.1} parent=0 // pred_region
    _
  $region9: #{net_forward.1} parent=0 // pred_fallthru
    _
  // Predicated region
  $region10: #{net_forward.1} parent=0 // pred_check
    _
  $region11: #{net_forward.1} parent=0 // pred_check_branch
    %17 = sbr.rel (0) target = $region13
  $region12: #{net_forward.1} parent=0 // pred_region
    _
  $region13: #{net_forward.1} parent=0 // pred_fallthru
    _
  // Predicated region
  $region14: #{net_forward.1} parent=0 // pred_check
    _
  $region15: #{net_forward.1} parent=0 // pred_check_branch
    %19 = sbr.rel (0) target = $region17
  $region16: #{net_forward.1} parent=0 // pred_region
    _
  $region17: #{net_forward.1} parent=0 // pred_fallthru
    _
  // Predicated region
  $region18: #{net_forward.1} parent=0 // pred_check
    _
  $region19: #{net_forward.1} parent=0 // pred_check_branch
    %21 = sbr.rel (0) target = $region21
  $region20: #{net_forward.1} parent=0 // pred_region
    _
  $region21: #{net_forward.1} parent=0 // pred_fallthru
    _
  // Predicated region
  $region22: #{net_forward.1} parent=0 // pred_check
    _
  $region23: #{net_forward.1} parent=0 // pred_check_branch
    %23 = sbr.rel (0) target = $region25
  $region24: #{net_forward.1} parent=0 // pred_region
    _
  $region25: #{net_forward.1} parent=0 // pred_fallthru
    _
  // Predicated region
  $region26: #{net_forward.1} parent=0 // pred_check
    _
  $region27: #{net_forward.1} parent=0 // pred_check_branch
    %25 = sbr.rel (0) target = $region29
  $region28: #{net_forward.1} parent=0 // pred_region
    _
  $region29: #{net_forward.1} parent=0 // pred_fallthru
    _
  %v27 = vld [vmem:[%s0] sm:$0xff]
  %v28 = vld [vmem:[%s0 + $0x8] sm:$0xff]
  %v29 = vld [vmem:[%s0 + $0x10] sm:$0xff]
  %v30 = vld [vmem:[%s0 + $0x18] sm:$0xf]
  %v31 = vld [vmem:[%s0 + $0x20] sm:$0xff]
  %v32 = vld [vmem:[%s0 + $0x28] sm:$0xff]
  %v33 = vld [vmem:[%s0 + $0x30] sm:$0xff]
  %v34 = vld [vmem:[%s0 + $0x38] sm:$0xf]
  %v35 = vld [vmem:[%s0 + $0x40] sm:$0xff]
  %v36 = vld [vmem:[%s0 + $0x48] sm:$0xff]
  %v37 = vld [vmem:[%s0 + $0x50] sm:$0xff]
  %v38 = vld [vmem:[%s0 + $0x58] sm:$0xf]
  %v39 = vld [vmem:[%s0 + $0x60] sm:$0xff]
  %v40 = vld [vmem:[%s0 + $0x68] sm:$0xff]
  %v41 = vld [vmem:[%s0 + $0x70] sm:$0xff]
  %v42 = vld [vmem:[%s0 + $0x78] sm:$0xf]
  %v43 = vld [vmem:[%s0 + $0x80] sm:$0xff]
  %v44 = vld [vmem:[%s0 + $0x88] sm:$0xff]
  %v45 = vld [vmem:[%s0 + $0x90] sm:$0xff]
  %v46 = vld [vmem:[%s0 + $0x98] sm:$0xf]
  %v47 = vld [vmem:[%s0 + $0xa0] sm:$0xff]
  %v48 = vld [vmem:[%s0 + $0xa8] sm:$0xff]
  %v49 = vld [vmem:[%s0 + $0xb0] sm:$0xff]
  %v50 = vld [vmem:[%s0 + $0xb8] sm:$0xf]
  %v51 = vld [vmem:[%s0 + $0xc0] sm:$0xff]
  %v52 = vld [vmem:[%s0 + $0xc8] sm:$0xff]
  %v53 = vld [vmem:[%s0 + $0xd0] sm:$0xff]
  %v54 = vld [vmem:[%s0 + $0xd8] sm:$0xf]
  %v55 = vld [vmem:[%s0 + $0xe0] sm:$0xff]
  %v56 = vld [vmem:[%s0 + $0xe8] sm:$0xff]
  %v57 = vld [vmem:[%s0 + $0xf0] sm:$0xff]
  %v58 = vld [vmem:[%s0 + $0xf8] sm:$0xf]
  %v59 = vpack.c.bf16 %v28, %v27
  %v60 = vpack.c.bf16 %v30, %v29
  %v61 = vpack.c.bf16 %v32, %v31
  %v62 = vpack.c.bf16 %v34, %v33
  %v63 = vpack.c.bf16 %v36, %v35
  %v64 = vpack.c.bf16 %v38, %v37
  %v65 = vpack.c.bf16 %v40, %v39
  %v66 = vpack.c.bf16 %v42, %v41
  %v67 = vpack.c.bf16 %v44, %v43
  %v68 = vpack.c.bf16 %v46, %v45
  %v69 = vpack.c.bf16 %v48, %v47
  %v70 = vpack.c.bf16 %v50, %v49
  %v71 = vpack.c.bf16 %v52, %v51
  %v72 = vpack.c.bf16 %v54, %v53
  %v73 = vpack.c.bf16 %v56, %v55
  %v74 = vpack.c.bf16 %v58, %v57
  %vm75 = vsmask.f32 7424
  %v77 = vshrl.u32 %v59, 16
  %v79 = vshll.u32 %v59, 16
  %v81 = vrot.slane %v79, 1
  %v82 = vor.u32 %v77, %v81
  %v84 = vshll.u32 %v60, 16
  %v86 = vrot.slane %v84, 1
  %v87 = vsel %vm75, %v82, %v86
  %v88 = vshrl.u32 %v60, 16
  %v90 = vor.u32 %v88, %v86
  %v92 = vshrl.u32 %v61, 16
  %v94 = vshll.u32 %v61, 16
  %v96 = vrot.slane %v94, 1
  %v97 = vor.u32 %v92, %v96
  %v99 = vshll.u32 %v62, 16
  %v101 = vrot.slane %v99, 1
  %v102 = vsel %vm75, %v97, %v101
  %v103 = vshrl.u32 %v62, 16
  %v105 = vor.u32 %v103, %v101
  %v107 = vshrl.u32 %v63, 16
  %v109 = vshll.u32 %v63, 16
  %v111 = vrot.slane %v109, 1
  %v112 = vor.u32 %v107, %v111
  %v114 = vshll.u32 %v64, 16
  %v116 = vrot.slane %v114, 1
  %v117 = vsel %vm75, %v112, %v116
  %v118 = vshrl.u32 %v64, 16
  %v120 = vor.u32 %v118, %v116
  %v122 = vshrl.u32 %v65, 16
  %v124 = vshll.u32 %v65, 16
  %v126 = vrot.slane %v124, 1
  %v127 = vor.u32 %v122, %v126
  %v129 = vshll.u32 %v66, 16
  %v131 = vrot.slane %v129, 1
  %v132 = vsel %vm75, %v127, %v131
  %v133 = vshrl.u32 %v66, 16
  %v135 = vor.u32 %v133, %v131
  %v137 = vshrl.u32 %v67, 16
  %v139 = vshll.u32 %v67, 16
  %v141 = vrot.slane %v139, 1
  %v142 = vor.u32 %v137, %v141
  %v144 = vshll.u32 %v68, 16
  %v146 = vrot.slane %v144, 1
  %v147 = vsel %vm75, %v142, %v146
  %v148 = vshrl.u32 %v68, 16
  %v150 = vor.u32 %v148, %v146
  %v152 = vshrl.u32 %v69, 16
  %v154 = vshll.u32 %v69, 16
  %v156 = vrot.slane %v154, 1
  %v157 = vor.u32 %v152, %v156
  %v159 = vshll.u32 %v70, 16
  %v161 = vrot.slane %v159, 1
  %v162 = vsel %vm75, %v157, %v161
  %v163 = vshrl.u32 %v70, 16
  %v165 = vor.u32 %v163, %v161
  %v167 = vshrl.u32 %v71, 16
  %v169 = vshll.u32 %v71, 16
  %v171 = vrot.slane %v169, 1
  %v172 = vor.u32 %v167, %v171
  %v174 = vshll.u32 %v72, 16
  %v176 = vrot.slane %v174, 1
  %v177 = vsel %vm75, %v172, %v176
  %v178 = vshrl.u32 %v72, 16
  %v180 = vor.u32 %v178, %v176
  %v182 = vshrl.u32 %v73, 16
  %v184 = vshll.u32 %v73, 16
  %v186 = vrot.slane %v184, 1
  %v187 = vor.u32 %v182, %v186
  %v189 = vshll.u32 %v74, 16
  %v191 = vrot.slane %v189, 1
  %v192 = vsel %vm75, %v187, %v191
  %v193 = vshrl.u32 %v74, 16
  %v195 = vor.u32 %v193, %v191
  %196 = vrot.lane.b32.xlu0 %v87, 28
  %v197 = vpop.permute.xlu0 %196
  %198 = vrot.lane.b32.xlu0 %v90, 28
  %v199 = vpop.permute.xlu0 %198
  %200 = vrot.lane.b32.xlu0 %v102, 28
  %v201 = vpop.permute.xlu0 %200
  %202 = vrot.lane.b32.xlu0 %v105, 28
  %v203 = vpop.permute.xlu0 %202
  %204 = vrot.lane.b32.xlu0 %v117, 28
  %v205 = vpop.permute.xlu0 %204
  %206 = vrot.lane.b32.xlu0 %v120, 28
  %v207 = vpop.permute.xlu0 %206
  %208 = vrot.lane.b32.xlu0 %v132, 28
  %v209 = vpop.permute.xlu0 %208
  %210 = vrot.lane.b32.xlu0 %v135, 28
  %v211 = vpop.permute.xlu0 %210
  %212 = vrot.lane.b32.xlu0 %v147, 28
  %v213 = vpop.permute.xlu0 %212
  %214 = vrot.lane.b32.xlu0 %v150, 28
  %v215 = vpop.permute.xlu0 %214
  %216 = vrot.lane.b32.xlu0 %v162, 28
  %v217 = vpop.permute.xlu0 %216
  %218 = vrot.lane.b32.xlu0 %v165, 28
  %v219 = vpop.permute.xlu0 %218
  %220 = vrot.lane.b32.xlu0 %v177, 28
  %v221 = vpop.permute.xlu0 %220
  %222 = vrot.lane.b32.xlu0 %v180, 28
  %v223 = vpop.permute.xlu0 %222
  %224 = vrot.lane.b32.xlu0 %v192, 28
  %v225 = vpop.permute.xlu0 %224
  %226 = vrot.lane.b32.xlu0 %v195, 28
  %v227 = vpop.permute.xlu0 %226
  %vm244 = vcmask 1046528
  %v245 = vrot.slane %v59, 1
  %v246 = vrot.slane %v60, 1
  %v247 = vsel %vm244, %v245, %v246
  %v248 = vrot.slane %v61, 1
  %v249 = vrot.slane %v62, 1
  %v250 = vsel %vm244, %v248, %v249
  %v251 = vrot.slane %v63, 1
  %v252 = vrot.slane %v64, 1
  %v253 = vsel %vm244, %v251, %v252
  %v254 = vrot.slane %v65, 1
  %v255 = vrot.slane %v66, 1
  %v256 = vsel %vm244, %v254, %v255
  %v257 = vrot.slane %v67, 1
  %v258 = vrot.slane %v68, 1
  %v259 = vsel %vm244, %v257, %v258
  %v260 = vrot.slane %v69, 1
  %v261 = vrot.slane %v70, 1
  %v262 = vsel %vm244, %v260, %v261
  %v263 = vrot.slane %v71, 1
  %v264 = vrot.slane %v72, 1
  %v265 = vsel %vm244, %v263, %v264
  %v266 = vrot.slane %v73, 1
  %v267 = vrot.slane %v74, 1
  %v268 = vsel %vm244, %v266, %v267
  %269 = vrot.lane.b32.xlu0 %v247, 56
  %v270 = vpop.permute.xlu0 %269
  %271 = vrot.lane.b32.xlu0 %v246, 56
  %v272 = vpop.permute.xlu0 %271
  %273 = vrot.lane.b32.xlu0 %v250, 56
  %v274 = vpop.permute.xlu0 %273
  %275 = vrot.lane.b32.xlu0 %v249, 56
  %v276 = vpop.permute.xlu0 %275
  %277 = vrot.lane.b32.xlu0 %v253, 56
  %v278 = vpop.permute.xlu0 %277
  %279 = vrot.lane.b32.xlu0 %v252, 56
  %v280 = vpop.permute.xlu0 %279
  %281 = vrot.lane.b32.xlu0 %v256, 56
  %v282 = vpop.permute.xlu0 %281
  %283 = vrot.lane.b32.xlu0 %v255, 56
  %v284 = vpop.permute.xlu0 %283
  %285 = vrot.lane.b32.xlu0 %v259, 56
  %v286 = vpop.permute.xlu0 %285
  %287 = vrot.lane.b32.xlu0 %v258, 56
  %v288 = vpop.permute.xlu0 %287
  %289 = vrot.lane.b32.xlu0 %v262, 56
  %v290 = vpop.permute.xlu0 %289
  %291 = vrot.lane.b32.xlu0 %v261, 56
  %v292 = vpop.permute.xlu0 %291
  %293 = vrot.lane.b32.xlu0 %v265, 56
  %v294 = vpop.permute.xlu0 %293
  %295 = vrot.lane.b32.xlu0 %v264, 56
  %v296 = vpop.permute.xlu0 %295
  %297 = vrot.lane.b32.xlu0 %v268, 56
  %v298 = vpop.permute.xlu0 %297
  %299 = vrot.lane.b32.xlu0 %v267, 56
  %v300 = vpop.permute.xlu0 %299
  %vm301 = vsmask.f32 6400
  %v302 = vrot.slane %v77, 1
  %v303 = vrot.slane %v79, 2
  %v304 = vor.u32 %v302, %v303
  %v305 = vrot.slane %v88, 1
  %v306 = vrot.slane %v84, 2
  %v307 = vor.u32 %v305, %v306
  %v308 = vsel %vm301, %v304, %v307
  %v309 = vrot.slane %v92, 1
  %v310 = vrot.slane %v94, 2
  %v311 = vor.u32 %v309, %v310
  %v312 = vrot.slane %v103, 1
  %v313 = vrot.slane %v99, 2
  %v314 = vor.u32 %v312, %v313
  %v315 = vsel %vm301, %v311, %v314
  %v316 = vrot.slane %v107, 1
  %v317 = vrot.slane %v109, 2
  %v318 = vor.u32 %v316, %v317
  %v319 = vrot.slane %v118, 1
  %v320 = vrot.slane %v114, 2
  %v321 = vor.u32 %v319, %v320
  %v322 = vsel %vm301, %v318, %v321
  %v323 = vrot.slane %v122, 1
  %v324 = vrot.slane %v124, 2
  %v325 = vor.u32 %v323, %v324
  %v326 = vrot.slane %v133, 1
  %v327 = vrot.slane %v129, 2
  %v328 = vor.u32 %v326, %v327
  %v329 = vsel %vm301, %v325, %v328
  %v330 = vrot.slane %v137, 1
  %v331 = vrot.slane %v139, 2
  %v332 = vor.u32 %v330, %v331
  %v333 = vrot.slane %v148, 1
  %v334 = vrot.slane %v144, 2
  %v335 = vor.u32 %v333, %v334
  %v336 = vsel %vm301, %v332, %v335
  %v337 = vrot.slane %v152, 1
  %v338 = vrot.slane %v154, 2
  %v339 = vor.u32 %v337, %v338
  %v340 = vrot.slane %v163, 1
  %v341 = vrot.slane %v159, 2
  %v342 = vor.u32 %v340, %v341
  %v343 = vsel %vm301, %v339, %v342
  %v344 = vrot.slane %v167, 1
  %v345 = vrot.slane %v169, 2
  %v346 = vor.u32 %v344, %v345
  %v347 = vrot.slane %v178, 1
  %v348 = vrot.slane %v174, 2
  %v349 = vor.u32 %v347, %v348
  %v350 = vsel %vm301, %v346, %v349
  %v351 = vrot.slane %v182, 1
  %v352 = vrot.slane %v184, 2
  %v353 = vor.u32 %v351, %v352
  %v354 = vrot.slane %v193, 1
  %v355 = vrot.slane %v189, 2
  %v356 = vor.u32 %v354, %v355
  %v357 = vsel %vm301, %v353, %v356
  %358 = vrot.lane.b32.xlu0 %v308, 84
  %v359 = vpop.permute.xlu0 %358
  %360 = vrot.lane.b32.xlu0 %v307, 84
  %v361 = vpop.permute.xlu0 %360
  %362 = vrot.lane.b32.xlu0 %v315, 84
  %v363 = vpop.permute.xlu0 %362
  %364 = vrot.lane.b32.xlu0 %v314, 84
  %v365 = vpop.permute.xlu0 %364
  %366 = vrot.lane.b32.xlu0 %v322, 84
  %v367 = vpop.permute.xlu0 %366
  %368 = vrot.lane.b32.xlu0 %v321, 84
  %v369 = vpop.permute.xlu0 %368
  %370 = vrot.lane.b32.xlu0 %v329, 84
  %v371 = vpop.permute.xlu0 %370
  %372 = vrot.lane.b32.xlu0 %v328, 84
  %v373 = vpop.permute.xlu0 %372
  %374 = vrot.lane.b32.xlu0 %v336, 84
  %v375 = vpop.permute.xlu0 %374
  %376 = vrot.lane.b32.xlu0 %v335, 84
  %v377 = vpop.permute.xlu0 %376
  %378 = vrot.lane.b32.xlu0 %v343, 84
  %v379 = vpop.permute.xlu0 %378
  %380 = vrot.lane.b32.xlu0 %v342, 84
  %v381 = vpop.permute.xlu0 %380
  %382 = vrot.lane.b32.xlu0 %v350, 84
  %v383 = vpop.permute.xlu0 %382
  %384 = vrot.lane.b32.xlu0 %v349, 84
  %v385 = vpop.permute.xlu0 %384
  %386 = vrot.lane.b32.xlu0 %v357, 84
  %v387 = vpop.permute.xlu0 %386
  %388 = vrot.lane.b32.xlu0 %v356, 84
  %v389 = vpop.permute.xlu0 %388
  %vm390 = vcmask 1045504
  %v391 = vrot.slane %v59, 2
  %v392 = vrot.slane %v60, 2
  %v393 = vsel %vm390, %v391, %v392
  %v394 = vrot.slane %v61, 2
  %v395 = vrot.slane %v62, 2
  %v396 = vsel %vm390, %v394, %v395
  %v397 = vrot.slane %v63, 2
  %v398 = vrot.slane %v64, 2
  %v399 = vsel %vm390, %v397, %v398
  %v400 = vrot.slane %v65, 2
  %v401 = vrot.slane %v66, 2
  %v402 = vsel %vm390, %v400, %v401
  %v403 = vrot.slane %v67, 2
  %v404 = vrot.slane %v68, 2
  %v405 = vsel %vm390, %v403, %v404
  %v406 = vrot.slane %v69, 2
  %v407 = vrot.slane %v70, 2
  %v408 = vsel %vm390, %v406, %v407
  %v409 = vrot.slane %v71, 2
  %v410 = vrot.slane %v72, 2
  %v411 = vsel %vm390, %v409, %v410
  %v412 = vrot.slane %v73, 2
  %v413 = vrot.slane %v74, 2
  %v414 = vsel %vm390, %v412, %v413
  %415 = vrot.lane.b32.xlu0 %v393, 112
  %v416 = vpop.permute.xlu0 %415
  %417 = vrot.lane.b32.xlu0 %v392, 112
  %v418 = vpop.permute.xlu0 %417
  %419 = vrot.lane.b32.xlu0 %v396, 112
  %v420 = vpop.permute.xlu0 %419
  %421 = vrot.lane.b32.xlu0 %v395, 112
  %v422 = vpop.permute.xlu0 %421
  %423 = vrot.lane.b32.xlu0 %v399, 112
  %v424 = vpop.permute.xlu0 %423
  %425 = vrot.lane.b32.xlu0 %v398, 112
  %v426 = vpop.permute.xlu0 %425
  %427 = vrot.lane.b32.xlu0 %v402, 112
  %v428 = vpop.permute.xlu0 %427
  %429 = vrot.lane.b32.xlu0 %v401, 112
  %v430 = vpop.permute.xlu0 %429
  %431 = vrot.lane.b32.xlu0 %v405, 112
  %v432 = vpop.permute.xlu0 %431
  %433 = vrot.lane.b32.xlu0 %v404, 112
  %v434 = vpop.permute.xlu0 %433
  %435 = vrot.lane.b32.xlu0 %v408, 112
  %v436 = vpop.permute.xlu0 %435
  %437 = vrot.lane.b32.xlu0 %v407, 112
  %v438 = vpop.permute.xlu0 %437
  %439 = vrot.lane.b32.xlu0 %v411, 112
  %v440 = vpop.permute.xlu0 %439
  %441 = vrot.lane.b32.xlu0 %v410, 112
  %v442 = vpop.permute.xlu0 %441
  %443 = vrot.lane.b32.xlu0 %v414, 112
  %v444 = vpop.permute.xlu0 %443
  %445 = vrot.lane.b32.xlu0 %v413, 112
  %v446 = vpop.permute.xlu0 %445
  %vm447 = vcmask 228352
  %v449 = vsel %vm447, %v59, %v197
  %v451 = vsel %vm447, %v60, %v199
  %v453 = vsel %vm447, %v61, %v201
  %v455 = vsel %vm447, %v62, %v203
  %v457 = vsel %vm447, %v63, %v205
  %v459 = vsel %vm447, %v64, %v207
  %v461 = vsel %vm447, %v65, %v209
  %v463 = vsel %vm447, %v66, %v211
  %v465 = vsel %vm447, %v67, %v213
  %v467 = vsel %vm447, %v68, %v215
  %v469 = vsel %vm447, %v69, %v217
  %v471 = vsel %vm447, %v70, %v219
  %v473 = vsel %vm447, %v71, %v221
  %v475 = vsel %vm447, %v72, %v223
  %v477 = vsel %vm447, %v73, %v225
  %v479 = vsel %vm447, %v74, %v227
  %vm480 = vcmask 457728
  %v482 = vsel %vm480, %v449, %v270
  %v484 = vsel %vm480, %v451, %v272
  %v486 = vsel %vm480, %v453, %v274
  %v488 = vsel %vm480, %v455, %v276
  %v490 = vsel %vm480, %v457, %v278
  %v492 = vsel %vm480, %v459, %v280
  %v494 = vsel %vm480, %v461, %v282
  %v496 = vsel %vm480, %v463, %v284
  %v498 = vsel %vm480, %v465, %v286
  %v500 = vsel %vm480, %v467, %v288
  %v502 = vsel %vm480, %v469, %v290
  %v504 = vsel %vm480, %v471, %v292
  %v506 = vsel %vm480, %v473, %v294
  %v508 = vsel %vm480, %v475, %v296
  %v510 = vsel %vm480, %v477, %v298
  %v512 = vsel %vm480, %v479, %v300
  %vm513 = vcmask 687104
  %v515 = vsel %vm513, %v482, %v359
  %v517 = vsel %vm513, %v484, %v361
  %v519 = vsel %vm513, %v486, %v363
  %v521 = vsel %vm513, %v488, %v365
  %v523 = vsel %vm513, %v490, %v367
  %v525 = vsel %vm513, %v492, %v369
  %v527 = vsel %vm513, %v494, %v371
  %v529 = vsel %vm513, %v496, %v373
  %v531 = vsel %vm513, %v498, %v375
  %v533 = vsel %vm513, %v500, %v377
  %v535 = vsel %vm513, %v502, %v379
  %v537 = vsel %vm513, %v504, %v381
  %v539 = vsel %vm513, %v506, %v383
  %v541 = vsel %vm513, %v508, %v385
  %v543 = vsel %vm513, %v510, %v387
  %v545 = vsel %vm513, %v512, %v389
  %vm546 = vcmask 916480
  %v548 = vsel %vm546, %v515, %v416
  %v550 = vsel %vm546, %v517, %v418
  %v552 = vsel %vm546, %v519, %v420
  %v554 = vsel %vm546, %v521, %v422
  %v556 = vsel %vm546, %v523, %v424
  %v558 = vsel %vm546, %v525, %v426
  %v560 = vsel %vm546, %v527, %v428
  %v562 = vsel %vm546, %v529, %v430
  %v564 = vsel %vm546, %v531, %v432
  %v566 = vsel %vm546, %v533, %v434
  %v568 = vsel %vm546, %v535, %v436
  %v570 = vsel %vm546, %v537, %v438
  %v572 = vsel %vm546, %v539, %v440
  %v574 = vsel %vm546, %v541, %v442
  %v576 = vsel %vm546, %v543, %v444
  %v578 = vsel %vm546, %v545, %v446
  %v595 = vunpack.c.l.b16 %v548
  %v596 = vunpack.c.l.b16 %v416
  %v597 = vunpack.c.h.b16 %v548
  %v598 = vunpack.c.h.b16 %v416
  %v599 = vunpack.c.l.b16 %v550
  %v600 = vunpack.c.l.b16 %v418
  %v601 = vunpack.c.l.b16 %v552
  %v602 = vunpack.c.l.b16 %v420
  %v603 = vunpack.c.h.b16 %v552
  %v604 = vunpack.c.h.b16 %v420
  %v605 = vunpack.c.l.b16 %v554
  %v606 = vunpack.c.l.b16 %v422
  %v607 = vunpack.c.l.b16 %v556
  %v608 = vunpack.c.l.b16 %v424
  %v609 = vunpack.c.h.b16 %v556
  %v610 = vunpack.c.h.b16 %v424
  %v611 = vunpack.c.l.b16 %v558
  %v612 = vunpack.c.l.b16 %v426
  %v613 = vunpack.c.l.b16 %v560
  %v614 = vunpack.c.l.b16 %v428
  %v615 = vunpack.c.h.b16 %v560
  %v616 = vunpack.c.h.b16 %v428
  %v617 = vunpack.c.l.b16 %v562
  %v618 = vunpack.c.l.b16 %v430
  %v619 = vunpack.c.l.b16 %v564
  %v620 = vunpack.c.l.b16 %v432
  %v621 = vunpack.c.h.b16 %v564
  %v622 = vunpack.c.h.b16 %v432
  %v623 = vunpack.c.l.b16 %v566
  %v624 = vunpack.c.l.b16 %v434
  %v625 = vunpack.c.l.b16 %v568
  %v626 = vunpack.c.l.b16 %v436
  %v627 = vunpack.c.h.b16 %v568
  %v628 = vunpack.c.h.b16 %v436
  %v629 = vunpack.c.l.b16 %v570
  %v630 = vunpack.c.l.b16 %v438
  %v631 = vunpack.c.l.b16 %v572
  %v632 = vunpack.c.l.b16 %v440
  %v633 = vunpack.c.h.b16 %v572
  %v634 = vunpack.c.h.b16 %v440
  %v635 = vunpack.c.l.b16 %v574
  %v636 = vunpack.c.l.b16 %v442
  %v637 = vunpack.c.l.b16 %v576
  %v638 = vunpack.c.l.b16 %v444
  %v639 = vunpack.c.h.b16 %v576
  %v640 = vunpack.c.h.b16 %v444
  %v641 = vunpack.c.l.b16 %v578
  %v642 = vunpack.c.l.b16 %v446
  %v643 = vld [vmem:[%s1] sm:$0xff]
  %v644 = vld [vmem:[%s1 + $0x8] sm:$0xff]
  %v645 = vld [vmem:[%s1 + $0x10] sm:$0xff]
  %v646 = vld [vmem:[%s1 + $0x18] sm:$0xff]
  %v647 = vld [vmem:[%s1 + $0x20] sm:$0xff]
  %v648 = vld [vmem:[%s1 + $0x28] sm:$0xff]
  %v649 = vld [vmem:[%s1 + $0x30] sm:$0xff]
  %v650 = vld [vmem:[%s1 + $0x38] sm:$0xff]
  %v651 = vld [vmem:[%s1 + $0x40] sm:$0xff]
  %v652 = vld [vmem:[%s1 + $0x48] sm:$0xff]
  %v653 = vld [vmem:[%s1 + $0x50] sm:$0xff]
  %v654 = vld [vmem:[%s1 + $0x58] sm:$0xff]
  %v655 = vld [vmem:[%s1 + $0x60] sm:$0xff]
  %v656 = vld [vmem:[%s1 + $0x68] sm:$0xff]
  %v657 = vld [vmem:[%s1 + $0x70] sm:$0xff]
  %v658 = vld [vmem:[%s1 + $0x78] sm:$0xff]
  %v659 = vld [vmem:[%s1 + $0x80] sm:$0xff]
  %v660 = vld [vmem:[%s1 + $0x88] sm:$0x33]
  %v661 = vld [vmem:[%s2] sm:$0x3]
  %v663 = vlaneseq
  %v664 = vshrl.u32 %v663, 7
  %v665 = vsub.s32 0, %v664
  %v666 = vrot.slane %v661, %v665
  %v667 = vlaneseq
  %v668 = vshrl.u32 %v667, 7
  %v669 = vsub.s32 1, %v668
  %v670 = vrot.slane %v661, %v669
  %v673 = vpack.c.b16 %v597, %v595
  %v674 = vpack.c.b16 %v598, %v596
  %v675 = vpack.c.b16 %v601, %v599
  %v676 = vpack.c.b16 %v602, %v600
  %v677 = vpack.c.b16 %v605, %v603
  %v678 = vpack.c.b16 %v606, %v604
  %v679 = vpack.c.b16 %v609, %v607
  %v680 = vpack.c.b16 %v610, %v608
  %v681 = vpack.c.b16 %v613, %v611
  %v682 = vpack.c.b16 %v614, %v612
  %v683 = vpack.c.b16 %v617, %v615
  %v684 = vpack.c.b16 %v618, %v616
  %v685 = vpack.c.b16 %v621, %v619
  %v686 = vpack.c.b16 %v622, %v620
  %v687 = vpack.c.b16 %v625, %v623
  %v688 = vpack.c.b16 %v626, %v624
  %v689 = vpack.c.b16 %v629, %v627
  %v690 = vpack.c.b16 %v630, %v628
  %v691 = vpack.c.b16 %v633, %v631
  %v692 = vpack.c.b16 %v634, %v632
  %v693 = vpack.c.b16 %v637, %v635
  %v694 = vpack.c.b16 %v638, %v636
  %v695 = vpack.c.b16 %v641, %v639
  %v696 = vpack.c.b16 %v642, %v640
  %v727 = vunpack.c.l.b16 %v643
  %v728 = vunpack.c.h.b16 %v643
  %v729 = vunpack.c.l.b16 %v644
  %v730 = vunpack.c.h.b16 %v644
  %v731 = vunpack.c.l.b16 %v645
  %v732 = vunpack.c.h.b16 %v645
  %v733 = vunpack.c.l.b16 %v646
  %v734 = vunpack.c.h.b16 %v646
  %v735 = vunpack.c.l.b16 %v647
  %v736 = vunpack.c.h.b16 %v647
  %v737 = vunpack.c.l.b16 %v648
  %v738 = vunpack.c.h.b16 %v648
  %v739 = vunpack.c.l.b16 %v649
  %v740 = vunpack.c.h.b16 %v649
  %v741 = vunpack.c.l.b16 %v650
  %v742 = vunpack.c.h.b16 %v650
  %v743 = vunpack.c.l.b16 %v651
  %v744 = vunpack.c.h.b16 %v651
  %v745 = vunpack.c.l.b16 %v652
  %v746 = vunpack.c.h.b16 %v652
  %v747 = vunpack.c.l.b16 %v653
  %v748 = vunpack.c.h.b16 %v653
  %v749 = vunpack.c.l.b16 %v654
  %v750 = vunpack.c.h.b16 %v654
  %v751 = vunpack.c.l.b16 %v655
  %v752 = vunpack.c.h.b16 %v655
  %v753 = vunpack.c.l.b16 %v656
  %v754 = vunpack.c.h.b16 %v656
  %v755 = vunpack.c.l.b16 %v657
  %v756 = vunpack.c.h.b16 %v657
  %v757 = vunpack.c.l.b16 %v658
  %v758 = vunpack.c.h.b16 %v658
  %v759 = vunpack.c.l.b16 %v659
  %v760 = vunpack.c.h.b16 %v659
  %v761 = vunpack.c.l.b16 %v660
  %v762 = vunpack.c.h.b16 %v660
  %v763 = vpack.c.b16 %v729, %v727
  %v764 = vpack.c.b16 %v730, %v728
  %v765 = vpack.c.b16 %v733, %v731
  %v766 = vpack.c.b16 %v734, %v732
  %v767 = vpack.c.b16 %v737, %v735
  %v768 = vpack.c.b16 %v738, %v736
  %v769 = vpack.c.b16 %v741, %v739
  %v770 = vpack.c.b16 %v742, %v740
  %v771 = vpack.c.b16 %v745, %v743
  %v772 = vpack.c.b16 %v746, %v744
  %v773 = vpack.c.b16 %v749, %v747
  %v774 = vpack.c.b16 %v750, %v748
  %v775 = vpack.c.b16 %v753, %v751
  %v776 = vpack.c.b16 %v754, %v752
  %v777 = vpack.c.b16 %v757, %v755
  %v778 = vpack.c.b16 %v758, %v756
  %v779 = vpack.c.b16 %v761, %v759
  %v780 = vpack.c.b16 %v762, %v760
  %vm797 = vcmask 97280
  %v799 = vsel %vm797, %v674, 0
  %v802 = vsel %vm797, %v676, 0
  %v805 = vsel %vm797, %v678, 0
  %v808 = vsel %vm797, %v680, 0
  %v811 = vsel %vm797, %v682, 0
  %v814 = vsel %vm797, %v684, 0
  %v817 = vsel %vm797, %v686, 0
  %v820 = vsel %vm797, %v688, 0
  %v823 = vsel %vm797, %v690, 0
  %v826 = vsel %vm797, %v692, 0
  %v829 = vsel %vm797, %v694, 0
  %v832 = vsel %vm797, %v696, 0
  %vm834 = vcmask 1045504
  %v836 = vsel %vm834, %v779, 0
  %v839 = vsel %vm834, %v780, 0
  %841 = vmatprep.subr.bf16.mxu0 %v778
  %842 = vmatpush1.bf16.msra.mxu0 %v777
  %843 = vmatprep.subr.bf16.mxu0 %v776
  %844 = vmatpush1.bf16.msra.mxu0 %v775
  %845 = vmatprep.subr.bf16.mxu0 %v774
  %846 = vmatpush1.bf16.msra.mxu0 %v773
  %847 = vmatprep.subr.bf16.mxu0 %v772
  %848 = vmatpush1.bf16.msra.mxu0 %v771
  %849 = vmatprep.subr.bf16.mxu0 %v770
  %850 = vmatpush1.bf16.msra.mxu0 %v769
  %851 = vmatprep.subr.bf16.mxu0 %v768
  %852 = vmatpush1.bf16.msra.mxu0 %v767
  %853 = vmatprep.subr.bf16.mxu0 %v766
  %854 = vmatpush1.bf16.msra.mxu0 %v765
  %855 = vmatprep.subr.bf16.mxu0 %v764
  %856 = vmatpush1.bf16.msra.mxu0 %v763
  %857 = vmatprep.subr.bf16.mxu0 0
  %858 = vmatpush2.bf16.msra.mxu0 0
  %859 = vmatprep.subr.bf16.mxu0 0
  %860 = vmatpush2.bf16.msra.mxu0 0
  %861 = vmatprep.subr.bf16.mxu0 0
  %862 = vmatpush2.bf16.msra.mxu0 0
  %863 = vmatprep.subr.bf16.mxu0 0
  %864 = vmatpush2.bf16.msra.mxu0 0
  %865 = vmatprep.subr.bf16.mxu0 0
  %866 = vmatpush2.bf16.msra.mxu0 0
  %867 = vmatprep.subr.bf16.mxu0 0
  %868 = vmatpush2.bf16.msra.mxu0 0
  %869 = vmatprep.subr.bf16.mxu0 0
  %870 = vmatpush2.bf16.msra.mxu0 0
  %871 = vmatprep.subr.bf16.mxu0 %v839
  %872 = vmatpush2.bf16.msra.mxu0 %v836
  %873 = vmatprep.mubr.bf16.mxu0 %v799
  %874 = vmatmul.mubr.bf16.gmra.mxu0 %v673
  %v875 = vpop.f32.mrf.mxu0
  %v876 = vadd.f32 %v666, %v875
  %v877 = vpop.f32.mrf.mxu0
  %v878 = vadd.f32 %v670, %v877
  %v879 = vpop.f32.mrf.mxu0
  %v880 = vadd.f32 %v666, %v879
  %v881 = vpop.f32.mrf.mxu0
  %v882 = vadd.f32 %v670, %v881
  %883 = vmatprep.mubr.bf16.mxu0 %v802
  %884 = vmatmul.mubr.bf16.gmra.mxu0 %v675
  %v885 = vpop.f32.mrf.mxu0
  %v886 = vadd.f32 %v666, %v885
  %v887 = vpop.f32.mrf.mxu0
  %v888 = vadd.f32 %v670, %v887
  %v889 = vpop.f32.mrf.mxu0
  %v890 = vadd.f32 %v666, %v889
  %v891 = vpop.f32.mrf.mxu0
  %v892 = vadd.f32 %v670, %v891
  %893 = vmatprep.mubr.bf16.mxu0 %v805
  %894 = vmatmul.mubr.bf16.gmra.mxu0 %v677
  %v895 = vpop.f32.mrf.mxu0
  %v896 = vadd.f32 %v666, %v895
  %v897 = vpop.f32.mrf.mxu0
  %v898 = vadd.f32 %v670, %v897
  %v899 = vpop.f32.mrf.mxu0
  %v900 = vadd.f32 %v666, %v899
  %v901 = vpop.f32.mrf.mxu0
  %v902 = vadd.f32 %v670, %v901
  %903 = vmatprep.mubr.bf16.mxu0 %v808
  %904 = vmatmul.mubr.bf16.gmra.mxu0 %v679
  %v905 = vpop.f32.mrf.mxu0
  %v906 = vadd.f32 %v666, %v905
  %v907 = vpop.f32.mrf.mxu0
  %v908 = vadd.f32 %v670, %v907
  %v909 = vpop.f32.mrf.mxu0
  %v910 = vadd.f32 %v666, %v909
  %v911 = vpop.f32.mrf.mxu0
  %v912 = vadd.f32 %v670, %v911
  %913 = vmatprep.mubr.bf16.mxu0 %v811
  %914 = vmatmul.mubr.bf16.gmra.mxu0 %v681
  %v915 = vpop.f32.mrf.mxu0
  %v916 = vadd.f32 %v666, %v915
  %v917 = vpop.f32.mrf.mxu0
  %v918 = vadd.f32 %v670, %v917
  %v919 = vpop.f32.mrf.mxu0
  %v920 = vadd.f32 %v666, %v919
  %v921 = vpop.f32.mrf.mxu0
  %v922 = vadd.f32 %v670, %v921
  %923 = vmatprep.mubr.bf16.mxu0 %v814
  %924 = vmatmul.mubr.bf16.gmra.mxu0 %v683
  %v925 = vpop.f32.mrf.mxu0
  %v926 = vadd.f32 %v666, %v925
  %v927 = vpop.f32.mrf.mxu0
  %v928 = vadd.f32 %v670, %v927
  %v929 = vpop.f32.mrf.mxu0
  %v930 = vadd.f32 %v666, %v929
  %v931 = vpop.f32.mrf.mxu0
  %v932 = vadd.f32 %v670, %v931
  %933 = vmatprep.mubr.bf16.mxu0 %v817
  %934 = vmatmul.mubr.bf16.gmra.mxu0 %v685
  %v935 = vpop.f32.mrf.mxu0
  %v936 = vadd.f32 %v666, %v935
  %v937 = vpop.f32.mrf.mxu0
  %v938 = vadd.f32 %v670, %v937
  %v939 = vpop.f32.mrf.mxu0
  %v940 = vadd.f32 %v666, %v939
  %v941 = vpop.f32.mrf.mxu0
  %v942 = vadd.f32 %v670, %v941
  %943 = vmatprep.mubr.bf16.mxu0 %v820
  %944 = vmatmul.mubr.bf16.gmra.mxu0 %v687
  %v945 = vpop.f32.mrf.mxu0
  %v946 = vadd.f32 %v666, %v945
  %v947 = vpop.f32.mrf.mxu0
  %v948 = vadd.f32 %v670, %v947
  %v949 = vpop.f32.mrf.mxu0
  %v950 = vadd.f32 %v666, %v949
  %v951 = vpop.f32.mrf.mxu0
  %v952 = vadd.f32 %v670, %v951
  %953 = vmatprep.mubr.bf16.mxu0 %v823
  %954 = vmatmul.mubr.bf16.gmra.mxu0 %v689
  %v955 = vpop.f32.mrf.mxu0
  %v956 = vadd.f32 %v666, %v955
  %v957 = vpop.f32.mrf.mxu0
  %v958 = vadd.f32 %v670, %v957
  %v959 = vpop.f32.mrf.mxu0
  %v960 = vadd.f32 %v666, %v959
  %v961 = vpop.f32.mrf.mxu0
  %v962 = vadd.f32 %v670, %v961
  %963 = vmatprep.mubr.bf16.mxu0 %v826
  %964 = vmatmul.mubr.bf16.gmra.mxu0 %v691
  %v965 = vpop.f32.mrf.mxu0
  %v966 = vadd.f32 %v666, %v965
  %v967 = vpop.f32.mrf.mxu0
  %v968 = vadd.f32 %v670, %v967
  %v969 = vpop.f32.mrf.mxu0
  %v970 = vadd.f32 %v666, %v969
  %v971 = vpop.f32.mrf.mxu0
  %v972 = vadd.f32 %v670, %v971
  %973 = vmatprep.mubr.bf16.mxu0 %v829
  %974 = vmatmul.mubr.bf16.gmra.mxu0 %v693
  %v975 = vpop.f32.mrf.mxu0
  %v976 = vadd.f32 %v666, %v975
  %v977 = vpop.f32.mrf.mxu0
  %v978 = vadd.f32 %v670, %v977
  %v979 = vpop.f32.mrf.mxu0
  %v980 = vadd.f32 %v666, %v979
  %v981 = vpop.f32.mrf.mxu0
  %v982 = vadd.f32 %v670, %v981
  %983 = vmatprep.mubr.bf16.mxu0 %v832
  %984 = vmatmul.mubr.bf16.gmra.mxu0 %v695
  %v985 = vpop.f32.mrf.mxu0
  %v986 = vadd.f32 %v666, %v985
  %v987 = vpop.f32.mrf.mxu0
  %v988 = vadd.f32 %v670, %v987
  %v989 = vpop.f32.mrf.mxu0
  %v990 = vadd.f32 %v666, %v989
  %v991 = vpop.f32.mrf.mxu0
  %v992 = vadd.f32 %v670, %v991
  %993 = vdwg.mxu0
  %v1042 = vcombine.low %v876, %v878
  %v1043 = vcombine.high %v876, %v878
  %v1045 = vunpack.c.l.s4 1983009808
  %v1046 = vunpack.c.0.s8 %v1045
  %v1047 = vlaneseq
  %v1048 = vshrl.u32 %v1047, 7
  %v1049 = vsub.s32 %v1046, %v1048
  %v1050 = vrot.slane %v1042, %v1049
  %v1052 = vunpack.c.l.s4 1983009808
  %v1053 = vunpack.c.0.s8 %v1052
  %v1054 = vlaneseq
  %v1055 = vshrl.u32 %v1054, 7
  %v1056 = vsub.s32 %v1053, %v1055
  %v1057 = vrot.slane %v1043, %v1056
  %v1058 = vcombine.high %v1050, %v1050
  %v1059 = vcombine.high %v1057, %v1057
  %v1060 = vcombine.low %v880, %v882
  %v1061 = vcombine.high %v880, %v882
  %v1063 = vunpack.c.l.s4 1983009808
  %v1064 = vunpack.c.0.s8 %v1063
  %v1065 = vlaneseq
  %v1066 = vshrl.u32 %v1065, 7
  %v1067 = vsub.s32 %v1064, %v1066
  %v1068 = vrot.slane %v1060, %v1067
  %v1070 = vunpack.c.l.s4 1983009808
  %v1071 = vunpack.c.0.s8 %v1070
  %v1072 = vlaneseq
  %v1073 = vshrl.u32 %v1072, 7
  %v1074 = vsub.s32 %v1071, %v1073
  %v1075 = vrot.slane %v1061, %v1074
  %v1076 = vcombine.high %v1068, %v1068
  %v1077 = vcombine.high %v1075, %v1075
  %v1078 = vcombine.low %v886, %v888
  %v1079 = vcombine.high %v886, %v888
  %v1081 = vunpack.c.l.s4 1983009808
  %v1082 = vunpack.c.0.s8 %v1081
  %v1083 = vlaneseq
  %v1084 = vshrl.u32 %v1083, 7
  %v1085 = vsub.s32 %v1082, %v1084
  %v1086 = vrot.slane %v1078, %v1085
  %v1088 = vunpack.c.l.s4 1983009808
  %v1089 = vunpack.c.0.s8 %v1088
  %v1090 = vlaneseq
  %v1091 = vshrl.u32 %v1090, 7
  %v1092 = vsub.s32 %v1089, %v1091
  %v1093 = vrot.slane %v1079, %v1092
  %v1094 = vcombine.high %v1086, %v1086
  %v1095 = vcombine.high %v1093, %v1093
  %v1096 = vcombine.low %v890, %v892
  %v1097 = vcombine.high %v890, %v892
  %v1099 = vunpack.c.l.s4 1983009808
  %v1100 = vunpack.c.0.s8 %v1099
  %v1101 = vlaneseq
  %v1102 = vshrl.u32 %v1101, 7
  %v1103 = vsub.s32 %v1100, %v1102
  %v1104 = vrot.slane %v1096, %v1103
  %v1106 = vunpack.c.l.s4 1983009808
  %v1107 = vunpack.c.0.s8 %v1106
  %v1108 = vlaneseq
  %v1109 = vshrl.u32 %v1108, 7
  %v1110 = vsub.s32 %v1107, %v1109
  %v1111 = vrot.slane %v1097, %v1110
  %v1112 = vcombine.high %v1104, %v1104
  %v1113 = vcombine.high %v1111, %v1111
  %v1114 = vcombine.low %v896, %v898
  %v1115 = vcombine.high %v896, %v898
  %v1117 = vunpack.c.l.s4 1983009808
  %v1118 = vunpack.c.0.s8 %v1117
  %v1119 = vlaneseq
  %v1120 = vshrl.u32 %v1119, 7
  %v1121 = vsub.s32 %v1118, %v1120
  %v1122 = vrot.slane %v1114, %v1121
  %v1124 = vunpack.c.l.s4 1983009808
  %v1125 = vunpack.c.0.s8 %v1124
  %v1126 = vlaneseq
  %v1127 = vshrl.u32 %v1126, 7
  %v1128 = vsub.s32 %v1125, %v1127
  %v1129 = vrot.slane %v1115, %v1128
  %v1130 = vcombine.high %v1122, %v1122
  %v1131 = vcombine.high %v1129, %v1129
  %v1132 = vcombine.low %v900, %v902
  %v1133 = vcombine.high %v900, %v902
  %v1135 = vunpack.c.l.s4 1983009808
  %v1136 = vunpack.c.0.s8 %v1135
  %v1137 = vlaneseq
  %v1138 = vshrl.u32 %v1137, 7
  %v1139 = vsub.s32 %v1136, %v1138
  %v1140 = vrot.slane %v1132, %v1139
  %v1142 = vunpack.c.l.s4 1983009808
  %v1143 = vunpack.c.0.s8 %v1142
  %v1144 = vlaneseq
  %v1145 = vshrl.u32 %v1144, 7
  %v1146 = vsub.s32 %v1143, %v1145
  %v1147 = vrot.slane %v1133, %v1146
  %v1148 = vcombine.high %v1140, %v1140
  %v1149 = vcombine.high %v1147, %v1147
  %v1150 = vcombine.low %v906, %v908
  %v1151 = vcombine.high %v906, %v908
  %v1153 = vunpack.c.l.s4 1983009808
  %v1154 = vunpack.c.0.s8 %v1153
  %v1155 = vlaneseq
  %v1156 = vshrl.u32 %v1155, 7
  %v1157 = vsub.s32 %v1154, %v1156
  %v1158 = vrot.slane %v1150, %v1157
  %v1160 = vunpack.c.l.s4 1983009808
  %v1161 = vunpack.c.0.s8 %v1160
  %v1162 = vlaneseq
  %v1163 = vshrl.u32 %v1162, 7
  %v1164 = vsub.s32 %v1161, %v1163
  %v1165 = vrot.slane %v1151, %v1164
  %v1166 = vcombine.high %v1158, %v1158
  %v1167 = vcombine.high %v1165, %v1165
  %v1168 = vcombine.low %v910, %v912
  %v1169 = vcombine.high %v910, %v912
  %v1171 = vunpack.c.l.s4 1983009808
  %v1172 = vunpack.c.0.s8 %v1171
  %v1173 = vlaneseq
  %v1174 = vshrl.u32 %v1173, 7
  %v1175 = vsub.s32 %v1172, %v1174
  %v1176 = vrot.slane %v1168, %v1175
  %v1178 = vunpack.c.l.s4 1983009808
  %v1179 = vunpack.c.0.s8 %v1178
  %v1180 = vlaneseq
  %v1181 = vshrl.u32 %v1180, 7
  %v1182 = vsub.s32 %v1179, %v1181
  %v1183 = vrot.slane %v1169, %v1182
  %v1184 = vcombine.high %v1176, %v1176
  %v1185 = vcombine.high %v1183, %v1183
  %v1186 = vcombine.low %v916, %v918
  %v1187 = vcombine.high %v916, %v918
  %v1189 = vunpack.c.l.s4 1983009808
  %v1190 = vunpack.c.0.s8 %v1189
  %v1191 = vlaneseq
  %v1192 = vshrl.u32 %v1191, 7
  %v1193 = vsub.s32 %v1190, %v1192
  %v1194 = vrot.slane %v1186, %v1193
  %v1196 = vunpack.c.l.s4 1983009808
  %v1197 = vunpack.c.0.s8 %v1196
  %v1198 = vlaneseq
  %v1199 = vshrl.u32 %v1198, 7
  %v1200 = vsub.s32 %v1197, %v1199
  %v1201 = vrot.slane %v1187, %v1200
  %v1202 = vcombine.high %v1194, %v1194
  %v1203 = vcombine.high %v1201, %v1201
  %v1204 = vcombine.low %v920, %v922
  %v1205 = vcombine.high %v920, %v922
  %v1207 = vunpack.c.l.s4 1983009808
  %v1208 = vunpack.c.0.s8 %v1207
  %v1209 = vlaneseq
  %v1210 = vshrl.u32 %v1209, 7
  %v1211 = vsub.s32 %v1208, %v1210
  %v1212 = vrot.slane %v1204, %v1211
  %v1214 = vunpack.c.l.s4 1983009808
  %v1215 = vunpack.c.0.s8 %v1214
  %v1216 = vlaneseq
  %v1217 = vshrl.u32 %v1216, 7
  %v1218 = vsub.s32 %v1215, %v1217
  %v1219 = vrot.slane %v1205, %v1218
  %v1220 = vcombine.high %v1212, %v1212
  %v1221 = vcombine.high %v1219, %v1219
  %v1222 = vcombine.low %v926, %v928
  %v1223 = vcombine.high %v926, %v928
  %v1225 = vunpack.c.l.s4 1983009808
  %v1226 = vunpack.c.0.s8 %v1225
  %v1227 = vlaneseq
  %v1228 = vshrl.u32 %v1227, 7
  %v1229 = vsub.s32 %v1226, %v1228
  %v1230 = vrot.slane %v1222, %v1229
  %v1232 = vunpack.c.l.s4 1983009808
  %v1233 = vunpack.c.0.s8 %v1232
  %v1234 = vlaneseq
  %v1235 = vshrl.u32 %v1234, 7
  %v1236 = vsub.s32 %v1233, %v1235
  %v1237 = vrot.slane %v1223, %v1236
  %v1238 = vcombine.high %v1230, %v1230
  %v1239 = vcombine.high %v1237, %v1237
  %v1240 = vcombine.low %v930, %v932
  %v1241 = vcombine.high %v930, %v932
  %v1243 = vunpack.c.l.s4 1983009808
  %v1244 = vunpack.c.0.s8 %v1243
  %v1245 = vlaneseq
  %v1246 = vshrl.u32 %v1245, 7
  %v1247 = vsub.s32 %v1244, %v1246
  %v1248 = vrot.slane %v1240, %v1247
  %v1250 = vunpack.c.l.s4 1983009808
  %v1251 = vunpack.c.0.s8 %v1250
  %v1252 = vlaneseq
  %v1253 = vshrl.u32 %v1252, 7
  %v1254 = vsub.s32 %v1251, %v1253
  %v1255 = vrot.slane %v1241, %v1254
  %v1256 = vcombine.high %v1248, %v1248
  %v1257 = vcombine.high %v1255, %v1255
  %v1258 = vcombine.low %v936, %v938
  %v1259 = vcombine.high %v936, %v938
  %v1261 = vunpack.c.l.s4 1983009808
  %v1262 = vunpack.c.0.s8 %v1261
  %v1263 = vlaneseq
  %v1264 = vshrl.u32 %v1263, 7
  %v1265 = vsub.s32 %v1262, %v1264
  %v1266 = vrot.slane %v1258, %v1265
  %v1268 = vunpack.c.l.s4 1983009808
  %v1269 = vunpack.c.0.s8 %v1268
  %v1270 = vlaneseq
  %v1271 = vshrl.u32 %v1270, 7
  %v1272 = vsub.s32 %v1269, %v1271
  %v1273 = vrot.slane %v1259, %v1272
  %v1274 = vcombine.high %v1266, %v1266
  %v1275 = vcombine.high %v1273, %v1273
  %v1276 = vcombine.low %v940, %v942
  %v1277 = vcombine.high %v940, %v942
  %v1279 = vunpack.c.l.s4 1983009808
  %v1280 = vunpack.c.0.s8 %v1279
  %v1281 = vlaneseq
  %v1282 = vshrl.u32 %v1281, 7
  %v1283 = vsub.s32 %v1280, %v1282
  %v1284 = vrot.slane %v1276, %v1283
  %v1286 = vunpack.c.l.s4 1983009808
  %v1287 = vunpack.c.0.s8 %v1286
  %v1288 = vlaneseq
  %v1289 = vshrl.u32 %v1288, 7
  %v1290 = vsub.s32 %v1287, %v1289
  %v1291 = vrot.slane %v1277, %v1290
  %v1292 = vcombine.high %v1284, %v1284
  %v1293 = vcombine.high %v1291, %v1291
  %v1294 = vcombine.low %v946, %v948
  %v1295 = vcombine.high %v946, %v948
  %v1297 = vunpack.c.l.s4 1983009808
  %v1298 = vunpack.c.0.s8 %v1297
  %v1299 = vlaneseq
  %v1300 = vshrl.u32 %v1299, 7
  %v1301 = vsub.s32 %v1298, %v1300
  %v1302 = vrot.slane %v1294, %v1301
  %v1304 = vunpack.c.l.s4 1983009808
  %v1305 = vunpack.c.0.s8 %v1304
  %v1306 = vlaneseq
  %v1307 = vshrl.u32 %v1306, 7
  %v1308 = vsub.s32 %v1305, %v1307
  %v1309 = vrot.slane %v1295, %v1308
  %v1310 = vcombine.high %v1302, %v1302
  %v1311 = vcombine.high %v1309, %v1309
  %v1312 = vcombine.low %v950, %v952
  %v1313 = vcombine.high %v950, %v952
  %v1315 = vunpack.c.l.s4 1983009808
  %v1316 = vunpack.c.0.s8 %v1315
  %v1317 = vlaneseq
  %v1318 = vshrl.u32 %v1317, 7
  %v1319 = vsub.s32 %v1316, %v1318
  %v1320 = vrot.slane %v1312, %v1319
  %v1322 = vunpack.c.l.s4 1983009808
  %v1323 = vunpack.c.0.s8 %v1322
  %v1324 = vlaneseq
  %v1325 = vshrl.u32 %v1324, 7
  %v1326 = vsub.s32 %v1323, %v1325
  %v1327 = vrot.slane %v1313, %v1326
  %v1328 = vcombine.high %v1320, %v1320
  %v1329 = vcombine.high %v1327, %v1327
  %v1330 = vcombine.low %v956, %v958
  %v1331 = vcombine.high %v956, %v958
  %v1333 = vunpack.c.l.s4 1983009808
  %v1334 = vunpack.c.0.s8 %v1333
  %v1335 = vlaneseq
  %v1336 = vshrl.u32 %v1335, 7
  %v1337 = vsub.s32 %v1334, %v1336
  %v1338 = vrot.slane %v1330, %v1337
  %v1340 = vunpack.c.l.s4 1983009808
  %v1341 = vunpack.c.0.s8 %v1340
  %v1342 = vlaneseq
  %v1343 = vshrl.u32 %v1342, 7
  %v1344 = vsub.s32 %v1341, %v1343
  %v1345 = vrot.slane %v1331, %v1344
  %v1346 = vcombine.high %v1338, %v1338
  %v1347 = vcombine.high %v1345, %v1345
  %v1348 = vcombine.low %v960, %v962
  %v1349 = vcombine.high %v960, %v962
  %v1351 = vunpack.c.l.s4 1983009808
  %v1352 = vunpack.c.0.s8 %v1351
  %v1353 = vlaneseq
  %v1354 = vshrl.u32 %v1353, 7
  %v1355 = vsub.s32 %v1352, %v1354
  %v1356 = vrot.slane %v1348, %v1355
  %v1358 = vunpack.c.l.s4 1983009808
  %v1359 = vunpack.c.0.s8 %v1358
  %v1360 = vlaneseq
  %v1361 = vshrl.u32 %v1360, 7
  %v1362 = vsub.s32 %v1359, %v1361
  %v1363 = vrot.slane %v1349, %v1362
  %v1364 = vcombine.high %v1356, %v1356
  %v1365 = vcombine.high %v1363, %v1363
  %v1366 = vcombine.low %v966, %v968
  %v1367 = vcombine.high %v966, %v968
  %v1369 = vunpack.c.l.s4 1983009808
  %v1370 = vunpack.c.0.s8 %v1369
  %v1371 = vlaneseq
  %v1372 = vshrl.u32 %v1371, 7
  %v1373 = vsub.s32 %v1370, %v1372
  %v1374 = vrot.slane %v1366, %v1373
  %v1376 = vunpack.c.l.s4 1983009808
  %v1377 = vunpack.c.0.s8 %v1376
  %v1378 = vlaneseq
  %v1379 = vshrl.u32 %v1378, 7
  %v1380 = vsub.s32 %v1377, %v1379
  %v1381 = vrot.slane %v1367, %v1380
  %v1382 = vcombine.high %v1374, %v1374
  %v1383 = vcombine.high %v1381, %v1381
  %v1384 = vcombine.low %v970, %v972
  %v1385 = vcombine.high %v970, %v972
  %v1387 = vunpack.c.l.s4 1983009808
  %v1388 = vunpack.c.0.s8 %v1387
  %v1389 = vlaneseq
  %v1390 = vshrl.u32 %v1389, 7
  %v1391 = vsub.s32 %v1388, %v1390
  %v1392 = vrot.slane %v1384, %v1391
  %v1394 = vunpack.c.l.s4 1983009808
  %v1395 = vunpack.c.0.s8 %v1394
  %v1396 = vlaneseq
  %v1397 = vshrl.u32 %v1396, 7
  %v1398 = vsub.s32 %v1395, %v1397
  %v1399 = vrot.slane %v1385, %v1398
  %v1400 = vcombine.high %v1392, %v1392
  %v1401 = vcombine.high %v1399, %v1399
  %v1402 = vcombine.low %v976, %v978
  %v1403 = vcombine.high %v976, %v978
  %v1405 = vunpack.c.l.s4 1983009808
  %v1406 = vunpack.c.0.s8 %v1405
  %v1407 = vlaneseq
  %v1408 = vshrl.u32 %v1407, 7
  %v1409 = vsub.s32 %v1406, %v1408
  %v1410 = vrot.slane %v1402, %v1409
  %v1412 = vunpack.c.l.s4 1983009808
  %v1413 = vunpack.c.0.s8 %v1412
  %v1414 = vlaneseq
  %v1415 = vshrl.u32 %v1414, 7
  %v1416 = vsub.s32 %v1413, %v1415
  %v1417 = vrot.slane %v1403, %v1416
  %v1418 = vcombine.high %v1410, %v1410
  %v1419 = vcombine.high %v1417, %v1417
  %v1420 = vcombine.low %v980, %v982
  %v1421 = vcombine.high %v980, %v982
  %v1423 = vunpack.c.l.s4 1983009808
  %v1424 = vunpack.c.0.s8 %v1423
  %v1425 = vlaneseq
  %v1426 = vshrl.u32 %v1425, 7
  %v1427 = vsub.s32 %v1424, %v1426
  %v1428 = vrot.slane %v1420, %v1427
  %v1430 = vunpack.c.l.s4 1983009808
  %v1431 = vunpack.c.0.s8 %v1430
  %v1432 = vlaneseq
  %v1433 = vshrl.u32 %v1432, 7
  %v1434 = vsub.s32 %v1431, %v1433
  %v1435 = vrot.slane %v1421, %v1434
  %v1436 = vcombine.high %v1428, %v1428
  %v1437 = vcombine.high %v1435, %v1435
  %v1438 = vcombine.low %v986, %v988
  %v1439 = vcombine.high %v986, %v988
  %v1441 = vunpack.c.l.s4 1983009808
  %v1442 = vunpack.c.0.s8 %v1441
  %v1443 = vlaneseq
  %v1444 = vshrl.u32 %v1443, 7
  %v1445 = vsub.s32 %v1442, %v1444
  %v1446 = vrot.slane %v1438, %v1445
  %v1448 = vunpack.c.l.s4 1983009808
  %v1449 = vunpack.c.0.s8 %v1448
  %v1450 = vlaneseq
  %v1451 = vshrl.u32 %v1450, 7
  %v1452 = vsub.s32 %v1449, %v1451
  %v1453 = vrot.slane %v1439, %v1452
  %v1454 = vcombine.high %v1446, %v1446
  %v1455 = vcombine.high %v1453, %v1453
  %v1456 = vcombine.low %v990, %v992
  %v1457 = vcombine.high %v990, %v992
  %v1459 = vunpack.c.l.s4 1983009808
  %v1460 = vunpack.c.0.s8 %v1459
  %v1461 = vlaneseq
  %v1462 = vshrl.u32 %v1461, 7
  %v1463 = vsub.s32 %v1460, %v1462
  %v1464 = vrot.slane %v1456, %v1463
  %v1466 = vunpack.c.l.s4 1983009808
  %v1467 = vunpack.c.0.s8 %v1466
  %v1468 = vlaneseq
  %v1469 = vshrl.u32 %v1468, 7
  %v1470 = vsub.s32 %v1467, %v1469
  %v1471 = vrot.slane %v1457, %v1470
  %v1472 = vcombine.high %v1464, %v1464
  %v1473 = vcombine.high %v1471, %v1471
  %v1570 = vrot.slane %v1050, 7
  %v1571 = vrot.slane %v1570, 2
  %v1572 = vrot.slane %v1058, 7
  %v1573 = vrot.slane %v1572, 2
  %v1574 = vrot.slane %v1057, 7
  %v1575 = vrot.slane %v1574, 2
  %v1576 = vrot.slane %v1059, 7
  %v1577 = vrot.slane %v1576, 2
  %v1578 = vrot.slane %v1068, 7
  %v1579 = vrot.slane %v1578, 2
  %v1580 = vrot.slane %v1076, 7
  %v1581 = vrot.slane %v1580, 2
  %v1582 = vrot.slane %v1075, 7
  %v1583 = vrot.slane %v1582, 2
  %v1584 = vrot.slane %v1077, 7
  %v1585 = vrot.slane %v1584, 2
  %v1586 = vrot.slane %v1086, 7
  %v1587 = vrot.slane %v1586, 2
  %v1588 = vrot.slane %v1094, 7
  %v1589 = vrot.slane %v1588, 2
  %v1590 = vrot.slane %v1093, 7
  %v1591 = vrot.slane %v1590, 2
  %v1592 = vrot.slane %v1095, 7
  %v1593 = vrot.slane %v1592, 2
  %v1594 = vrot.slane %v1104, 7
  %v1595 = vrot.slane %v1594, 2
  %v1596 = vrot.slane %v1112, 7
  %v1597 = vrot.slane %v1596, 2
  %v1598 = vrot.slane %v1111, 7
  %v1599 = vrot.slane %v1598, 2
  %v1600 = vrot.slane %v1113, 7
  %v1601 = vrot.slane %v1600, 2
  %v1602 = vrot.slane %v1122, 7
  %v1603 = vrot.slane %v1602, 2
  %v1604 = vrot.slane %v1130, 7
  %v1605 = vrot.slane %v1604, 2
  %v1606 = vrot.slane %v1129, 7
  %v1607 = vrot.slane %v1606, 2
  %v1608 = vrot.slane %v1131, 7
  %v1609 = vrot.slane %v1608, 2
  %v1610 = vrot.slane %v1140, 7
  %v1611 = vrot.slane %v1610, 2
  %v1612 = vrot.slane %v1148, 7
  %v1613 = vrot.slane %v1612, 2
  %v1614 = vrot.slane %v1147, 7
  %v1615 = vrot.slane %v1614, 2
  %v1616 = vrot.slane %v1149, 7
  %v1617 = vrot.slane %v1616, 2
  %v1618 = vrot.slane %v1158, 7
  %v1619 = vrot.slane %v1618, 2
  %v1620 = vrot.slane %v1166, 7
  %v1621 = vrot.slane %v1620, 2
  %v1622 = vrot.slane %v1165, 7
  %v1623 = vrot.slane %v1622, 2
  %v1624 = vrot.slane %v1167, 7
  %v1625 = vrot.slane %v1624, 2
  %v1626 = vrot.slane %v1176, 7
  %v1627 = vrot.slane %v1626, 2
  %v1628 = vrot.slane %v1184, 7
  %v1629 = vrot.slane %v1628, 2
  %v1630 = vrot.slane %v1183, 7
  %v1631 = vrot.slane %v1630, 2
  %v1632 = vrot.slane %v1185, 7
  %v1633 = vrot.slane %v1632, 2
  %v1634 = vrot.slane %v1194, 7
  %v1635 = vrot.slane %v1634, 2
  %v1636 = vrot.slane %v1202, 7
  %v1637 = vrot.slane %v1636, 2
  %v1638 = vrot.slane %v1201, 7
  %v1639 = vrot.slane %v1638, 2
  %v1640 = vrot.slane %v1203, 7
  %v1641 = vrot.slane %v1640, 2
  %v1642 = vrot.slane %v1212, 7
  %v1643 = vrot.slane %v1642, 2
  %v1644 = vrot.slane %v1220, 7
  %v1645 = vrot.slane %v1644, 2
  %v1646 = vrot.slane %v1219, 7
  %v1647 = vrot.slane %v1646, 2
  %v1648 = vrot.slane %v1221, 7
  %v1649 = vrot.slane %v1648, 2
  %v1650 = vrot.slane %v1230, 7
  %v1651 = vrot.slane %v1650, 2
  %v1652 = vrot.slane %v1238, 7
  %v1653 = vrot.slane %v1652, 2
  %v1654 = vrot.slane %v1237, 7
  %v1655 = vrot.slane %v1654, 2
  %v1656 = vrot.slane %v1239, 7
  %v1657 = vrot.slane %v1656, 2
  %v1658 = vrot.slane %v1248, 7
  %v1659 = vrot.slane %v1658, 2
  %v1660 = vrot.slane %v1256, 7
  %v1661 = vrot.slane %v1660, 2
  %v1662 = vrot.slane %v1255, 7
  %v1663 = vrot.slane %v1662, 2
  %v1664 = vrot.slane %v1257, 7
  %v1665 = vrot.slane %v1664, 2
  %v1666 = vrot.slane %v1266, 7
  %v1667 = vrot.slane %v1666, 2
  %v1668 = vrot.slane %v1274, 7
  %v1669 = vrot.slane %v1668, 2
  %v1670 = vrot.slane %v1273, 7
  %v1671 = vrot.slane %v1670, 2
  %v1672 = vrot.slane %v1275, 7
  %v1673 = vrot.slane %v1672, 2
  %v1674 = vrot.slane %v1284, 7
  %v1675 = vrot.slane %v1674, 2
  %v1676 = vrot.slane %v1292, 7
  %v1677 = vrot.slane %v1676, 2
  %v1678 = vrot.slane %v1291, 7
  %v1679 = vrot.slane %v1678, 2
  %v1680 = vrot.slane %v1293, 7
  %v1681 = vrot.slane %v1680, 2
  %v1682 = vrot.slane %v1302, 7
  %v1683 = vrot.slane %v1682, 2
  %v1684 = vrot.slane %v1310, 7
  %v1685 = vrot.slane %v1684, 2
  %v1686 = vrot.slane %v1309, 7
  %v1687 = vrot.slane %v1686, 2
  %v1688 = vrot.slane %v1311, 7
  %v1689 = vrot.slane %v1688, 2
  %v1690 = vrot.slane %v1320, 7
  %v1691 = vrot.slane %v1690, 2
  %v1692 = vrot.slane %v1328, 7
  %v1693 = vrot.slane %v1692, 2
  %v1694 = vrot.slane %v1327, 7
  %v1695 = vrot.slane %v1694, 2
  %v1696 = vrot.slane %v1329, 7
  %v1697 = vrot.slane %v1696, 2
  %v1698 = vrot.slane %v1338, 7
  %v1699 = vrot.slane %v1698, 2
  %v1700 = vrot.slane %v1346, 7
  %v1701 = vrot.slane %v1700, 2
  %v1702 = vrot.slane %v1345, 7
  %v1703 = vrot.slane %v1702, 2
  %v1704 = vrot.slane %v1347, 7
  %v1705 = vrot.slane %v1704, 2
  %v1706 = vrot.slane %v1356, 7
  %v1707 = vrot.slane %v1706, 2
  %v1708 = vrot.slane %v1364, 7
  %v1709 = vrot.slane %v1708, 2
  %v1710 = vrot.slane %v1363, 7
  %v1711 = vrot.slane %v1710, 2
  %v1712 = vrot.slane %v1365, 7
  %v1713 = vrot.slane %v1712, 2
  %v1714 = vrot.slane %v1374, 7
  %v1715 = vrot.slane %v1714, 2
  %v1716 = vrot.slane %v1382, 7
  %v1717 = vrot.slane %v1716, 2
  %v1718 = vrot.slane %v1381, 7
  %v1719 = vrot.slane %v1718, 2
  %v1720 = vrot.slane %v1383, 7
  %v1721 = vrot.slane %v1720, 2
  %v1722 = vrot.slane %v1392, 7
  %v1723 = vrot.slane %v1722, 2
  %v1724 = vrot.slane %v1400, 7
  %v1725 = vrot.slane %v1724, 2
  %v1726 = vrot.slane %v1399, 7
  %v1727 = vrot.slane %v1726, 2
  %v1728 = vrot.slane %v1401, 7
  %v1729 = vrot.slane %v1728, 2
  %v1730 = vrot.slane %v1410, 7
  %v1731 = vrot.slane %v1730, 2
  %v1732 = vrot.slane %v1418, 7
  %v1733 = vrot.slane %v1732, 2
  %v1734 = vrot.slane %v1417, 7
  %v1735 = vrot.slane %v1734, 2
  %v1736 = vrot.slane %v1419, 7
  %v1737 = vrot.slane %v1736, 2
  %v1738 = vrot.slane %v1428, 7
  %v1739 = vrot.slane %v1738, 2
  %v1740 = vrot.slane %v1436, 7
  %v1741 = vrot.slane %v1740, 2
  %v1742 = vrot.slane %v1435, 7
  %v1743 = vrot.slane %v1742, 2
  %v1744 = vrot.slane %v1437, 7
  %v1745 = vrot.slane %v1744, 2
  %v1746 = vrot.slane %v1446, 7
  %v1747 = vrot.slane %v1746, 2
  %v1748 = vrot.slane %v1454, 7
  %v1749 = vrot.slane %v1748, 2
  %v1750 = vrot.slane %v1453, 7
  %v1751 = vrot.slane %v1750, 2
  %v1752 = vrot.slane %v1455, 7
  %v1753 = vrot.slane %v1752, 2
  %v1754 = vrot.slane %v1464, 7
  %v1755 = vrot.slane %v1754, 2
  %v1756 = vrot.slane %v1472, 7
  %v1757 = vrot.slane %v1756, 2
  %v1758 = vrot.slane %v1471, 7
  %v1759 = vrot.slane %v1758, 2
  %v1760 = vrot.slane %v1473, 7
  %v1761 = vrot.slane %v1760, 2
  %v1858 = vmax.f32 %v1050, %v1571
  %v1859 = vmax.f32 %v1058, %v1573
  %v1860 = vmax.f32 %v1057, %v1575
  %v1861 = vmax.f32 %v1059, %v1577
  %v1862 = vmax.f32 %v1068, %v1579
  %v1863 = vmax.f32 %v1076, %v1581
  %v1864 = vmax.f32 %v1075, %v1583
  %v1865 = vmax.f32 %v1077, %v1585
  %v1866 = vmax.f32 %v1086, %v1587
  %v1867 = vmax.f32 %v1094, %v1589
  %v1868 = vmax.f32 %v1093, %v1591
  %v1869 = vmax.f32 %v1095, %v1593
  %v1870 = vmax.f32 %v1104, %v1595
  %v1871 = vmax.f32 %v1112, %v1597
  %v1872 = vmax.f32 %v1111, %v1599
  %v1873 = vmax.f32 %v1113, %v1601
  %v1874 = vmax.f32 %v1122, %v1603
  %v1875 = vmax.f32 %v1130, %v1605
  %v1876 = vmax.f32 %v1129, %v1607
  %v1877 = vmax.f32 %v1131, %v1609
  %v1878 = vmax.f32 %v1140, %v1611
  %v1879 = vmax.f32 %v1148, %v1613
  %v1880 = vmax.f32 %v1147, %v1615
  %v1881 = vmax.f32 %v1149, %v1617
  %v1882 = vmax.f32 %v1158, %v1619
  %v1883 = vmax.f32 %v1166, %v1621
  %v1884 = vmax.f32 %v1165, %v1623
  %v1885 = vmax.f32 %v1167, %v1625
  %v1886 = vmax.f32 %v1176, %v1627
  %v1887 = vmax.f32 %v1184, %v1629
  %v1888 = vmax.f32 %v1183, %v1631
  %v1889 = vmax.f32 %v1185, %v1633
  %v1890 = vmax.f32 %v1194, %v1635
  %v1891 = vmax.f32 %v1202, %v1637
  %v1892 = vmax.f32 %v1201, %v1639
  %v1893 = vmax.f32 %v1203, %v1641
  %v1894 = vmax.f32 %v1212, %v1643
  %v1895 = vmax.f32 %v1220, %v1645
  %v1896 = vmax.f32 %v1219, %v1647
  %v1897 = vmax.f32 %v1221, %v1649
  %v1898 = vmax.f32 %v1230, %v1651
  %v1899 = vmax.f32 %v1238, %v1653
  %v1900 = vmax.f32 %v1237, %v1655
  %v1901 = vmax.f32 %v1239, %v1657
  %v1902 = vmax.f32 %v1248, %v1659
  %v1903 = vmax.f32 %v1256, %v1661
  %v1904 = vmax.f32 %v1255, %v1663
  %v1905 = vmax.f32 %v1257, %v1665
  %v1906 = vmax.f32 %v1266, %v1667
  %v1907 = vmax.f32 %v1274, %v1669
  %v1908 = vmax.f32 %v1273, %v1671
  %v1909 = vmax.f32 %v1275, %v1673
  %v1910 = vmax.f32 %v1284, %v1675
  %v1911 = vmax.f32 %v1292, %v1677
  %v1912 = vmax.f32 %v1291, %v1679
  %v1913 = vmax.f32 %v1293, %v1681
  %v1914 = vmax.f32 %v1302, %v1683
  %v1915 = vmax.f32 %v1310, %v1685
  %v1916 = vmax.f32 %v1309, %v1687
  %v1917 = vmax.f32 %v1311, %v1689
  %v1918 = vmax.f32 %v1320, %v1691
  %v1919 = vmax.f32 %v1328, %v1693
  %v1920 = vmax.f32 %v1327, %v1695
  %v1921 = vmax.f32 %v1329, %v1697
  %v1922 = vmax.f32 %v1338, %v1699
  %v1923 = vmax.f32 %v1346, %v1701
  %v1924 = vmax.f32 %v1345, %v1703
  %v1925 = vmax.f32 %v1347, %v1705
  %v1926 = vmax.f32 %v1356, %v1707
  %v1927 = vmax.f32 %v1364, %v1709
  %v1928 = vmax.f32 %v1363, %v1711
  %v1929 = vmax.f32 %v1365, %v1713
  %v1930 = vmax.f32 %v1374, %v1715
  %v1931 = vmax.f32 %v1382, %v1717
  %v1932 = vmax.f32 %v1381, %v1719
  %v1933 = vmax.f32 %v1383, %v1721
  %v1934 = vmax.f32 %v1392, %v1723
  %v1935 = vmax.f32 %v1400, %v1725
  %v1936 = vmax.f32 %v1399, %v1727
  %v1937 = vmax.f32 %v1401, %v1729
  %v1938 = vmax.f32 %v1410, %v1731
  %v1939 = vmax.f32 %v1418, %v1733
  %v1940 = vmax.f32 %v1417, %v1735
  %v1941 = vmax.f32 %v1419, %v1737
  %v1942 = vmax.f32 %v1428, %v1739
  %v1943 = vmax.f32 %v1436, %v1741
  %v1944 = vmax.f32 %v1435, %v1743
  %v1945 = vmax.f32 %v1437, %v1745
  %v1946 = vmax.f32 %v1446, %v1747
  %v1947 = vmax.f32 %v1454, %v1749
  %v1948 = vmax.f32 %v1453, %v1751
  %v1949 = vmax.f32 %v1455, %v1753
  %v1950 = vmax.f32 %v1464, %v1755
  %v1951 = vmax.f32 %v1472, %v1757
  %v1952 = vmax.f32 %v1471, %v1759
  %v1953 = vmax.f32 %v1473, %v1761
  %2050 = vrot.lane.b32.xlu0 %v1858, 8
  %v2051 = vpop.permute.xlu0 %2050
  %2052 = vrot.lane.b32.xlu0 %v1859, 8
  %v2053 = vpop.permute.xlu0 %2052
  %2054 = vrot.lane.b32.xlu0 %v1860, 8
  %v2055 = vpop.permute.xlu0 %2054
  %2056 = vrot.lane.b32.xlu0 %v1861, 8
  %v2057 = vpop.permute.xlu0 %2056
  %2058 = vrot.lane.b32.xlu0 %v1862, 8
  %v2059 = vpop.permute.xlu0 %2058
  %2060 = vrot.lane.b32.xlu0 %v1863, 8
  %v2061 = vpop.permute.xlu0 %2060
  %2062 = vrot.lane.b32.xlu0 %v1864, 8
  %v2063 = vpop.permute.xlu0 %2062
  %2064 = vrot.lane.b32.xlu0 %v1865, 8
  %v2065 = vpop.permute.xlu0 %2064
  %2066 = vrot.lane.b32.xlu0 %v1866, 8
  %v2067 = vpop.permute.xlu0 %2066
  %2068 = vrot.lane.b32.xlu0 %v1867, 8
  %v2069 = vpop.permute.xlu0 %2068
  %2070 = vrot.lane.b32.xlu0 %v1868, 8
  %v2071 = vpop.permute.xlu0 %2070
  %2072 = vrot.lane.b32.xlu0 %v1869, 8
  %v2073 = vpop.permute.xlu0 %2072
  %2074 = vrot.lane.b32.xlu0 %v1870, 8
  %v2075 = vpop.permute.xlu0 %2074
  %2076 = vrot.lane.b32.xlu0 %v1871, 8
  %v2077 = vpop.permute.xlu0 %2076
  %2078 = vrot.lane.b32.xlu0 %v1872, 8
  %v2079 = vpop.permute.xlu0 %2078
  %2080 = vrot.lane.b32.xlu0 %v1873, 8
  %v2081 = vpop.permute.xlu0 %2080
  %2082 = vrot.lane.b32.xlu0 %v1874, 8
  %v2083 = vpop.permute.xlu0 %2082
  %2084 = vrot.lane.b32.xlu0 %v1875, 8
  %v2085 = vpop.permute.xlu0 %2084
  %2086 = vrot.lane.b32.xlu0 %v1876, 8
  %v2087 = vpop.permute.xlu0 %2086
  %2088 = vrot.lane.b32.xlu0 %v1877, 8
  %v2089 = vpop.permute.xlu0 %2088
  %2090 = vrot.lane.b32.xlu0 %v1878, 8
  %v2091 = vpop.permute.xlu0 %2090
  %2092 = vrot.lane.b32.xlu0 %v1879, 8
  %v2093 = vpop.permute.xlu0 %2092
  %2094 = vrot.lane.b32.xlu0 %v1880, 8
  %v2095 = vpop.permute.xlu0 %2094
  %2096 = vrot.lane.b32.xlu0 %v1881, 8
  %v2097 = vpop.permute.xlu0 %2096
  %2098 = vrot.lane.b32.xlu0 %v1882, 8
  %v2099 = vpop.permute.xlu0 %2098
  %2100 = vrot.lane.b32.xlu0 %v1883, 8
  %v2101 = vpop.permute.xlu0 %2100
  %2102 = vrot.lane.b32.xlu0 %v1884, 8
  %v2103 = vpop.permute.xlu0 %2102
  %2104 = vrot.lane.b32.xlu0 %v1885, 8
  %v2105 = vpop.permute.xlu0 %2104
  %2106 = vrot.lane.b32.xlu0 %v1886, 8
  %v2107 = vpop.permute.xlu0 %2106
  %2108 = vrot.lane.b32.xlu0 %v1887, 8
  %v2109 = vpop.permute.xlu0 %2108
  %2110 = vrot.lane.b32.xlu0 %v1888, 8
  %v2111 = vpop.permute.xlu0 %2110
  %2112 = vrot.lane.b32.xlu0 %v1889, 8
  %v2113 = vpop.permute.xlu0 %2112
  %2114 = vrot.lane.b32.xlu0 %v1890, 8
  %v2115 = vpop.permute.xlu0 %2114
  %2116 = vrot.lane.b32.xlu0 %v1891, 8
  %v2117 = vpop.permute.xlu0 %2116
  %2118 = vrot.lane.b32.xlu0 %v1892, 8
  %v2119 = vpop.permute.xlu0 %2118
  %2120 = vrot.lane.b32.xlu0 %v1893, 8
  %v2121 = vpop.permute.xlu0 %2120
  %2122 = vrot.lane.b32.xlu0 %v1894, 8
  %v2123 = vpop.permute.xlu0 %2122
  %2124 = vrot.lane.b32.xlu0 %v1895, 8
  %v2125 = vpop.permute.xlu0 %2124
  %2126 = vrot.lane.b32.xlu0 %v1896, 8
  %v2127 = vpop.permute.xlu0 %2126
  %2128 = vrot.lane.b32.xlu0 %v1897, 8
  %v2129 = vpop.permute.xlu0 %2128
  %2130 = vrot.lane.b32.xlu0 %v1898, 8
  %v2131 = vpop.permute.xlu0 %2130
  %2132 = vrot.lane.b32.xlu0 %v1899, 8
  %v2133 = vpop.permute.xlu0 %2132
  %2134 = vrot.lane.b32.xlu0 %v1900, 8
  %v2135 = vpop.permute.xlu0 %2134
  %2136 = vrot.lane.b32.xlu0 %v1901, 8
  %v2137 = vpop.permute.xlu0 %2136
  %2138 = vrot.lane.b32.xlu0 %v1902, 8
  %v2139 = vpop.permute.xlu0 %2138
  %2140 = vrot.lane.b32.xlu0 %v1903, 8
  %v2141 = vpop.permute.xlu0 %2140
  %2142 = vrot.lane.b32.xlu0 %v1904, 8
  %v2143 = vpop.permute.xlu0 %2142
  %2144 = vrot.lane.b32.xlu0 %v1905, 8
  %v2145 = vpop.permute.xlu0 %2144
  %2146 = vrot.lane.b32.xlu0 %v1906, 8
  %v2147 = vpop.permute.xlu0 %2146
  %2148 = vrot.lane.b32.xlu0 %v1907, 8
  %v2149 = vpop.permute.xlu0 %2148
  %2150 = vrot.lane.b32.xlu0 %v1908, 8
  %v2151 = vpop.permute.xlu0 %2150
  %2152 = vrot.lane.b32.xlu0 %v1909, 8
  %v2153 = vpop.permute.xlu0 %2152
  %2154 = vrot.lane.b32.xlu0 %v1910, 8
  %v2155 = vpop.permute.xlu0 %2154
  %2156 = vrot.lane.b32.xlu0 %v1911, 8
  %v2157 = vpop.permute.xlu0 %2156
  %2158 = vrot.lane.b32.xlu0 %v1912, 8
  %v2159 = vpop.permute.xlu0 %2158
  %2160 = vrot.lane.b32.xlu0 %v1913, 8
  %v2161 = vpop.permute.xlu0 %2160
  %2162 = vrot.lane.b32.xlu0 %v1914, 8
  %v2163 = vpop.permute.xlu0 %2162
  %2164 = vrot.lane.b32.xlu0 %v1915, 8
  %v2165 = vpop.permute.xlu0 %2164
  %2166 = vrot.lane.b32.xlu0 %v1916, 8
  %v2167 = vpop.permute.xlu0 %2166
  %2168 = vrot.lane.b32.xlu0 %v1917, 8
  %v2169 = vpop.permute.xlu0 %2168
  %2170 = vrot.lane.b32.xlu0 %v1918, 8
  %v2171 = vpop.permute.xlu0 %2170
  %2172 = vrot.lane.b32.xlu0 %v1919, 8
  %v2173 = vpop.permute.xlu0 %2172
  %2174 = vrot.lane.b32.xlu0 %v1920, 8
  %v2175 = vpop.permute.xlu0 %2174
  %2176 = vrot.lane.b32.xlu0 %v1921, 8
  %v2177 = vpop.permute.xlu0 %2176
  %2178 = vrot.lane.b32.xlu0 %v1922, 8
  %v2179 = vpop.permute.xlu0 %2178
  %2180 = vrot.lane.b32.xlu0 %v1923, 8
  %v2181 = vpop.permute.xlu0 %2180
  %2182 = vrot.lane.b32.xlu0 %v1924, 8
  %v2183 = vpop.permute.xlu0 %2182
  %2184 = vrot.lane.b32.xlu0 %v1925, 8
  %v2185 = vpop.permute.xlu0 %2184
  %2186 = vrot.lane.b32.xlu0 %v1926, 8
  %v2187 = vpop.permute.xlu0 %2186
  %2188 = vrot.lane.b32.xlu0 %v1927, 8
  %v2189 = vpop.permute.xlu0 %2188
  %2190 = vrot.lane.b32.xlu0 %v1928, 8
  %v2191 = vpop.permute.xlu0 %2190
  %2192 = vrot.lane.b32.xlu0 %v1929, 8
  %v2193 = vpop.permute.xlu0 %2192
  %2194 = vrot.lane.b32.xlu0 %v1930, 8
  %v2195 = vpop.permute.xlu0 %2194
  %2196 = vrot.lane.b32.xlu0 %v1931, 8
  %v2197 = vpop.permute.xlu0 %2196
  %2198 = vrot.lane.b32.xlu0 %v1932, 8
  %v2199 = vpop.permute.xlu0 %2198
  %2200 = vrot.lane.b32.xlu0 %v1933, 8
  %v2201 = vpop.permute.xlu0 %2200
  %2202 = vrot.lane.b32.xlu0 %v1934, 8
  %v2203 = vpop.permute.xlu0 %2202
  %2204 = vrot.lane.b32.xlu0 %v1935, 8
  %v2205 = vpop.permute.xlu0 %2204
  %2206 = vrot.lane.b32.xlu0 %v1936, 8
  %v2207 = vpop.permute.xlu0 %2206
  %2208 = vrot.lane.b32.xlu0 %v1937, 8
  %v2209 = vpop.permute.xlu0 %2208
  %2210 = vrot.lane.b32.xlu0 %v1938, 8
  %v2211 = vpop.permute.xlu0 %2210
  %2212 = vrot.lane.b32.xlu0 %v1939, 8
  %v2213 = vpop.permute.xlu0 %2212
  %2214 = vrot.lane.b32.xlu0 %v1940, 8
  %v2215 = vpop.permute.xlu0 %2214
  %2216 = vrot.lane.b32.xlu0 %v1941, 8
  %v2217 = vpop.permute.xlu0 %2216
  %2218 = vrot.lane.b32.xlu0 %v1942, 8
  %v2219 = vpop.permute.xlu0 %2218
  %2220 = vrot.lane.b32.xlu0 %v1943, 8
  %v2221 = vpop.permute.xlu0 %2220
  %2222 = vrot.lane.b32.xlu0 %v1944, 8
  %v2223 = vpop.permute.xlu0 %2222
  %2224 = vrot.lane.b32.xlu0 %v1945, 8
  %v2225 = vpop.permute.xlu0 %2224
  %2226 = vrot.lane.b32.xlu0 %v1946, 8
  %v2227 = vpop.permute.xlu0 %2226
  %2228 = vrot.lane.b32.xlu0 %v1947, 8
  %v2229 = vpop.permute.xlu0 %2228
  %2230 = vrot.lane.b32.xlu0 %v1948, 8
  %v2231 = vpop.permute.xlu0 %2230
  %2232 = vrot.lane.b32.xlu0 %v1949, 8
  %v2233 = vpop.permute.xlu0 %2232
  %2234 = vrot.lane.b32.xlu0 %v1950, 8
  %v2235 = vpop.permute.xlu0 %2234
  %2236 = vrot.lane.b32.xlu0 %v1951, 8
  %v2237 = vpop.permute.xlu0 %2236
  %2238 = vrot.lane.b32.xlu0 %v1952, 8
  %v2239 = vpop.permute.xlu0 %2238
  %2240 = vrot.lane.b32.xlu0 %v1953, 8
  %v2241 = vpop.permute.xlu0 %2240
  %v2242 = vrot.slane %v2051, 2
  %v2243 = vrot.slane %v2053, 2
  %v2244 = vrot.slane %v2055, 2
  %v2245 = vrot.slane %v2057, 2
  %v2246 = vrot.slane %v2059, 2
  %v2247 = vrot.slane %v2061, 2
  %v2248 = vrot.slane %v2063, 2
  %v2249 = vrot.slane %v2065, 2
  %v2250 = vrot.slane %v2067, 2
  %v2251 = vrot.slane %v2069, 2
  %v2252 = vrot.slane %v2071, 2
  %v2253 = vrot.slane %v2073, 2
  %v2254 = vrot.slane %v2075, 2
  %v2255 = vrot.slane %v2077, 2
  %v2256 = vrot.slane %v2079, 2
  %v2257 = vrot.slane %v2081, 2
  %v2258 = vrot.slane %v2083, 2
  %v2259 = vrot.slane %v2085, 2
  %v2260 = vrot.slane %v2087, 2
  %v2261 = vrot.slane %v2089, 2
  %v2262 = vrot.slane %v2091, 2
  %v2263 = vrot.slane %v2093, 2
  %v2264 = vrot.slane %v2095, 2
  %v2265 = vrot.slane %v2097, 2
  %v2266 = vrot.slane %v2099, 2
  %v2267 = vrot.slane %v2101, 2
  %v2268 = vrot.slane %v2103, 2
  %v2269 = vrot.slane %v2105, 2
  %v2270 = vrot.slane %v2107, 2
  %v2271 = vrot.slane %v2109, 2
  %v2272 = vrot.slane %v2111, 2
  %v2273 = vrot.slane %v2113, 2
  %v2274 = vrot.slane %v2115, 2
  %v2275 = vrot.slane %v2117, 2
  %v2276 = vrot.slane %v2119, 2
  %v2277 = vrot.slane %v2121, 2
  %v2278 = vrot.slane %v2123, 2
  %v2279 = vrot.slane %v2125, 2
  %v2280 = vrot.slane %v2127, 2
  %v2281 = vrot.slane %v2129, 2
  %v2282 = vrot.slane %v2131, 2
  %v2283 = vrot.slane %v2133, 2
  %v2284 = vrot.slane %v2135, 2
  %v2285 = vrot.slane %v2137, 2
  %v2286 = vrot.slane %v2139, 2
  %v2287 = vrot.slane %v2141, 2
  %v2288 = vrot.slane %v2143, 2
  %v2289 = vrot.slane %v2145, 2
  %v2290 = vrot.slane %v2147, 2
  %v2291 = vrot.slane %v2149, 2
  %v2292 = vrot.slane %v2151, 2
  %v2293 = vrot.slane %v2153, 2
  %v2294 = vrot.slane %v2155, 2
  %v2295 = vrot.slane %v2157, 2
  %v2296 = vrot.slane %v2159, 2
  %v2297 = vrot.slane %v2161, 2
  %v2298 = vrot.slane %v2163, 2
  %v2299 = vrot.slane %v2165, 2
  %v2300 = vrot.slane %v2167, 2
  %v2301 = vrot.slane %v2169, 2
  %v2302 = vrot.slane %v2171, 2
  %v2303 = vrot.slane %v2173, 2
  %v2304 = vrot.slane %v2175, 2
  %v2305 = vrot.slane %v2177, 2
  %v2306 = vrot.slane %v2179, 2
  %v2307 = vrot.slane %v2181, 2
  %v2308 = vrot.slane %v2183, 2
  %v2309 = vrot.slane %v2185, 2
  %v2310 = vrot.slane %v2187, 2
  %v2311 = vrot.slane %v2189, 2
  %v2312 = vrot.slane %v2191, 2
  %v2313 = vrot.slane %v2193, 2
  %v2314 = vrot.slane %v2195, 2
  %v2315 = vrot.slane %v2197, 2
  %v2316 = vrot.slane %v2199, 2
  %v2317 = vrot.slane %v2201, 2
  %v2318 = vrot.slane %v2203, 2
  %v2319 = vrot.slane %v2205, 2
  %v2320 = vrot.slane %v2207, 2
  %v2321 = vrot.slane %v2209, 2
  %v2322 = vrot.slane %v2211, 2
  %v2323 = vrot.slane %v2213, 2
  %v2324 = vrot.slane %v2215, 2
  %v2325 = vrot.slane %v2217, 2
  %v2326 = vrot.slane %v2219, 2
  %v2327 = vrot.slane %v2221, 2
  %v2328 = vrot.slane %v2223, 2
  %v2329 = vrot.slane %v2225, 2
  %v2330 = vrot.slane %v2227, 2
  %v2331 = vrot.slane %v2229, 2
  %v2332 = vrot.slane %v2231, 2
  %v2333 = vrot.slane %v2233, 2
  %v2334 = vrot.slane %v2235, 2
  %v2335 = vrot.slane %v2237, 2
  %v2336 = vrot.slane %v2239, 2
  %v2337 = vrot.slane %v2241, 2
  %vm2338 = vcmask 64512
  %v2339 = vsel %vm2338, %v2051, %v2242
  %v2340 = vsel %vm2338, %v2053, %v2243
  %v2341 = vsel %vm2338, %v2055, %v2244
  %v2342 = vsel %vm2338, %v2057, %v2245
  %v2343 = vsel %vm2338, %v2059, %v2246
  %v2344 = vsel %vm2338, %v2061, %v2247
  %v2345 = vsel %vm2338, %v2063, %v2248
  %v2346 = vsel %vm2338, %v2065, %v2249
  %v2347 = vsel %vm2338, %v2067, %v2250
  %v2348 = vsel %vm2338, %v2069, %v2251
  %v2349 = vsel %vm2338, %v2071, %v2252
  %v2350 = vsel %vm2338, %v2073, %v2253
  %v2351 = vsel %vm2338, %v2075, %v2254
  %v2352 = vsel %vm2338, %v2077, %v2255
  %v2353 = vsel %vm2338, %v2079, %v2256
  %v2354 = vsel %vm2338, %v2081, %v2257
  %v2355 = vsel %vm2338, %v2083, %v2258
  %v2356 = vsel %vm2338, %v2085, %v2259
  %v2357 = vsel %vm2338, %v2087, %v2260
  %v2358 = vsel %vm2338, %v2089, %v2261
  %v2359 = vsel %vm2338, %v2091, %v2262
  %v2360 = vsel %vm2338, %v2093, %v2263
  %v2361 = vsel %vm2338, %v2095, %v2264
  %v2362 = vsel %vm2338, %v2097, %v2265
  %v2363 = vsel %vm2338, %v2099, %v2266
  %v2364 = vsel %vm2338, %v2101, %v2267
  %v2365 = vsel %vm2338, %v2103, %v2268
  %v2366 = vsel %vm2338, %v2105, %v2269
  %v2367 = vsel %vm2338, %v2107, %v2270
  %v2368 = vsel %vm2338, %v2109, %v2271
  %v2369 = vsel %vm2338, %v2111, %v2272
  %v2370 = vsel %vm2338, %v2113, %v2273
  %v2371 = vsel %vm2338, %v2115, %v2274
  %v2372 = vsel %vm2338, %v2117, %v2275
  %v2373 = vsel %vm2338, %v2119, %v2276
  %v2374 = vsel %vm2338, %v2121, %v2277
  %v2375 = vsel %vm2338, %v2123, %v2278
  %v2376 = vsel %vm2338, %v2125, %v2279
  %v2377 = vsel %vm2338, %v2127, %v2280
  %v2378 = vsel %vm2338, %v2129, %v2281
  %v2379 = vsel %vm2338, %v2131, %v2282
  %v2380 = vsel %vm2338, %v2133, %v2283
  %v2381 = vsel %vm2338, %v2135, %v2284
  %v2382 = vsel %vm2338, %v2137, %v2285
  %v2383 = vsel %vm2338, %v2139, %v2286
  %v2384 = vsel %vm2338, %v2141, %v2287
  %v2385 = vsel %vm2338, %v2143, %v2288
  %v2386 = vsel %vm2338, %v2145, %v2289
  %v2387 = vsel %vm2338, %v2147, %v2290
  %v2388 = vsel %vm2338, %v2149, %v2291
  %v2389 = vsel %vm2338, %v2151, %v2292
  %v2390 = vsel %vm2338, %v2153, %v2293
  %v2391 = vsel %vm2338, %v2155, %v2294
  %v2392 = vsel %vm2338, %v2157, %v2295
  %v2393 = vsel %vm2338, %v2159, %v2296
  %v2394 = vsel %vm2338, %v2161, %v2297
  %v2395 = vsel %vm2338, %v2163, %v2298
  %v2396 = vsel %vm2338, %v2165, %v2299
  %v2397 = vsel %vm2338, %v2167, %v2300
  %v2398 = vsel %vm2338, %v2169, %v2301
  %v2399 = vsel %vm2338, %v2171, %v2302
  %v2400 = vsel %vm2338, %v2173, %v2303
  %v2401 = vsel %vm2338, %v2175, %v2304
  %v2402 = vsel %vm2338, %v2177, %v2305
  %v2403 = vsel %vm2338, %v2179, %v2306
  %v2404 = vsel %vm2338, %v2181, %v2307
  %v2405 = vsel %vm2338, %v2183, %v2308
  %v2406 = vsel %vm2338, %v2185, %v2309
  %v2407 = vsel %vm2338, %v2187, %v2310
  %v2408 = vsel %vm2338, %v2189, %v2311
  %v2409 = vsel %vm2338, %v2191, %v2312
  %v2410 = vsel %vm2338, %v2193, %v2313
  %v2411 = vsel %vm2338, %v2195, %v2314
  %v2412 = vsel %vm2338, %v2197, %v2315
  %v2413 = vsel %vm2338, %v2199, %v2316
  %v2414 = vsel %vm2338, %v2201, %v2317
  %v2415 = vsel %vm2338, %v2203, %v2318
  %v2416 = vsel %vm2338, %v2205, %v2319
  %v2417 = vsel %vm2338, %v2207, %v2320
  %v2418 = vsel %vm2338, %v2209, %v2321
  %v2419 = vsel %vm2338, %v2211, %v2322
  %v2420 = vsel %vm2338, %v2213, %v2323
  %v2421 = vsel %vm2338, %v2215, %v2324
  %v2422 = vsel %vm2338, %v2217, %v2325
  %v2423 = vsel %vm2338, %v2219, %v2326
  %v2424 = vsel %vm2338, %v2221, %v2327
  %v2425 = vsel %vm2338, %v2223, %v2328
  %v2426 = vsel %vm2338, %v2225, %v2329
  %v2427 = vsel %vm2338, %v2227, %v2330
  %v2428 = vsel %vm2338, %v2229, %v2331
  %v2429 = vsel %vm2338, %v2231, %v2332
  %v2430 = vsel %vm2338, %v2233, %v2333
  %v2431 = vsel %vm2338, %v2235, %v2334
  %v2432 = vsel %vm2338, %v2237, %v2335
  %v2433 = vsel %vm2338, %v2239, %v2336
  %v2434 = vsel %vm2338, %v2241, %v2337
  %v2531 = vmax.f32 %v1858, %v2339
  %v2532 = vmax.f32 %v1859, %v2340
  %v2533 = vmax.f32 %v1860, %v2341
  %v2534 = vmax.f32 %v1861, %v2342
  %v2535 = vmax.f32 %v1862, %v2343
  %v2536 = vmax.f32 %v1863, %v2344
  %v2537 = vmax.f32 %v1864, %v2345
  %v2538 = vmax.f32 %v1865, %v2346
  %v2539 = vmax.f32 %v1866, %v2347
  %v2540 = vmax.f32 %v1867, %v2348
  %v2541 = vmax.f32 %v1868, %v2349
  %v2542 = vmax.f32 %v1869, %v2350
  %v2543 = vmax.f32 %v1870, %v2351
  %v2544 = vmax.f32 %v1871, %v2352
  %v2545 = vmax.f32 %v1872, %v2353
  %v2546 = vmax.f32 %v1873, %v2354
  %v2547 = vmax.f32 %v1874, %v2355
  %v2548 = vmax.f32 %v1875, %v2356
  %v2549 = vmax.f32 %v1876, %v2357
  %v2550 = vmax.f32 %v1877, %v2358
  %v2551 = vmax.f32 %v1878, %v2359
  %v2552 = vmax.f32 %v1879, %v2360
  %v2553 = vmax.f32 %v1880, %v2361
  %v2554 = vmax.f32 %v1881, %v2362
  %v2555 = vmax.f32 %v1882, %v2363
  %v2556 = vmax.f32 %v1883, %v2364
  %v2557 = vmax.f32 %v1884, %v2365
  %v2558 = vmax.f32 %v1885, %v2366
  %v2559 = vmax.f32 %v1886, %v2367
  %v2560 = vmax.f32 %v1887, %v2368
  %v2561 = vmax.f32 %v1888, %v2369
  %v2562 = vmax.f32 %v1889, %v2370
  %v2563 = vmax.f32 %v1890, %v2371
  %v2564 = vmax.f32 %v1891, %v2372
  %v2565 = vmax.f32 %v1892, %v2373
  %v2566 = vmax.f32 %v1893, %v2374
  %v2567 = vmax.f32 %v1894, %v2375
  %v2568 = vmax.f32 %v1895, %v2376
  %v2569 = vmax.f32 %v1896, %v2377
  %v2570 = vmax.f32 %v1897, %v2378
  %v2571 = vmax.f32 %v1898, %v2379
  %v2572 = vmax.f32 %v1899, %v2380
  %v2573 = vmax.f32 %v1900, %v2381
  %v2574 = vmax.f32 %v1901, %v2382
  %v2575 = vmax.f32 %v1902, %v2383
  %v2576 = vmax.f32 %v1903, %v2384
  %v2577 = vmax.f32 %v1904, %v2385
  %v2578 = vmax.f32 %v1905, %v2386
  %v2579 = vmax.f32 %v1906, %v2387
  %v2580 = vmax.f32 %v1907, %v2388
  %v2581 = vmax.f32 %v1908, %v2389
  %v2582 = vmax.f32 %v1909, %v2390
  %v2583 = vmax.f32 %v1910, %v2391
  %v2584 = vmax.f32 %v1911, %v2392
  %v2585 = vmax.f32 %v1912, %v2393
  %v2586 = vmax.f32 %v1913, %v2394
  %v2587 = vmax.f32 %v1914, %v2395
  %v2588 = vmax.f32 %v1915, %v2396
  %v2589 = vmax.f32 %v1916, %v2397
  %v2590 = vmax.f32 %v1917, %v2398
  %v2591 = vmax.f32 %v1918, %v2399
  %v2592 = vmax.f32 %v1919, %v2400
  %v2593 = vmax.f32 %v1920, %v2401
  %v2594 = vmax.f32 %v1921, %v2402
  %v2595 = vmax.f32 %v1922, %v2403
  %v2596 = vmax.f32 %v1923, %v2404
  %v2597 = vmax.f32 %v1924, %v2405
  %v2598 = vmax.f32 %v1925, %v2406
  %v2599 = vmax.f32 %v1926, %v2407
  %v2600 = vmax.f32 %v1927, %v2408
  %v2601 = vmax.f32 %v1928, %v2409
  %v2602 = vmax.f32 %v1929, %v2410
  %v2603 = vmax.f32 %v1930, %v2411
  %v2604 = vmax.f32 %v1931, %v2412
  %v2605 = vmax.f32 %v1932, %v2413
  %v2606 = vmax.f32 %v1933, %v2414
  %v2607 = vmax.f32 %v1934, %v2415
  %v2608 = vmax.f32 %v1935, %v2416
  %v2609 = vmax.f32 %v1936, %v2417
  %v2610 = vmax.f32 %v1937, %v2418
  %v2611 = vmax.f32 %v1938, %v2419
  %v2612 = vmax.f32 %v1939, %v2420
  %v2613 = vmax.f32 %v1940, %v2421
  %v2614 = vmax.f32 %v1941, %v2422
  %v2615 = vmax.f32 %v1942, %v2423
  %v2616 = vmax.f32 %v1943, %v2424
  %v2617 = vmax.f32 %v1944, %v2425
  %v2618 = vmax.f32 %v1945, %v2426
  %v2619 = vmax.f32 %v1946, %v2427
  %v2620 = vmax.f32 %v1947, %v2428
  %v2621 = vmax.f32 %v1948, %v2429
  %v2622 = vmax.f32 %v1949, %v2430
  %v2623 = vmax.f32 %v1950, %v2431
  %v2624 = vmax.f32 %v1951, %v2432
  %v2625 = vmax.f32 %v1952, %v2433
  %v2626 = vmax.f32 %v1953, %v2434
  %v2627 = vmax.f32 %v2531, 0.0
  %v2628 = vmax.f32 %v2532, 0.0
  %v2629 = vmax.f32 %v2533, 0.0
  %v2630 = vmax.f32 %v2534, 0.0
  %v2631 = vmax.f32 %v2535, 0.0
  %v2632 = vmax.f32 %v2536, 0.0
  %v2633 = vmax.f32 %v2537, 0.0
  %v2634 = vmax.f32 %v2538, 0.0
  %v2635 = vmax.f32 %v2539, 0.0
  %v2636 = vmax.f32 %v2540, 0.0
  %v2637 = vmax.f32 %v2541, 0.0
  %v2638 = vmax.f32 %v2542, 0.0
  %v2639 = vmax.f32 %v2543, 0.0
  %v2640 = vmax.f32 %v2544, 0.0
  %v2641 = vmax.f32 %v2545, 0.0
  %v2642 = vmax.f32 %v2546, 0.0
  %v2643 = vmax.f32 %v2547, 0.0
  %v2644 = vmax.f32 %v2548, 0.0
  %v2645 = vmax.f32 %v2549, 0.0
  %v2646 = vmax.f32 %v2550, 0.0
  %v2647 = vmax.f32 %v2551, 0.0
  %v2648 = vmax.f32 %v2552, 0.0
  %v2649 = vmax.f32 %v2553, 0.0
  %v2650 = vmax.f32 %v2554, 0.0
  %v2651 = vmax.f32 %v2555, 0.0
  %v2652 = vmax.f32 %v2556, 0.0
  %v2653 = vmax.f32 %v2557, 0.0
  %v2654 = vmax.f32 %v2558, 0.0
  %v2655 = vmax.f32 %v2559, 0.0
  %v2656 = vmax.f32 %v2560, 0.0
  %v2657 = vmax.f32 %v2561, 0.0
  %v2658 = vmax.f32 %v2562, 0.0
  %v2659 = vmax.f32 %v2563, 0.0
  %v2660 = vmax.f32 %v2564, 0.0
  %v2661 = vmax.f32 %v2565, 0.0
  %v2662 = vmax.f32 %v2566, 0.0
  %v2663 = vmax.f32 %v2567, 0.0
  %v2664 = vmax.f32 %v2568, 0.0
  %v2665 = vmax.f32 %v2569, 0.0
  %v2666 = vmax.f32 %v2570, 0.0
  %v2667 = vmax.f32 %v2571, 0.0
  %v2668 = vmax.f32 %v2572, 0.0
  %v2669 = vmax.f32 %v2573, 0.0
  %v2670 = vmax.f32 %v2574, 0.0
  %v2671 = vmax.f32 %v2575, 0.0
  %v2672 = vmax.f32 %v2576, 0.0
  %v2673 = vmax.f32 %v2577, 0.0
  %v2674 = vmax.f32 %v2578, 0.0
  %v2675 = vmax.f32 %v2579, 0.0
  %v2676 = vmax.f32 %v2580, 0.0
  %v2677 = vmax.f32 %v2581, 0.0
  %v2678 = vmax.f32 %v2582, 0.0
  %v2679 = vmax.f32 %v2583, 0.0
  %v2680 = vmax.f32 %v2584, 0.0
  %v2681 = vmax.f32 %v2585, 0.0
  %v2682 = vmax.f32 %v2586, 0.0
  %v2683 = vmax.f32 %v2587, 0.0
  %v2684 = vmax.f32 %v2588, 0.0
  %v2685 = vmax.f32 %v2589, 0.0
  %v2686 = vmax.f32 %v2590, 0.0
  %v2687 = vmax.f32 %v2591, 0.0
  %v2688 = vmax.f32 %v2592, 0.0
  %v2689 = vmax.f32 %v2593, 0.0
  %v2690 = vmax.f32 %v2594, 0.0
  %v2691 = vmax.f32 %v2595, 0.0
  %v2692 = vmax.f32 %v2596, 0.0
  %v2693 = vmax.f32 %v2597, 0.0
  %v2694 = vmax.f32 %v2598, 0.0
  %v2695 = vmax.f32 %v2599, 0.0
  %v2696 = vmax.f32 %v2600, 0.0
  %v2697 = vmax.f32 %v2601, 0.0
  %v2698 = vmax.f32 %v2602, 0.0
  %v2699 = vmax.f32 %v2603, 0.0
  %v2700 = vmax.f32 %v2604, 0.0
  %v2701 = vmax.f32 %v2605, 0.0
  %v2702 = vmax.f32 %v2606, 0.0
  %v2703 = vmax.f32 %v2607, 0.0
  %v2704 = vmax.f32 %v2608, 0.0
  %v2705 = vmax.f32 %v2609, 0.0
  %v2706 = vmax.f32 %v2610, 0.0
  %v2707 = vmax.f32 %v2611, 0.0
  %v2708 = vmax.f32 %v2612, 0.0
  %v2709 = vmax.f32 %v2613, 0.0
  %v2710 = vmax.f32 %v2614, 0.0
  %v2711 = vmax.f32 %v2615, 0.0
  %v2712 = vmax.f32 %v2616, 0.0
  %v2713 = vmax.f32 %v2617, 0.0
  %v2714 = vmax.f32 %v2618, 0.0
  %v2715 = vmax.f32 %v2619, 0.0
  %v2716 = vmax.f32 %v2620, 0.0
  %v2717 = vmax.f32 %v2621, 0.0
  %v2718 = vmax.f32 %v2622, 0.0
  %v2719 = vmax.f32 %v2623, 0.0
  %v2720 = vmax.f32 %v2624, 0.0
  %v2721 = vmax.f32 %v2625, 0.0
  %v2722 = vmax.f32 %v2626, 0.0
  %v2723 = vpack.c.bf16 %v2627, %v2627
  %v2724 = vpack.c.bf16 %v2628, %v2628
  %v2725 = vpack.c.bf16 %v2629, %v2629
  %v2726 = vpack.c.bf16 %v2630, %v2630
  %v2727 = vpack.c.bf16 %v2631, %v2631
  %v2728 = vpack.c.bf16 %v2632, %v2632
  %v2729 = vpack.c.bf16 %v2633, %v2633
  %v2730 = vpack.c.bf16 %v2634, %v2634
  %v2731 = vpack.c.bf16 %v2635, %v2635
  %v2732 = vpack.c.bf16 %v2636, %v2636
  %v2733 = vpack.c.bf16 %v2637, %v2637
  %v2734 = vpack.c.bf16 %v2638, %v2638
  %v2735 = vpack.c.bf16 %v2639, %v2639
  %v2736 = vpack.c.bf16 %v2640, %v2640
  %v2737 = vpack.c.bf16 %v2641, %v2641
  %v2738 = vpack.c.bf16 %v2642, %v2642
  %v2739 = vpack.c.bf16 %v2643, %v2643
  %v2740 = vpack.c.bf16 %v2644, %v2644
  %v2741 = vpack.c.bf16 %v2645, %v2645
  %v2742 = vpack.c.bf16 %v2646, %v2646
  %v2743 = vpack.c.bf16 %v2647, %v2647
  %v2744 = vpack.c.bf16 %v2648, %v2648
  %v2745 = vpack.c.bf16 %v2649, %v2649
  %v2746 = vpack.c.bf16 %v2650, %v2650
  %v2747 = vpack.c.bf16 %v2651, %v2651
  %v2748 = vpack.c.bf16 %v2652, %v2652
  %v2749 = vpack.c.bf16 %v2653, %v2653
  %v2750 = vpack.c.bf16 %v2654, %v2654
  %v2751 = vpack.c.bf16 %v2655, %v2655
  %v2752 = vpack.c.bf16 %v2656, %v2656
  %v2753 = vpack.c.bf16 %v2657, %v2657
  %v2754 = vpack.c.bf16 %v2658, %v2658
  %v2755 = vpack.c.bf16 %v2659, %v2659
  %v2756 = vpack.c.bf16 %v2660, %v2660
  %v2757 = vpack.c.bf16 %v2661, %v2661
  %v2758 = vpack.c.bf16 %v2662, %v2662
  %v2759 = vpack.c.bf16 %v2663, %v2663
  %v2760 = vpack.c.bf16 %v2664, %v2664
  %v2761 = vpack.c.bf16 %v2665, %v2665
  %v2762 = vpack.c.bf16 %v2666, %v2666
  %v2763 = vpack.c.bf16 %v2667, %v2667
  %v2764 = vpack.c.bf16 %v2668, %v2668
  %v2765 = vpack.c.bf16 %v2669, %v2669
  %v2766 = vpack.c.bf16 %v2670, %v2670
  %v2767 = vpack.c.bf16 %v2671, %v2671
  %v2768 = vpack.c.bf16 %v2672, %v2672
  %v2769 = vpack.c.bf16 %v2673, %v2673
  %v2770 = vpack.c.bf16 %v2674, %v2674
  %v2771 = vpack.c.bf16 %v2675, %v2675
  %v2772 = vpack.c.bf16 %v2676, %v2676
  %v2773 = vpack.c.bf16 %v2677, %v2677
  %v2774 = vpack.c.bf16 %v2678, %v2678
  %v2775 = vpack.c.bf16 %v2679, %v2679
  %v2776 = vpack.c.bf16 %v2680, %v2680
  %v2777 = vpack.c.bf16 %v2681, %v2681
  %v2778 = vpack.c.bf16 %v2682, %v2682
  %v2779 = vpack.c.bf16 %v2683, %v2683
  %v2780 = vpack.c.bf16 %v2684, %v2684
  %v2781 = vpack.c.bf16 %v2685, %v2685
  %v2782 = vpack.c.bf16 %v2686, %v2686
  %v2783 = vpack.c.bf16 %v2687, %v2687
  %v2784 = vpack.c.bf16 %v2688, %v2688
  %v2785 = vpack.c.bf16 %v2689, %v2689
  %v2786 = vpack.c.bf16 %v2690, %v2690
  %v2787 = vpack.c.bf16 %v2691, %v2691
  %v2788 = vpack.c.bf16 %v2692, %v2692
  %v2789 = vpack.c.bf16 %v2693, %v2693
  %v2790 = vpack.c.bf16 %v2694, %v2694
  %v2791 = vpack.c.bf16 %v2695, %v2695
  %v2792 = vpack.c.bf16 %v2696, %v2696
  %v2793 = vpack.c.bf16 %v2697, %v2697
  %v2794 = vpack.c.bf16 %v2698, %v2698
  %v2795 = vpack.c.bf16 %v2699, %v2699
  %v2796 = vpack.c.bf16 %v2700, %v2700
  %v2797 = vpack.c.bf16 %v2701, %v2701
  %v2798 = vpack.c.bf16 %v2702, %v2702
  %v2799 = vpack.c.bf16 %v2703, %v2703
  %v2800 = vpack.c.bf16 %v2704, %v2704
  %v2801 = vpack.c.bf16 %v2705, %v2705
  %v2802 = vpack.c.bf16 %v2706, %v2706
  %v2803 = vpack.c.bf16 %v2707, %v2707
  %v2804 = vpack.c.bf16 %v2708, %v2708
  %v2805 = vpack.c.bf16 %v2709, %v2709
  %v2806 = vpack.c.bf16 %v2710, %v2710
  %v2807 = vpack.c.bf16 %v2711, %v2711
  %v2808 = vpack.c.bf16 %v2712, %v2712
  %v2809 = vpack.c.bf16 %v2713, %v2713
  %v2810 = vpack.c.bf16 %v2714, %v2714
  %v2811 = vpack.c.bf16 %v2715, %v2715
  %v2812 = vpack.c.bf16 %v2716, %v2716
  %v2813 = vpack.c.bf16 %v2717, %v2717
  %v2814 = vpack.c.bf16 %v2718, %v2718
  %v2815 = vpack.c.bf16 %v2719, %v2719
  %v2816 = vpack.c.bf16 %v2720, %v2720
  %v2817 = vpack.c.bf16 %v2721, %v2721
  %v2818 = vpack.c.bf16 %v2722, %v2722
  %v2883 = vunpack.c.l.b16 %v2723
  %v2884 = vunpack.c.l.b16 %v2724
  %v2885 = vunpack.c.l.b16 %v2725
  %v2886 = vunpack.c.l.b16 %v2726
  %v2887 = vunpack.c.l.b16 %v2727
  %v2888 = vunpack.c.l.b16 %v2728
  %v2889 = vunpack.c.l.b16 %v2729
  %v2890 = vunpack.c.l.b16 %v2730
  %v2891 = vunpack.c.l.b16 %v2735
  %v2892 = vunpack.c.l.b16 %v2736
  %v2893 = vunpack.c.l.b16 %v2737
  %v2894 = vunpack.c.l.b16 %v2738
  %v2895 = vunpack.c.l.b16 %v2739
  %v2896 = vunpack.c.l.b16 %v2740
  %v2897 = vunpack.c.l.b16 %v2741
  %v2898 = vunpack.c.l.b16 %v2742
  %v2899 = vunpack.c.l.b16 %v2747
  %v2900 = vunpack.c.l.b16 %v2748
  %v2901 = vunpack.c.l.b16 %v2749
  %v2902 = vunpack.c.l.b16 %v2750
  %v2903 = vunpack.c.l.b16 %v2751
  %v2904 = vunpack.c.l.b16 %v2752
  %v2905 = vunpack.c.l.b16 %v2753
  %v2906 = vunpack.c.l.b16 %v2754
  %v2907 = vunpack.c.l.b16 %v2759
  %v2908 = vunpack.c.l.b16 %v2760
  %v2909 = vunpack.c.l.b16 %v2761
  %v2910 = vunpack.c.l.b16 %v2762
  %v2911 = vunpack.c.l.b16 %v2763
  %v2912 = vunpack.c.l.b16 %v2764
  %v2913 = vunpack.c.l.b16 %v2765
  %v2914 = vunpack.c.l.b16 %v2766
  %v2915 = vunpack.c.l.b16 %v2771
  %v2916 = vunpack.c.l.b16 %v2772
  %v2917 = vunpack.c.l.b16 %v2773
  %v2918 = vunpack.c.l.b16 %v2774
  %v2919 = vunpack.c.l.b16 %v2775
  %v2920 = vunpack.c.l.b16 %v2776
  %v2921 = vunpack.c.l.b16 %v2777
  %v2922 = vunpack.c.l.b16 %v2778
  %v2923 = vunpack.c.l.b16 %v2783
  %v2924 = vunpack.c.l.b16 %v2784
  %v2925 = vunpack.c.l.b16 %v2785
  %v2926 = vunpack.c.l.b16 %v2786
  %v2927 = vunpack.c.l.b16 %v2787
  %v2928 = vunpack.c.l.b16 %v2788
  %v2929 = vunpack.c.l.b16 %v2789
  %v2930 = vunpack.c.l.b16 %v2790
  %v2931 = vunpack.c.l.b16 %v2795
  %v2932 = vunpack.c.l.b16 %v2796
  %v2933 = vunpack.c.l.b16 %v2797
  %v2934 = vunpack.c.l.b16 %v2798
  %v2935 = vunpack.c.l.b16 %v2799
  %v2936 = vunpack.c.l.b16 %v2800
  %v2937 = vunpack.c.l.b16 %v2801
  %v2938 = vunpack.c.l.b16 %v2802
  %v2939 = vunpack.c.l.b16 %v2807
  %v2940 = vunpack.c.l.b16 %v2808
  %v2941 = vunpack.c.l.b16 %v2809
  %v2942 = vunpack.c.l.b16 %v2810
  %v2943 = vunpack.c.l.b16 %v2811
  %v2944 = vunpack.c.l.b16 %v2812
  %v2945 = vunpack.c.l.b16 %v2813
  %v2946 = vunpack.c.l.b16 %v2814
  %v2947 = vrot.slane %v2884, 7
  %vm2948 = vcmask 1041409
  %v2949 = vsel %vm2948, %v2947, %v2883
  %v2950 = vrot.slane %v2885, 6
  %vm2951 = vcmask 1042434
  %v2952 = vsel %vm2951, %v2950, %v2949
  %v2953 = vrot.slane %v2886, 5
  %vm2954 = vcmask 1043459
  %v2955 = vsel %vm2954, %v2953, %v2952
  %v2956 = vrot.slane %v2887, 4
  %vm2957 = vcmask 1044484
  %v2958 = vsel %vm2957, %v2956, %v2955
  %v2959 = vrot.slane %v2888, 3
  %vm2960 = vcmask 1045509
  %v2961 = vsel %vm2960, %v2959, %v2958
  %v2962 = vrot.slane %v2889, 2
  %vm2963 = vcmask 1046534
  %v2964 = vsel %vm2963, %v2962, %v2961
  %v2965 = vrot.slane %v2890, 1
  %vm2966 = vcmask 1047559
  %v2967 = vsel %vm2966, %v2965, %v2964
  %v2968 = vrot.slane %v2892, 7
  %v2969 = vsel %vm2948, %v2968, %v2891
  %v2970 = vrot.slane %v2893, 6
  %v2971 = vsel %vm2951, %v2970, %v2969
  %v2972 = vrot.slane %v2894, 5
  %v2973 = vsel %vm2954, %v2972, %v2971
  %v2974 = vrot.slane %v2895, 4
  %v2975 = vsel %vm2957, %v2974, %v2973
  %v2976 = vrot.slane %v2896, 3
  %v2977 = vsel %vm2960, %v2976, %v2975
  %v2978 = vrot.slane %v2897, 2
  %v2979 = vsel %vm2963, %v2978, %v2977
  %v2980 = vrot.slane %v2898, 1
  %v2981 = vsel %vm2966, %v2980, %v2979
  %v2982 = vrot.slane %v2900, 7
  %v2983 = vsel %vm2948, %v2982, %v2899
  %v2984 = vrot.slane %v2901, 6
  %v2985 = vsel %vm2951, %v2984, %v2983
  %v2986 = vrot.slane %v2902, 5
  %v2987 = vsel %vm2954, %v2986, %v2985
  %v2988 = vrot.slane %v2903, 4
  %v2989 = vsel %vm2957, %v2988, %v2987
  %v2990 = vrot.slane %v2904, 3
  %v2991 = vsel %vm2960, %v2990, %v2989
  %v2992 = vrot.slane %v2905, 2
  %v2993 = vsel %vm2963, %v2992, %v2991
  %v2994 = vrot.slane %v2906, 1
  %v2995 = vsel %vm2966, %v2994, %v2993
  %v2996 = vrot.slane %v2908, 7
  %v2997 = vsel %vm2948, %v2996, %v2907
  %v2998 = vrot.slane %v2909, 6
  %v2999 = vsel %vm2951, %v2998, %v2997
  %v3000 = vrot.slane %v2910, 5
  %v3001 = vsel %vm2954, %v3000, %v2999
  %v3002 = vrot.slane %v2911, 4
  %v3003 = vsel %vm2957, %v3002, %v3001
  %v3004 = vrot.slane %v2912, 3
  %v3005 = vsel %vm2960, %v3004, %v3003
  %v3006 = vrot.slane %v2913, 2
  %v3007 = vsel %vm2963, %v3006, %v3005
  %v3008 = vrot.slane %v2914, 1
  %v3009 = vsel %vm2966, %v3008, %v3007
  %v3010 = vrot.slane %v2916, 7
  %v3011 = vsel %vm2948, %v3010, %v2915
  %v3012 = vrot.slane %v2917, 6
  %v3013 = vsel %vm2951, %v3012, %v3011
  %v3014 = vrot.slane %v2918, 5
  %v3015 = vsel %vm2954, %v3014, %v3013
  %v3016 = vrot.slane %v2919, 4
  %v3017 = vsel %vm2957, %v3016, %v3015
  %v3018 = vrot.slane %v2920, 3
  %v3019 = vsel %vm2960, %v3018, %v3017
  %v3020 = vrot.slane %v2921, 2
  %v3021 = vsel %vm2963, %v3020, %v3019
  %v3022 = vrot.slane %v2922, 1
  %v3023 = vsel %vm2966, %v3022, %v3021
  %v3024 = vrot.slane %v2924, 7
  %v3025 = vsel %vm2948, %v3024, %v2923
  %v3026 = vrot.slane %v2925, 6
  %v3027 = vsel %vm2951, %v3026, %v3025
  %v3028 = vrot.slane %v2926, 5
  %v3029 = vsel %vm2954, %v3028, %v3027
  %v3030 = vrot.slane %v2927, 4
  %v3031 = vsel %vm2957, %v3030, %v3029
  %v3032 = vrot.slane %v2928, 3
  %v3033 = vsel %vm2960, %v3032, %v3031
  %v3034 = vrot.slane %v2929, 2
  %v3035 = vsel %vm2963, %v3034, %v3033
  %v3036 = vrot.slane %v2930, 1
  %v3037 = vsel %vm2966, %v3036, %v3035
  %v3038 = vrot.slane %v2932, 7
  %v3039 = vsel %vm2948, %v3038, %v2931
  %v3040 = vrot.slane %v2933, 6
  %v3041 = vsel %vm2951, %v3040, %v3039
  %v3042 = vrot.slane %v2934, 5
  %v3043 = vsel %vm2954, %v3042, %v3041
  %v3044 = vrot.slane %v2935, 4
  %v3045 = vsel %vm2957, %v3044, %v3043
  %v3046 = vrot.slane %v2936, 3
  %v3047 = vsel %vm2960, %v3046, %v3045
  %v3048 = vrot.slane %v2937, 2
  %v3049 = vsel %vm2963, %v3048, %v3047
  %v3050 = vrot.slane %v2938, 1
  %v3051 = vsel %vm2966, %v3050, %v3049
  %v3052 = vrot.slane %v2940, 7
  %v3053 = vsel %vm2948, %v3052, %v2939
  %v3054 = vrot.slane %v2941, 6
  %v3055 = vsel %vm2951, %v3054, %v3053
  %v3056 = vrot.slane %v2942, 5
  %v3057 = vsel %vm2954, %v3056, %v3055
  %v3058 = vrot.slane %v2943, 4
  %v3059 = vsel %vm2957, %v3058, %v3057
  %v3060 = vrot.slane %v2944, 3
  %v3061 = vsel %vm2960, %v3060, %v3059
  %v3062 = vrot.slane %v2945, 2
  %v3063 = vsel %vm2963, %v3062, %v3061
  %v3064 = vrot.slane %v2946, 1
  %v3065 = vsel %vm2966, %v3064, %v3063
  %v3066 = vpack.c.b16 %v2967, %v2967
  %v3067 = vpack.c.b16 %v2981, %v2981
  %v3068 = vpack.c.b16 %v2995, %v2995
  %v3069 = vpack.c.b16 %v3009, %v3009
  %v3070 = vpack.c.b16 %v3023, %v3023
  %v3071 = vpack.c.b16 %v3037, %v3037
  %v3072 = vpack.c.b16 %v3051, %v3051
  %v3073 = vpack.c.b16 %v3065, %v3065
  %v3082 = vunpack.c.l.b16 %v2731
  %v3083 = vunpack.c.l.b16 %v2743
  %v3084 = vunpack.c.l.b16 %v2755
  %v3085 = vunpack.c.l.b16 %v2767
  %v3086 = vunpack.c.l.b16 %v2779
  %v3087 = vunpack.c.l.b16 %v2791
  %v3088 = vunpack.c.l.b16 %v2803
  %v3089 = vunpack.c.l.b16 %v2815
  %v3090 = vrot.slane %v2885, 7
  %v3091 = vsel %vm2948, %v3090, %v2884
  %v3092 = vrot.slane %v2886, 6
  %v3093 = vsel %vm2951, %v3092, %v3091
  %v3094 = vrot.slane %v2887, 5
  %v3095 = vsel %vm2954, %v3094, %v3093
  %v3096 = vrot.slane %v2888, 4
  %v3097 = vsel %vm2957, %v3096, %v3095
  %v3098 = vrot.slane %v2889, 3
  %v3099 = vsel %vm2960, %v3098, %v3097
  %v3100 = vrot.slane %v2890, 2
  %v3101 = vsel %vm2963, %v3100, %v3099
  %v3102 = vrot.slane %v3082, 1
  %v3103 = vsel %vm2966, %v3102, %v3101
  %v3104 = vrot.slane %v2893, 7
  %v3105 = vsel %vm2948, %v3104, %v2892
  %v3106 = vrot.slane %v2894, 6
  %v3107 = vsel %vm2951, %v3106, %v3105
  %v3108 = vrot.slane %v2895, 5
  %v3109 = vsel %vm2954, %v3108, %v3107
  %v3110 = vrot.slane %v2896, 4
  %v3111 = vsel %vm2957, %v3110, %v3109
  %v3112 = vrot.slane %v2897, 3
  %v3113 = vsel %vm2960, %v3112, %v3111
  %v3114 = vrot.slane %v2898, 2
  %v3115 = vsel %vm2963, %v3114, %v3113
  %v3116 = vrot.slane %v3083, 1
  %v3117 = vsel %vm2966, %v3116, %v3115
  %v3118 = vrot.slane %v2901, 7
  %v3119 = vsel %vm2948, %v3118, %v2900
  %v3120 = vrot.slane %v2902, 6
  %v3121 = vsel %vm2951, %v3120, %v3119
  %v3122 = vrot.slane %v2903, 5
  %v3123 = vsel %vm2954, %v3122, %v3121
  %v3124 = vrot.slane %v2904, 4
  %v3125 = vsel %vm2957, %v3124, %v3123
  %v3126 = vrot.slane %v2905, 3
  %v3127 = vsel %vm2960, %v3126, %v3125
  %v3128 = vrot.slane %v2906, 2
  %v3129 = vsel %vm2963, %v3128, %v3127
  %v3130 = vrot.slane %v3084, 1
  %v3131 = vsel %vm2966, %v3130, %v3129
  %v3132 = vrot.slane %v2909, 7
  %v3133 = vsel %vm2948, %v3132, %v2908
  %v3134 = vrot.slane %v2910, 6
  %v3135 = vsel %vm2951, %v3134, %v3133
  %v3136 = vrot.slane %v2911, 5
  %v3137 = vsel %vm2954, %v3136, %v3135
  %v3138 = vrot.slane %v2912, 4
  %v3139 = vsel %vm2957, %v3138, %v3137
  %v3140 = vrot.slane %v2913, 3
  %v3141 = vsel %vm2960, %v3140, %v3139
  %v3142 = vrot.slane %v2914, 2
  %v3143 = vsel %vm2963, %v3142, %v3141
  %v3144 = vrot.slane %v3085, 1
  %v3145 = vsel %vm2966, %v3144, %v3143
  %v3146 = vrot.slane %v2917, 7
  %v3147 = vsel %vm2948, %v3146, %v2916
  %v3148 = vrot.slane %v2918, 6
  %v3149 = vsel %vm2951, %v3148, %v3147
  %v3150 = vrot.slane %v2919, 5
  %v3151 = vsel %vm2954, %v3150, %v3149
  %v3152 = vrot.slane %v2920, 4
  %v3153 = vsel %vm2957, %v3152, %v3151
  %v3154 = vrot.slane %v2921, 3
  %v3155 = vsel %vm2960, %v3154, %v3153
  %v3156 = vrot.slane %v2922, 2
  %v3157 = vsel %vm2963, %v3156, %v3155
  %v3158 = vrot.slane %v3086, 1
  %v3159 = vsel %vm2966, %v3158, %v3157
  %v3160 = vrot.slane %v2925, 7
  %v3161 = vsel %vm2948, %v3160, %v2924
  %v3162 = vrot.slane %v2926, 6
  %v3163 = vsel %vm2951, %v3162, %v3161
  %v3164 = vrot.slane %v2927, 5
  %v3165 = vsel %vm2954, %v3164, %v3163
  %v3166 = vrot.slane %v2928, 4
  %v3167 = vsel %vm2957, %v3166, %v3165
  %v3168 = vrot.slane %v2929, 3
  %v3169 = vsel %vm2960, %v3168, %v3167
  %v3170 = vrot.slane %v2930, 2
  %v3171 = vsel %vm2963, %v3170, %v3169
  %v3172 = vrot.slane %v3087, 1
  %v3173 = vsel %vm2966, %v3172, %v3171
  %v3174 = vrot.slane %v2933, 7
  %v3175 = vsel %vm2948, %v3174, %v2932
  %v3176 = vrot.slane %v2934, 6
  %v3177 = vsel %vm2951, %v3176, %v3175
  %v3178 = vrot.slane %v2935, 5
  %v3179 = vsel %vm2954, %v3178, %v3177
  %v3180 = vrot.slane %v2936, 4
  %v3181 = vsel %vm2957, %v3180, %v3179
  %v3182 = vrot.slane %v2937, 3
  %v3183 = vsel %vm2960, %v3182, %v3181
  %v3184 = vrot.slane %v2938, 2
  %v3185 = vsel %vm2963, %v3184, %v3183
  %v3186 = vrot.slane %v3088, 1
  %v3187 = vsel %vm2966, %v3186, %v3185
  %v3188 = vrot.slane %v2941, 7
  %v3189 = vsel %vm2948, %v3188, %v2940
  %v3190 = vrot.slane %v2942, 6
  %v3191 = vsel %vm2951, %v3190, %v3189
  %v3192 = vrot.slane %v2943, 5
  %v3193 = vsel %vm2954, %v3192, %v3191
  %v3194 = vrot.slane %v2944, 4
  %v3195 = vsel %vm2957, %v3194, %v3193
  %v3196 = vrot.slane %v2945, 3
  %v3197 = vsel %vm2960, %v3196, %v3195
  %v3198 = vrot.slane %v2946, 2
  %v3199 = vsel %vm2963, %v3198, %v3197
  %v3200 = vrot.slane %v3089, 1
  %v3201 = vsel %vm2966, %v3200, %v3199
  %v3202 = vpack.c.b16 %v3103, %v3103
  %v3203 = vpack.c.b16 %v3117, %v3117
  %v3204 = vpack.c.b16 %v3131, %v3131
  %v3205 = vpack.c.b16 %v3145, %v3145
  %v3206 = vpack.c.b16 %v3159, %v3159
  %v3207 = vpack.c.b16 %v3173, %v3173
  %v3208 = vpack.c.b16 %v3187, %v3187
  %v3209 = vpack.c.b16 %v3201, %v3201
  %3210 = vrot.lane.b32.xlu0 %v3202, 120
  %v3211 = vpop.permute.xlu0 %3210
  %3212 = vrot.lane.b32.xlu0 %v3203, 120
  %v3213 = vpop.permute.xlu0 %3212
  %3214 = vrot.lane.b32.xlu0 %v3204, 120
  %v3215 = vpop.permute.xlu0 %3214
  %3216 = vrot.lane.b32.xlu0 %v3205, 120
  %v3217 = vpop.permute.xlu0 %3216
  %3218 = vrot.lane.b32.xlu0 %v3206, 120
  %v3219 = vpop.permute.xlu0 %3218
  %3220 = vrot.lane.b32.xlu0 %v3207, 120
  %v3221 = vpop.permute.xlu0 %3220
  %3222 = vrot.lane.b32.xlu0 %v3208, 120
  %v3223 = vpop.permute.xlu0 %3222
  %3224 = vrot.lane.b32.xlu0 %v3209, 120
  %v3225 = vpop.permute.xlu0 %3224
  %v3234 = vunpack.c.l.b16 %v2732
  %v3235 = vunpack.c.l.b16 %v2744
  %v3236 = vunpack.c.l.b16 %v2756
  %v3237 = vunpack.c.l.b16 %v2768
  %v3238 = vunpack.c.l.b16 %v2780
  %v3239 = vunpack.c.l.b16 %v2792
  %v3240 = vunpack.c.l.b16 %v2804
  %v3241 = vunpack.c.l.b16 %v2816
  %v3242 = vrot.slane %v2886, 7
  %v3243 = vsel %vm2948, %v3242, %v2885
  %v3244 = vrot.slane %v2887, 6
  %v3245 = vsel %vm2951, %v3244, %v3243
  %v3246 = vrot.slane %v2888, 5
  %v3247 = vsel %vm2954, %v3246, %v3245
  %v3248 = vrot.slane %v2889, 4
  %v3249 = vsel %vm2957, %v3248, %v3247
  %v3250 = vrot.slane %v2890, 3
  %v3251 = vsel %vm2960, %v3250, %v3249
  %v3252 = vrot.slane %v3082, 2
  %v3253 = vsel %vm2963, %v3252, %v3251
  %v3254 = vrot.slane %v3234, 1
  %v3255 = vsel %vm2966, %v3254, %v3253
  %v3256 = vrot.slane %v2894, 7
  %v3257 = vsel %vm2948, %v3256, %v2893
  %v3258 = vrot.slane %v2895, 6
  %v3259 = vsel %vm2951, %v3258, %v3257
  %v3260 = vrot.slane %v2896, 5
  %v3261 = vsel %vm2954, %v3260, %v3259
  %v3262 = vrot.slane %v2897, 4
  %v3263 = vsel %vm2957, %v3262, %v3261
  %v3264 = vrot.slane %v2898, 3
  %v3265 = vsel %vm2960, %v3264, %v3263
  %v3266 = vrot.slane %v3083, 2
  %v3267 = vsel %vm2963, %v3266, %v3265
  %v3268 = vrot.slane %v3235, 1
  %v3269 = vsel %vm2966, %v3268, %v3267
  %v3270 = vrot.slane %v2902, 7
  %v3271 = vsel %vm2948, %v3270, %v2901
  %v3272 = vrot.slane %v2903, 6
  %v3273 = vsel %vm2951, %v3272, %v3271
  %v3274 = vrot.slane %v2904, 5
  %v3275 = vsel %vm2954, %v3274, %v3273
  %v3276 = vrot.slane %v2905, 4
  %v3277 = vsel %vm2957, %v3276, %v3275
  %v3278 = vrot.slane %v2906, 3
  %v3279 = vsel %vm2960, %v3278, %v3277
  %v3280 = vrot.slane %v3084, 2
  %v3281 = vsel %vm2963, %v3280, %v3279
  %v3282 = vrot.slane %v3236, 1
  %v3283 = vsel %vm2966, %v3282, %v3281
  %v3284 = vrot.slane %v2910, 7
  %v3285 = vsel %vm2948, %v3284, %v2909
  %v3286 = vrot.slane %v2911, 6
  %v3287 = vsel %vm2951, %v3286, %v3285
  %v3288 = vrot.slane %v2912, 5
  %v3289 = vsel %vm2954, %v3288, %v3287
  %v3290 = vrot.slane %v2913, 4
  %v3291 = vsel %vm2957, %v3290, %v3289
  %v3292 = vrot.slane %v2914, 3
  %v3293 = vsel %vm2960, %v3292, %v3291
  %v3294 = vrot.slane %v3085, 2
  %v3295 = vsel %vm2963, %v3294, %v3293
  %v3296 = vrot.slane %v3237, 1
  %v3297 = vsel %vm2966, %v3296, %v3295
  %v3298 = vrot.slane %v2918, 7
  %v3299 = vsel %vm2948, %v3298, %v2917
  %v3300 = vrot.slane %v2919, 6
  %v3301 = vsel %vm2951, %v3300, %v3299
  %v3302 = vrot.slane %v2920, 5
  %v3303 = vsel %vm2954, %v3302, %v3301
  %v3304 = vrot.slane %v2921, 4
  %v3305 = vsel %vm2957, %v3304, %v3303
  %v3306 = vrot.slane %v2922, 3
  %v3307 = vsel %vm2960, %v3306, %v3305
  %v3308 = vrot.slane %v3086, 2
  %v3309 = vsel %vm2963, %v3308, %v3307
  %v3310 = vrot.slane %v3238, 1
  %v3311 = vsel %vm2966, %v3310, %v3309
  %v3312 = vrot.slane %v2926, 7
  %v3313 = vsel %vm2948, %v3312, %v2925
  %v3314 = vrot.slane %v2927, 6
  %v3315 = vsel %vm2951, %v3314, %v3313
  %v3316 = vrot.slane %v2928, 5
  %v3317 = vsel %vm2954, %v3316, %v3315
  %v3318 = vrot.slane %v2929, 4
  %v3319 = vsel %vm2957, %v3318, %v3317
  %v3320 = vrot.slane %v2930, 3
  %v3321 = vsel %vm2960, %v3320, %v3319
  %v3322 = vrot.slane %v3087, 2
  %v3323 = vsel %vm2963, %v3322, %v3321
  %v3324 = vrot.slane %v3239, 1
  %v3325 = vsel %vm2966, %v3324, %v3323
  %v3326 = vrot.slane %v2934, 7
  %v3327 = vsel %vm2948, %v3326, %v2933
  %v3328 = vrot.slane %v2935, 6
  %v3329 = vsel %vm2951, %v3328, %v3327
  %v3330 = vrot.slane %v2936, 5
  %v3331 = vsel %vm2954, %v3330, %v3329
  %v3332 = vrot.slane %v2937, 4
  %v3333 = vsel %vm2957, %v3332, %v3331
  %v3334 = vrot.slane %v2938, 3
  %v3335 = vsel %vm2960, %v3334, %v3333
  %v3336 = vrot.slane %v3088, 2
  %v3337 = vsel %vm2963, %v3336, %v3335
  %v3338 = vrot.slane %v3240, 1
  %v3339 = vsel %vm2966, %v3338, %v3337
  %v3340 = vrot.slane %v2942, 7
  %v3341 = vsel %vm2948, %v3340, %v2941
  %v3342 = vrot.slane %v2943, 6
  %v3343 = vsel %vm2951, %v3342, %v3341
  %v3344 = vrot.slane %v2944, 5
  %v3345 = vsel %vm2954, %v3344, %v3343
  %v3346 = vrot.slane %v2945, 4
  %v3347 = vsel %vm2957, %v3346, %v3345
  %v3348 = vrot.slane %v2946, 3
  %v3349 = vsel %vm2960, %v3348, %v3347
  %v3350 = vrot.slane %v3089, 2
  %v3351 = vsel %vm2963, %v3350, %v3349
  %v3352 = vrot.slane %v3241, 1
  %v3353 = vsel %vm2966, %v3352, %v3351
  %v3354 = vpack.c.b16 %v3255, %v3255
  %v3355 = vpack.c.b16 %v3269, %v3269
  %v3356 = vpack.c.b16 %v3283, %v3283
  %v3357 = vpack.c.b16 %v3297, %v3297
  %v3358 = vpack.c.b16 %v3311, %v3311
  %v3359 = vpack.c.b16 %v3325, %v3325
  %v3360 = vpack.c.b16 %v3339, %v3339
  %v3361 = vpack.c.b16 %v3353, %v3353
  %3362 = vrot.lane.b32.xlu0 %v3354, 112
  %v3363 = vpop.permute.xlu0 %3362
  %3364 = vrot.lane.b32.xlu0 %v3355, 112
  %v3365 = vpop.permute.xlu0 %3364
  %3366 = vrot.lane.b32.xlu0 %v3356, 112
  %v3367 = vpop.permute.xlu0 %3366
  %3368 = vrot.lane.b32.xlu0 %v3357, 112
  %v3369 = vpop.permute.xlu0 %3368
  %3370 = vrot.lane.b32.xlu0 %v3358, 112
  %v3371 = vpop.permute.xlu0 %3370
  %3372 = vrot.lane.b32.xlu0 %v3359, 112
  %v3373 = vpop.permute.xlu0 %3372
  %3374 = vrot.lane.b32.xlu0 %v3360, 112
  %v3375 = vpop.permute.xlu0 %3374
  %3376 = vrot.lane.b32.xlu0 %v3361, 112
  %v3377 = vpop.permute.xlu0 %3376
  %v3386 = vunpack.c.l.b16 %v2733
  %v3387 = vunpack.c.l.b16 %v2745
  %v3388 = vunpack.c.l.b16 %v2757
  %v3389 = vunpack.c.l.b16 %v2769
  %v3390 = vunpack.c.l.b16 %v2781
  %v3391 = vunpack.c.l.b16 %v2793
  %v3392 = vunpack.c.l.b16 %v2805
  %v3393 = vunpack.c.l.b16 %v2817
  %v3394 = vrot.slane %v2887, 7
  %v3395 = vsel %vm2948, %v3394, %v2886
  %v3396 = vrot.slane %v2888, 6
  %v3397 = vsel %vm2951, %v3396, %v3395
  %v3398 = vrot.slane %v2889, 5
  %v3399 = vsel %vm2954, %v3398, %v3397
  %v3400 = vrot.slane %v2890, 4
  %v3401 = vsel %vm2957, %v3400, %v3399
  %v3402 = vrot.slane %v3082, 3
  %v3403 = vsel %vm2960, %v3402, %v3401
  %v3404 = vrot.slane %v3234, 2
  %v3405 = vsel %vm2963, %v3404, %v3403
  %v3406 = vrot.slane %v3386, 1
  %v3407 = vsel %vm2966, %v3406, %v3405
  %v3408 = vrot.slane %v2895, 7
  %v3409 = vsel %vm2948, %v3408, %v2894
  %v3410 = vrot.slane %v2896, 6
  %v3411 = vsel %vm2951, %v3410, %v3409
  %v3412 = vrot.slane %v2897, 5
  %v3413 = vsel %vm2954, %v3412, %v3411
  %v3414 = vrot.slane %v2898, 4
  %v3415 = vsel %vm2957, %v3414, %v3413
  %v3416 = vrot.slane %v3083, 3
  %v3417 = vsel %vm2960, %v3416, %v3415
  %v3418 = vrot.slane %v3235, 2
  %v3419 = vsel %vm2963, %v3418, %v3417
  %v3420 = vrot.slane %v3387, 1
  %v3421 = vsel %vm2966, %v3420, %v3419
  %v3422 = vrot.slane %v2903, 7
  %v3423 = vsel %vm2948, %v3422, %v2902
  %v3424 = vrot.slane %v2904, 6
  %v3425 = vsel %vm2951, %v3424, %v3423
  %v3426 = vrot.slane %v2905, 5
  %v3427 = vsel %vm2954, %v3426, %v3425
  %v3428 = vrot.slane %v2906, 4
  %v3429 = vsel %vm2957, %v3428, %v3427
  %v3430 = vrot.slane %v3084, 3
  %v3431 = vsel %vm2960, %v3430, %v3429
  %v3432 = vrot.slane %v3236, 2
  %v3433 = vsel %vm2963, %v3432, %v3431
  %v3434 = vrot.slane %v3388, 1
  %v3435 = vsel %vm2966, %v3434, %v3433
  %v3436 = vrot.slane %v2911, 7
  %v3437 = vsel %vm2948, %v3436, %v2910
  %v3438 = vrot.slane %v2912, 6
  %v3439 = vsel %vm2951, %v3438, %v3437
  %v3440 = vrot.slane %v2913, 5
  %v3441 = vsel %vm2954, %v3440, %v3439
  %v3442 = vrot.slane %v2914, 4
  %v3443 = vsel %vm2957, %v3442, %v3441
  %v3444 = vrot.slane %v3085, 3
  %v3445 = vsel %vm2960, %v3444, %v3443
  %v3446 = vrot.slane %v3237, 2
  %v3447 = vsel %vm2963, %v3446, %v3445
  %v3448 = vrot.slane %v3389, 1
  %v3449 = vsel %vm2966, %v3448, %v3447
  %v3450 = vrot.slane %v2919, 7
  %v3451 = vsel %vm2948, %v3450, %v2918
  %v3452 = vrot.slane %v2920, 6
  %v3453 = vsel %vm2951, %v3452, %v3451
  %v3454 = vrot.slane %v2921, 5
  %v3455 = vsel %vm2954, %v3454, %v3453
  %v3456 = vrot.slane %v2922, 4
  %v3457 = vsel %vm2957, %v3456, %v3455
  %v3458 = vrot.slane %v3086, 3
  %v3459 = vsel %vm2960, %v3458, %v3457
  %v3460 = vrot.slane %v3238, 2
  %v3461 = vsel %vm2963, %v3460, %v3459
  %v3462 = vrot.slane %v3390, 1
  %v3463 = vsel %vm2966, %v3462, %v3461
  %v3464 = vrot.slane %v2927, 7
  %v3465 = vsel %vm2948, %v3464, %v2926
  %v3466 = vrot.slane %v2928, 6
  %v3467 = vsel %vm2951, %v3466, %v3465
  %v3468 = vrot.slane %v2929, 5
  %v3469 = vsel %vm2954, %v3468, %v3467
  %v3470 = vrot.slane %v2930, 4
  %v3471 = vsel %vm2957, %v3470, %v3469
  %v3472 = vrot.slane %v3087, 3
  %v3473 = vsel %vm2960, %v3472, %v3471
  %v3474 = vrot.slane %v3239, 2
  %v3475 = vsel %vm2963, %v3474, %v3473
  %v3476 = vrot.slane %v3391, 1
  %v3477 = vsel %vm2966, %v3476, %v3475
  %v3478 = vrot.slane %v2935, 7
  %v3479 = vsel %vm2948, %v3478, %v2934
  %v3480 = vrot.slane %v2936, 6
  %v3481 = vsel %vm2951, %v3480, %v3479
  %v3482 = vrot.slane %v2937, 5
  %v3483 = vsel %vm2954, %v3482, %v3481
  %v3484 = vrot.slane %v2938, 4
  %v3485 = vsel %vm2957, %v3484, %v3483
  %v3486 = vrot.slane %v3088, 3
  %v3487 = vsel %vm2960, %v3486, %v3485
  %v3488 = vrot.slane %v3240, 2
  %v3489 = vsel %vm2963, %v3488, %v3487
  %v3490 = vrot.slane %v3392, 1
  %v3491 = vsel %vm2966, %v3490, %v3489
  %v3492 = vrot.slane %v2943, 7
  %v3493 = vsel %vm2948, %v3492, %v2942
  %v3494 = vrot.slane %v2944, 6
  %v3495 = vsel %vm2951, %v3494, %v3493
  %v3496 = vrot.slane %v2945, 5
  %v3497 = vsel %vm2954, %v3496, %v3495
  %v3498 = vrot.slane %v2946, 4
  %v3499 = vsel %vm2957, %v3498, %v3497
  %v3500 = vrot.slane %v3089, 3
  %v3501 = vsel %vm2960, %v3500, %v3499
  %v3502 = vrot.slane %v3241, 2
  %v3503 = vsel %vm2963, %v3502, %v3501
  %v3504 = vrot.slane %v3393, 1
  %v3505 = vsel %vm2966, %v3504, %v3503
  %v3506 = vpack.c.b16 %v3407, %v3407
  %v3507 = vpack.c.b16 %v3421, %v3421
  %v3508 = vpack.c.b16 %v3435, %v3435
  %v3509 = vpack.c.b16 %v3449, %v3449
  %v3510 = vpack.c.b16 %v3463, %v3463
  %v3511 = vpack.c.b16 %v3477, %v3477
  %v3512 = vpack.c.b16 %v3491, %v3491
  %v3513 = vpack.c.b16 %v3505, %v3505
  %3514 = vrot.lane.b32.xlu0 %v3506, 104
  %v3515 = vpop.permute.xlu0 %3514
  %3516 = vrot.lane.b32.xlu0 %v3507, 104
  %v3517 = vpop.permute.xlu0 %3516
  %3518 = vrot.lane.b32.xlu0 %v3508, 104
  %v3519 = vpop.permute.xlu0 %3518
  %3520 = vrot.lane.b32.xlu0 %v3509, 104
  %v3521 = vpop.permute.xlu0 %3520
  %3522 = vrot.lane.b32.xlu0 %v3510, 104
  %v3523 = vpop.permute.xlu0 %3522
  %3524 = vrot.lane.b32.xlu0 %v3511, 104
  %v3525 = vpop.permute.xlu0 %3524
  %3526 = vrot.lane.b32.xlu0 %v3512, 104
  %v3527 = vpop.permute.xlu0 %3526
  %3528 = vrot.lane.b32.xlu0 %v3513, 104
  %v3529 = vpop.permute.xlu0 %3528
  %v3538 = vunpack.c.l.b16 %v2734
  %v3539 = vunpack.c.l.b16 %v2746
  %v3540 = vunpack.c.l.b16 %v2758
  %v3541 = vunpack.c.l.b16 %v2770
  %v3542 = vunpack.c.l.b16 %v2782
  %v3543 = vunpack.c.l.b16 %v2794
  %v3544 = vunpack.c.l.b16 %v2806
  %v3545 = vunpack.c.l.b16 %v2818
  %v3546 = vrot.slane %v2888, 7
  %v3547 = vsel %vm2948, %v3546, %v2887
  %v3548 = vrot.slane %v2889, 6
  %v3549 = vsel %vm2951, %v3548, %v3547
  %v3550 = vrot.slane %v2890, 5
  %v3551 = vsel %vm2954, %v3550, %v3549
  %v3552 = vrot.slane %v3082, 4
  %v3553 = vsel %vm2957, %v3552, %v3551
  %v3554 = vrot.slane %v3234, 3
  %v3555 = vsel %vm2960, %v3554, %v3553
  %v3556 = vrot.slane %v3386, 2
  %v3557 = vsel %vm2963, %v3556, %v3555
  %v3558 = vrot.slane %v3538, 1
  %v3559 = vsel %vm2966, %v3558, %v3557
  %v3560 = vrot.slane %v2896, 7
  %v3561 = vsel %vm2948, %v3560, %v2895
  %v3562 = vrot.slane %v2897, 6
  %v3563 = vsel %vm2951, %v3562, %v3561
  %v3564 = vrot.slane %v2898, 5
  %v3565 = vsel %vm2954, %v3564, %v3563
  %v3566 = vrot.slane %v3083, 4
  %v3567 = vsel %vm2957, %v3566, %v3565
  %v3568 = vrot.slane %v3235, 3
  %v3569 = vsel %vm2960, %v3568, %v3567
  %v3570 = vrot.slane %v3387, 2
  %v3571 = vsel %vm2963, %v3570, %v3569
  %v3572 = vrot.slane %v3539, 1
  %v3573 = vsel %vm2966, %v3572, %v3571
  %v3574 = vrot.slane %v2904, 7
  %v3575 = vsel %vm2948, %v3574, %v2903
  %v3576 = vrot.slane %v2905, 6
  %v3577 = vsel %vm2951, %v3576, %v3575
  %v3578 = vrot.slane %v2906, 5
  %v3579 = vsel %vm2954, %v3578, %v3577
  %v3580 = vrot.slane %v3084, 4
  %v3581 = vsel %vm2957, %v3580, %v3579
  %v3582 = vrot.slane %v3236, 3
  %v3583 = vsel %vm2960, %v3582, %v3581
  %v3584 = vrot.slane %v3388, 2
  %v3585 = vsel %vm2963, %v3584, %v3583
  %v3586 = vrot.slane %v3540, 1
  %v3587 = vsel %vm2966, %v3586, %v3585
  %v3588 = vrot.slane %v2912, 7
  %v3589 = vsel %vm2948, %v3588, %v2911
  %v3590 = vrot.slane %v2913, 6
  %v3591 = vsel %vm2951, %v3590, %v3589
  %v3592 = vrot.slane %v2914, 5
  %v3593 = vsel %vm2954, %v3592, %v3591
  %v3594 = vrot.slane %v3085, 4
  %v3595 = vsel %vm2957, %v3594, %v3593
  %v3596 = vrot.slane %v3237, 3
  %v3597 = vsel %vm2960, %v3596, %v3595
  %v3598 = vrot.slane %v3389, 2
  %v3599 = vsel %vm2963, %v3598, %v3597
  %v3600 = vrot.slane %v3541, 1
  %v3601 = vsel %vm2966, %v3600, %v3599
  %v3602 = vrot.slane %v2920, 7
  %v3603 = vsel %vm2948, %v3602, %v2919
  %v3604 = vrot.slane %v2921, 6
  %v3605 = vsel %vm2951, %v3604, %v3603
  %v3606 = vrot.slane %v2922, 5
  %v3607 = vsel %vm2954, %v3606, %v3605
  %v3608 = vrot.slane %v3086, 4
  %v3609 = vsel %vm2957, %v3608, %v3607
  %v3610 = vrot.slane %v3238, 3
  %v3611 = vsel %vm2960, %v3610, %v3609
  %v3612 = vrot.slane %v3390, 2
  %v3613 = vsel %vm2963, %v3612, %v3611
  %v3614 = vrot.slane %v3542, 1
  %v3615 = vsel %vm2966, %v3614, %v3613
  %v3616 = vrot.slane %v2928, 7
  %v3617 = vsel %vm2948, %v3616, %v2927
  %v3618 = vrot.slane %v2929, 6
  %v3619 = vsel %vm2951, %v3618, %v3617
  %v3620 = vrot.slane %v2930, 5
  %v3621 = vsel %vm2954, %v3620, %v3619
  %v3622 = vrot.slane %v3087, 4
  %v3623 = vsel %vm2957, %v3622, %v3621
  %v3624 = vrot.slane %v3239, 3
  %v3625 = vsel %vm2960, %v3624, %v3623
  %v3626 = vrot.slane %v3391, 2
  %v3627 = vsel %vm2963, %v3626, %v3625
  %v3628 = vrot.slane %v3543, 1
  %v3629 = vsel %vm2966, %v3628, %v3627
  %v3630 = vrot.slane %v2936, 7
  %v3631 = vsel %vm2948, %v3630, %v2935
  %v3632 = vrot.slane %v2937, 6
  %v3633 = vsel %vm2951, %v3632, %v3631
  %v3634 = vrot.slane %v2938, 5
  %v3635 = vsel %vm2954, %v3634, %v3633
  %v3636 = vrot.slane %v3088, 4
  %v3637 = vsel %vm2957, %v3636, %v3635
  %v3638 = vrot.slane %v3240, 3
  %v3639 = vsel %vm2960, %v3638, %v3637
  %v3640 = vrot.slane %v3392, 2
  %v3641 = vsel %vm2963, %v3640, %v3639
  %v3642 = vrot.slane %v3544, 1
  %v3643 = vsel %vm2966, %v3642, %v3641
  %v3644 = vrot.slane %v2944, 7
  %v3645 = vsel %vm2948, %v3644, %v2943
  %v3646 = vrot.slane %v2945, 6
  %v3647 = vsel %vm2951, %v3646, %v3645
  %v3648 = vrot.slane %v2946, 5
  %v3649 = vsel %vm2954, %v3648, %v3647
  %v3650 = vrot.slane %v3089, 4
  %v3651 = vsel %vm2957, %v3650, %v3649
  %v3652 = vrot.slane %v3241, 3
  %v3653 = vsel %vm2960, %v3652, %v3651
  %v3654 = vrot.slane %v3393, 2
  %v3655 = vsel %vm2963, %v3654, %v3653
  %v3656 = vrot.slane %v3545, 1
  %v3657 = vsel %vm2966, %v3656, %v3655
  %v3658 = vpack.c.b16 %v3559, %v3559
  %v3659 = vpack.c.b16 %v3573, %v3573
  %v3660 = vpack.c.b16 %v3587, %v3587
  %v3661 = vpack.c.b16 %v3601, %v3601
  %v3662 = vpack.c.b16 %v3615, %v3615
  %v3663 = vpack.c.b16 %v3629, %v3629
  %v3664 = vpack.c.b16 %v3643, %v3643
  %v3665 = vpack.c.b16 %v3657, %v3657
  %3666 = vrot.lane.b32.xlu0 %v3658, 96
  %v3667 = vpop.permute.xlu0 %3666
  %3668 = vrot.lane.b32.xlu0 %v3659, 96
  %v3669 = vpop.permute.xlu0 %3668
  %3670 = vrot.lane.b32.xlu0 %v3660, 96
  %v3671 = vpop.permute.xlu0 %3670
  %3672 = vrot.lane.b32.xlu0 %v3661, 96
  %v3673 = vpop.permute.xlu0 %3672
  %3674 = vrot.lane.b32.xlu0 %v3662, 96
  %v3675 = vpop.permute.xlu0 %3674
  %3676 = vrot.lane.b32.xlu0 %v3663, 96
  %v3677 = vpop.permute.xlu0 %3676
  %3678 = vrot.lane.b32.xlu0 %v3664, 96
  %v3679 = vpop.permute.xlu0 %3678
  %3680 = vrot.lane.b32.xlu0 %v3665, 96
  %v3681 = vpop.permute.xlu0 %3680
  %vm3682 = vcmask 982016
  %v3685 = vsel %vm3682, %v3066, %v3211
  %v3688 = vsel %vm3682, %v3067, %v3213
  %v3691 = vsel %vm3682, %v3068, %v3215
  %v3694 = vsel %vm3682, %v3069, %v3217
  %v3697 = vsel %vm3682, %v3070, %v3219
  %v3700 = vsel %vm3682, %v3071, %v3221
  %v3703 = vsel %vm3682, %v3072, %v3223
  %v3706 = vsel %vm3682, %v3073, %v3225
  %v3708 = vsel %vm546, %v3211, %v3363
  %v3710 = vsel %vm546, %v3213, %v3365
  %v3712 = vsel %vm546, %v3215, %v3367
  %v3714 = vsel %vm546, %v3217, %v3369
  %v3716 = vsel %vm546, %v3219, %v3371
  %v3718 = vsel %vm546, %v3221, %v3373
  %v3720 = vsel %vm546, %v3223, %v3375
  %v3722 = vsel %vm546, %v3225, %v3377
  %vm3723 = vcmask 850944
  %v3725 = vsel %vm3723, %v3363, %v3515
  %v3727 = vsel %vm3723, %v3365, %v3517
  %v3729 = vsel %vm3723, %v3367, %v3519
  %v3731 = vsel %vm3723, %v3369, %v3521
  %v3733 = vsel %vm3723, %v3371, %v3523
  %v3735 = vsel %vm3723, %v3373, %v3525
  %v3737 = vsel %vm3723, %v3375, %v3527
  %v3739 = vsel %vm3723, %v3377, %v3529
  %vm3740 = vcmask 785408
  %v3742 = vsel %vm3740, %v3515, %v3667
  %v3744 = vsel %vm3740, %v3517, %v3669
  %v3746 = vsel %vm3740, %v3519, %v3671
  %v3748 = vsel %vm3740, %v3521, %v3673
  %v3750 = vsel %vm3740, %v3523, %v3675
  %v3752 = vsel %vm3740, %v3525, %v3677
  %v3754 = vsel %vm3740, %v3527, %v3679
  %v3756 = vsel %vm3740, %v3529, %v3681
  %v3789 = vunpack.c.l.b16 %v3685
  %v3790 = vunpack.c.l.b16 %v3708
  %v3791 = vunpack.c.l.b16 %v3725
  %v3792 = vunpack.c.l.b16 %v3742
  %v3793 = vunpack.c.l.b16 %v3667
  %v3794 = vunpack.c.l.b16 %v3688
  %v3795 = vunpack.c.l.b16 %v3710
  %v3796 = vunpack.c.l.b16 %v3727
  %v3797 = vunpack.c.l.b16 %v3744
  %v3798 = vunpack.c.l.b16 %v3669
  %v3799 = vunpack.c.l.b16 %v3691
  %v3800 = vunpack.c.l.b16 %v3712
  %v3801 = vunpack.c.l.b16 %v3729
  %v3802 = vunpack.c.l.b16 %v3746
  %v3803 = vunpack.c.l.b16 %v3671
  %v3804 = vunpack.c.l.b16 %v3694
  %v3805 = vunpack.c.l.b16 %v3714
  %v3806 = vunpack.c.l.b16 %v3731
  %v3807 = vunpack.c.l.b16 %v3748
  %v3808 = vunpack.c.l.b16 %v3673
  %v3809 = vunpack.c.l.b16 %v3697
  %v3810 = vunpack.c.l.b16 %v3716
  %v3811 = vunpack.c.l.b16 %v3733
  %v3812 = vunpack.c.l.b16 %v3750
  %v3813 = vunpack.c.l.b16 %v3675
  %v3814 = vunpack.c.l.b16 %v3700
  %v3815 = vunpack.c.l.b16 %v3718
  %v3816 = vunpack.c.l.b16 %v3735
  %v3817 = vunpack.c.l.b16 %v3752
  %v3818 = vunpack.c.l.b16 %v3677
  %v3819 = vunpack.c.l.b16 %v3703
  %v3820 = vunpack.c.l.b16 %v3720
  %v3821 = vunpack.c.l.b16 %v3737
  %v3822 = vunpack.c.l.b16 %v3754
  %v3823 = vunpack.c.l.b16 %v3679
  %v3824 = vunpack.c.l.b16 %v3706
  %v3825 = vunpack.c.l.b16 %v3722
  %v3826 = vunpack.c.l.b16 %v3739
  %v3827 = vunpack.c.l.b16 %v3756
  %v3828 = vunpack.c.l.b16 %v3681
  %v3829 = vld [vmem:[%s3] sm:$0xff]
  %v3830 = vld [vmem:[%s3 + $0x8] sm:$0xff]
  %v3831 = vld [vmem:[%s3 + $0x10] sm:$0xff]
  %v3832 = vld [vmem:[%s3 + $0x18] sm:$0xff]
  %v3833 = vld [vmem:[%s3 + $0x20] sm:$0xff]
  %v3834 = vld [vmem:[%s3 + $0x28] sm:$0xff]
  %v3835 = vld [vmem:[%s3 + $0x30] sm:$0xff]
  %v3836 = vld [vmem:[%s3 + $0x38] sm:$0xff]
  %v3837 = vld [vmem:[%s3 + $0x40] sm:$0xff]
  %v3838 = vld [vmem:[%s3 + $0x48] sm:$0xff]
  %v3839 = vld [vmem:[%s3 + $0x50] sm:$0xff]
  %v3840 = vld [vmem:[%s3 + $0x58] sm:$0xff]
  %v3841 = vld [vmem:[%s3 + $0x60] sm:$0xff]
  %v3842 = vld [vmem:[%s3 + $0x68] sm:$0xff]
  %v3843 = vld [vmem:[%s3 + $0x70] sm:$0xff]
  %v3844 = vld [vmem:[%s3 + $0x78] sm:$0xff]
  %v3845 = vld [vmem:[%s3 + $0x80] sm:$0xff]
  %v3846 = vld [vmem:[%s3 + $0x88] sm:$0xff]
  %v3847 = vld [vmem:[%s3 + $0x90] sm:$0xff]
  %v3848 = vld [vmem:[%s3 + $0x98] sm:$0xff]
  %v3849 = vld [vmem:[%s3 + $0xa0] sm:$0xff]
  %v3850 = vld [vmem:[%s3 + $0xa8] sm:$0xff]
  %v3851 = vld [vmem:[%s3 + $0xb0] sm:$0xff]
  %v3852 = vld [vmem:[%s3 + $0xb8] sm:$0xff]
  %v3853 = vld [vmem:[%s3 + $0xc0] sm:$0xff]
  %v3854 = vld [vmem:[%s3 + $0xc8] sm:$0xff]
  %v3855 = vld [vmem:[%s3 + $0xd0] sm:$0xff]
  %v3856 = vld [vmem:[%s3 + $0xd8] sm:$0xff]
  %v3857 = vld [vmem:[%s3 + $0xe0] sm:$0xff]
  %v3858 = vld [vmem:[%s3 + $0xe8] sm:$0xff]
  %v3859 = vld [vmem:[%s3 + $0xf0] sm:$0xff]
  %v3860 = vld [vmem:[%s3 + $0xf8] sm:$0xff]
  %v3861 = vld [vmem:[%s3 + $0x100] sm:$0xff]
  %v3862 = vld [vmem:[%s3 + $0x108] sm:$0xff]
  %v3863 = vld [vmem:[%s3 + $0x110] sm:$0xff]
  %v3864 = vld [vmem:[%s3 + $0x118] sm:$0xff]
  %v3865 = vld [vmem:[%s3 + $0x120] sm:$0xff]
  %v3866 = vld [vmem:[%s3 + $0x128] sm:$0xff]
  %v3867 = vld [vmem:[%s3 + $0x130] sm:$0xff]
  %v3868 = vld [vmem:[%s3 + $0x138] sm:$0xff]
  %v3869 = vld [vmem:[%s3 + $0x140] sm:$0xff]
  %v3870 = vld [vmem:[%s3 + $0x148] sm:$0xff]
  %v3871 = vld [vmem:[%s3 + $0x150] sm:$0xff]
  %v3872 = vld [vmem:[%s3 + $0x158] sm:$0xff]
  %v3873 = vld [vmem:[%s3 + $0x160] sm:$0xff]
  %v3874 = vld [vmem:[%s3 + $0x168] sm:$0xff]
  %v3875 = vld [vmem:[%s3 + $0x170] sm:$0xff]
  %v3876 = vld [vmem:[%s3 + $0x178] sm:$0xff]
  %v3877 = vld [vmem:[%s3 + $0x180] sm:$0xff]
  %v3878 = vld [vmem:[%s3 + $0x188] sm:$0xff]
  %v3879 = vld [vmem:[%s3 + $0x190] sm:$0xff]
  %v3880 = vld [vmem:[%s3 + $0x198] sm:$0xff]
  %v3881 = vld [vmem:[%s3 + $0x1a0] sm:$0xff]
  %v3882 = vld [vmem:[%s3 + $0x1a8] sm:$0xff]
  %v3883 = vld [vmem:[%s3 + $0x1b0] sm:$0xff]
  %v3884 = vld [vmem:[%s3 + $0x1b8] sm:$0xff]
  %v3885 = vld [vmem:[%s3 + $0x1c0] sm:$0xff]
  %v3886 = vld [vmem:[%s3 + $0x1c8] sm:$0xff]
  %v3887 = vld [vmem:[%s3 + $0x1d0] sm:$0xff]
  %v3888 = vld [vmem:[%s3 + $0x1d8] sm:$0xff]
  %v3889 = vld [vmem:[%s3 + $0x1e0] sm:$0xff]
  %v3890 = vld [vmem:[%s3 + $0x1e8] sm:$0xff]
  %v3891 = vld [vmem:[%s3 + $0x1f0] sm:$0xff]
  %v3892 = vld [vmem:[%s3 + $0x1f8] sm:$0xff]
  %v3893 = vld [vmem:[%s3 + $0x200] sm:$0xff]
  %v3894 = vld [vmem:[%s3 + $0x208] sm:$0xff]
  %v3895 = vld [vmem:[%s3 + $0x210] sm:$0xff]
  %v3896 = vld [vmem:[%s3 + $0x218] sm:$0xff]
  %v3897 = vld [vmem:[%s3 + $0x220] sm:$0xff]
  %v3898 = vld [vmem:[%s3 + $0x228] sm:$0xff]
  %v3899 = vld [vmem:[%s3 + $0x230] sm:$0xff]
  %v3900 = vld [vmem:[%s3 + $0x238] sm:$0xff]
  %v3901 = vld [vmem:[%s3 + $0x240] sm:$0xff]
  %v3902 = vld [vmem:[%s3 + $0x248] sm:$0xff]
  %v3903 = vld [vmem:[%s3 + $0x250] sm:$0xff]
  %v3904 = vld [vmem:[%s4] sm:$0x3]
  %v3906 = vlaneseq
  %v3907 = vshrl.u32 %v3906, 7
  %v3908 = vsub.s32 0, %v3907
  %v3909 = vrot.slane %v3904, %v3908
  %v3910 = vlaneseq
  %v3911 = vshrl.u32 %v3910, 7
  %v3912 = vsub.s32 1, %v3911
  %v3913 = vrot.slane %v3904, %v3912
  %v3916 = vpack.c.b16 %v3794, %v3789
  %v3917 = vpack.c.b16 %v3795, %v3790
  %v3918 = vpack.c.b16 %v3796, %v3791
  %v3919 = vpack.c.b16 %v3797, %v3792
  %v3920 = vpack.c.b16 %v3798, %v3793
  %v3921 = vpack.c.b16 %v3804, %v3799
  %v3922 = vpack.c.b16 %v3805, %v3800
  %v3923 = vpack.c.b16 %v3806, %v3801
  %v3924 = vpack.c.b16 %v3807, %v3802
  %v3925 = vpack.c.b16 %v3808, %v3803
  %v3926 = vpack.c.b16 %v3814, %v3809
  %v3927 = vpack.c.b16 %v3815, %v3810
  %v3928 = vpack.c.b16 %v3816, %v3811
  %v3929 = vpack.c.b16 %v3817, %v3812
  %v3930 = vpack.c.b16 %v3818, %v3813
  %v3931 = vpack.c.b16 %v3824, %v3819
  %v3932 = vpack.c.b16 %v3825, %v3820
  %v3933 = vpack.c.b16 %v3826, %v3821
  %v3934 = vpack.c.b16 %v3827, %v3822
  %v3935 = vpack.c.b16 %v3828, %v3823
  %v4027 = vunpack.c.l.b16 %v3829
  %v4028 = vunpack.c.h.b16 %v3829
  %v4029 = vunpack.c.l.b16 %v3830
  %v4030 = vunpack.c.h.b16 %v3830
  %v4031 = vunpack.c.l.b16 %v3831
  %v4032 = vunpack.c.h.b16 %v3831
  %v4033 = vunpack.c.l.b16 %v3832
  %v4034 = vunpack.c.h.b16 %v3832
  %v4035 = vunpack.c.l.b16 %v3833
  %v4036 = vunpack.c.h.b16 %v3833
  %v4037 = vunpack.c.l.b16 %v3834
  %v4038 = vunpack.c.h.b16 %v3834
  %v4039 = vunpack.c.l.b16 %v3835
  %v4040 = vunpack.c.h.b16 %v3835
  %v4041 = vunpack.c.l.b16 %v3836
  %v4042 = vunpack.c.h.b16 %v3836
  %v4043 = vunpack.c.l.b16 %v3837
  %v4044 = vunpack.c.h.b16 %v3837
  %v4045 = vunpack.c.l.b16 %v3838
  %v4046 = vunpack.c.h.b16 %v3838
  %v4047 = vunpack.c.l.b16 %v3839
  %v4048 = vunpack.c.h.b16 %v3839
  %v4049 = vunpack.c.l.b16 %v3840
  %v4050 = vunpack.c.h.b16 %v3840
  %v4051 = vunpack.c.l.b16 %v3841
  %v4052 = vunpack.c.h.b16 %v3841
  %v4053 = vunpack.c.l.b16 %v3842
  %v4054 = vunpack.c.h.b16 %v3842
  %v4055 = vunpack.c.l.b16 %v3843
  %v4056 = vunpack.c.h.b16 %v3843
  %v4057 = vunpack.c.l.b16 %v3844
  %v4058 = vunpack.c.h.b16 %v3844
  %v4059 = vunpack.c.l.b16 %v3845
  %v4060 = vunpack.c.h.b16 %v3845
  %v4061 = vunpack.c.l.b16 %v3846
  %v4062 = vunpack.c.h.b16 %v3846
  %v4063 = vunpack.c.l.b16 %v3847
  %v4064 = vunpack.c.h.b16 %v3847
  %v4065 = vunpack.c.l.b16 %v3848
  %v4066 = vunpack.c.h.b16 %v3848
  %v4067 = vunpack.c.l.b16 %v3849
  %v4068 = vunpack.c.h.b16 %v3849
  %v4069 = vunpack.c.l.b16 %v3850
  %v4070 = vunpack.c.h.b16 %v3850
  %v4071 = vunpack.c.l.b16 %v3851
  %v4072 = vunpack.c.h.b16 %v3851
  %v4073 = vunpack.c.l.b16 %v3852
  %v4074 = vunpack.c.h.b16 %v3852
  %v4075 = vunpack.c.l.b16 %v3853
  %v4076 = vunpack.c.h.b16 %v3853
  %v4077 = vunpack.c.l.b16 %v3854
  %v4078 = vunpack.c.h.b16 %v3854
  %v4079 = vunpack.c.l.b16 %v3855
  %v4080 = vunpack.c.h.b16 %v3855
  %v4081 = vunpack.c.l.b16 %v3856
  %v4082 = vunpack.c.h.b16 %v3856
  %v4083 = vunpack.c.l.b16 %v3857
  %v4084 = vunpack.c.h.b16 %v3857
  %v4085 = vunpack.c.l.b16 %v3858
  %v4086 = vunpack.c.h.b16 %v3858
  %v4087 = vunpack.c.l.b16 %v3859
  %v4088 = vunpack.c.h.b16 %v3859
  %v4089 = vunpack.c.l.b16 %v3860
  %v4090 = vunpack.c.h.b16 %v3860
  %v4091 = vunpack.c.l.b16 %v3861
  %v4092 = vunpack.c.h.b16 %v3861
  %v4093 = vunpack.c.l.b16 %v3862
  %v4094 = vunpack.c.h.b16 %v3862
  %v4095 = vunpack.c.l.b16 %v3863
  %v4096 = vunpack.c.h.b16 %v3863
  %v4097 = vunpack.c.l.b16 %v3864
  %v4098 = vunpack.c.h.b16 %v3864
  %v4099 = vunpack.c.l.b16 %v3865
  %v4100 = vunpack.c.h.b16 %v3865
  %v4101 = vunpack.c.l.b16 %v3866
  %v4102 = vunpack.c.h.b16 %v3866
  %v4103 = vunpack.c.l.b16 %v3867
  %v4104 = vunpack.c.h.b16 %v3867
  %v4105 = vunpack.c.l.b16 %v3868
  %v4106 = vunpack.c.h.b16 %v3868
  %v4107 = vunpack.c.l.b16 %v3869
  %v4108 = vunpack.c.h.b16 %v3869
  %v4109 = vunpack.c.l.b16 %v3870
  %v4110 = vunpack.c.h.b16 %v3870
  %v4111 = vunpack.c.l.b16 %v3871
  %v4112 = vunpack.c.h.b16 %v3871
  %v4113 = vunpack.c.l.b16 %v3872
  %v4114 = vunpack.c.h.b16 %v3872
  %v4115 = vunpack.c.l.b16 %v3873
  %v4116 = vunpack.c.h.b16 %v3873
  %v4117 = vunpack.c.l.b16 %v3874
  %v4118 = vunpack.c.h.b16 %v3874
  %v4119 = vunpack.c.l.b16 %v3875
  %v4120 = vunpack.c.h.b16 %v3875
  %v4121 = vunpack.c.l.b16 %v3876
  %v4122 = vunpack.c.h.b16 %v3876
  %v4123 = vunpack.c.l.b16 %v3877
  %v4124 = vunpack.c.h.b16 %v3877
  %v4125 = vunpack.c.l.b16 %v3878
  %v4126 = vunpack.c.h.b16 %v3878
  %v4127 = vunpack.c.l.b16 %v3879
  %v4128 = vunpack.c.h.b16 %v3879
  %v4129 = vunpack.c.l.b16 %v3880
  %v4130 = vunpack.c.h.b16 %v3880
  %v4131 = vunpack.c.l.b16 %v3881
  %v4132 = vunpack.c.h.b16 %v3881
  %v4133 = vunpack.c.l.b16 %v3882
  %v4134 = vunpack.c.h.b16 %v3882
  %v4135 = vunpack.c.l.b16 %v3883
  %v4136 = vunpack.c.h.b16 %v3883
  %v4137 = vunpack.c.l.b16 %v3884
  %v4138 = vunpack.c.h.b16 %v3884
  %v4139 = vunpack.c.l.b16 %v3885
  %v4140 = vunpack.c.h.b16 %v3885
  %v4141 = vunpack.c.l.b16 %v3886
  %v4142 = vunpack.c.h.b16 %v3886
  %v4143 = vunpack.c.l.b16 %v3887
  %v4144 = vunpack.c.h.b16 %v3887
  %v4145 = vunpack.c.l.b16 %v3888
  %v4146 = vunpack.c.h.b16 %v3888
  %v4147 = vunpack.c.l.b16 %v3889
  %v4148 = vunpack.c.h.b16 %v3889
  %v4149 = vunpack.c.l.b16 %v3890
  %v4150 = vunpack.c.h.b16 %v3890
  %v4151 = vunpack.c.l.b16 %v3891
  %v4152 = vunpack.c.h.b16 %v3891
  %v4153 = vunpack.c.l.b16 %v3892
  %v4154 = vunpack.c.h.b16 %v3892
  %v4155 = vunpack.c.l.b16 %v3893
  %v4156 = vunpack.c.h.b16 %v3893
  %v4157 = vunpack.c.l.b16 %v3894
  %v4158 = vunpack.c.h.b16 %v3894
  %v4159 = vunpack.c.l.b16 %v3895
  %v4160 = vunpack.c.h.b16 %v3895
  %v4161 = vunpack.c.l.b16 %v3896
  %v4162 = vunpack.c.h.b16 %v3896
  %v4163 = vunpack.c.l.b16 %v3897
  %v4164 = vunpack.c.h.b16 %v3897
  %v4165 = vunpack.c.l.b16 %v3898
  %v4166 = vunpack.c.h.b16 %v3898
  %v4167 = vunpack.c.l.b16 %v3899
  %v4168 = vunpack.c.h.b16 %v3899
  %v4169 = vunpack.c.l.b16 %v3900
  %v4170 = vunpack.c.h.b16 %v3900
  %v4171 = vunpack.c.l.b16 %v3901
  %v4172 = vunpack.c.h.b16 %v3901
  %v4173 = vunpack.c.l.b16 %v3902
  %v4174 = vunpack.c.h.b16 %v3902
  %v4175 = vunpack.c.l.b16 %v3903
  %v4176 = vunpack.c.h.b16 %v3903
  %v4177 = vpack.c.b16 %v4029, %v4027
  %v4178 = vpack.c.b16 %v4030, %v4028
  %v4179 = vpack.c.b16 %v4033, %v4031
  %v4180 = vpack.c.b16 %v4034, %v4032
  %v4181 = vpack.c.b16 %v4037, %v4035
  %v4182 = vpack.c.b16 %v4038, %v4036
  %v4183 = vpack.c.b16 %v4041, %v4039
  %v4184 = vpack.c.b16 %v4042, %v4040
  %v4185 = vpack.c.b16 %v4045, %v4043
  %v4186 = vpack.c.b16 %v4046, %v4044
  %v4187 = vpack.c.b16 %v4049, %v4047
  %v4188 = vpack.c.b16 %v4050, %v4048
  %v4189 = vpack.c.b16 %v4053, %v4051
  %v4190 = vpack.c.b16 %v4054, %v4052
  %v4191 = vpack.c.b16 %v4057, %v4055
  %v4192 = vpack.c.b16 %v4058, %v4056
  %v4193 = vpack.c.b16 %v4061, %v4059
  %v4194 = vpack.c.b16 %v4062, %v4060
  %v4195 = vpack.c.b16 %v4065, %v4063
  %v4196 = vpack.c.b16 %v4066, %v4064
  %v4197 = vpack.c.b16 %v4069, %v4067
  %v4198 = vpack.c.b16 %v4070, %v4068
  %v4199 = vpack.c.b16 %v4073, %v4071
  %v4200 = vpack.c.b16 %v4074, %v4072
  %v4201 = vpack.c.b16 %v4077, %v4075
  %v4202 = vpack.c.b16 %v4078, %v4076
  %v4203 = vpack.c.b16 %v4081, %v4079
  %v4204 = vpack.c.b16 %v4082, %v4080
  %v4205 = vpack.c.b16 %v4085, %v4083
  %v4206 = vpack.c.b16 %v4086, %v4084
  %v4207 = vpack.c.b16 %v4089, %v4087
  %v4208 = vpack.c.b16 %v4090, %v4088
  %v4209 = vpack.c.b16 %v4093, %v4091
  %v4210 = vpack.c.b16 %v4094, %v4092
  %v4211 = vpack.c.b16 %v4097, %v4095
  %v4212 = vpack.c.b16 %v4098, %v4096
  %v4213 = vpack.c.b16 %v4101, %v4099
  %v4214 = vpack.c.b16 %v4102, %v4100
  %v4215 = vpack.c.b16 %v4105, %v4103
  %v4216 = vpack.c.b16 %v4106, %v4104
  %v4217 = vpack.c.b16 %v4109, %v4107
  %v4218 = vpack.c.b16 %v4110, %v4108
  %v4219 = vpack.c.b16 %v4113, %v4111
  %v4220 = vpack.c.b16 %v4114, %v4112
  %v4221 = vpack.c.b16 %v4117, %v4115
  %v4222 = vpack.c.b16 %v4118, %v4116
  %v4223 = vpack.c.b16 %v4121, %v4119
  %v4224 = vpack.c.b16 %v4122, %v4120
  %v4225 = vpack.c.b16 %v4125, %v4123
  %v4226 = vpack.c.b16 %v4126, %v4124
  %v4227 = vpack.c.b16 %v4129, %v4127
  %v4228 = vpack.c.b16 %v4130, %v4128
  %v4229 = vpack.c.b16 %v4133, %v4131
  %v4230 = vpack.c.b16 %v4134, %v4132
  %v4231 = vpack.c.b16 %v4137, %v4135
  %v4232 = vpack.c.b16 %v4138, %v4136
  %v4233 = vpack.c.b16 %v4141, %v4139
  %v4234 = vpack.c.b16 %v4142, %v4140
  %v4235 = vpack.c.b16 %v4145, %v4143
  %v4236 = vpack.c.b16 %v4146, %v4144
  %v4237 = vpack.c.b16 %v4149, %v4147
  %v4238 = vpack.c.b16 %v4150, %v4148
  %v4239 = vpack.c.b16 %v4153, %v4151
  %v4240 = vpack.c.b16 %v4154, %v4152
  %v4241 = vpack.c.b16 %v4157, %v4155
  %v4242 = vpack.c.b16 %v4158, %v4156
  %v4243 = vpack.c.b16 %v4161, %v4159
  %v4244 = vpack.c.b16 %v4162, %v4160
  %v4245 = vpack.c.b16 %v4165, %v4163
  %v4246 = vpack.c.b16 %v4166, %v4164
  %v4247 = vpack.c.b16 %v4169, %v4167
  %v4248 = vpack.c.b16 %v4170, %v4168
  %v4249 = vpack.c.b16 %v4173, %v4171
  %v4250 = vpack.c.b16 %v4174, %v4172
  %v4251 = vpack.c.b16 %v4175, %v4175
  %v4252 = vpack.c.b16 %v4176, %v4176
  %vm4327 = vcmask 719872
  %v4329 = vsel %vm4327, %v3920, 0
  %v4332 = vsel %vm4327, %v3925, 0
  %v4335 = vsel %vm4327, %v3930, 0
  %v4338 = vsel %vm4327, %v3935, 0
  %vm4340 = vcmask 1043456
  %v4342 = vsel %vm4340, %v4251, 0
  %v4345 = vsel %vm4340, %v4252, 0
  %4347 = vmatprep.subr.bf16.mxu0 %v4192
  %4348 = vmatpush1.bf16.msra.mxu0 %v4191
  %4349 = vmatprep.subr.bf16.mxu0 %v4190
  %4350 = vmatpush1.bf16.msra.mxu0 %v4189
  %4351 = vmatprep.subr.bf16.mxu0 %v4188
  %4352 = vmatpush1.bf16.msra.mxu0 %v4187
  %4353 = vmatprep.subr.bf16.mxu0 %v4186
  %4354 = vmatpush1.bf16.msra.mxu0 %v4185
  %4355 = vmatprep.subr.bf16.mxu0 %v4184
  %4356 = vmatpush1.bf16.msra.mxu0 %v4183
  %4357 = vmatprep.subr.bf16.mxu0 %v4182
  %4358 = vmatpush1.bf16.msra.mxu0 %v4181
  %4359 = vmatprep.subr.bf16.mxu0 %v4180
  %4360 = vmatpush1.bf16.msra.mxu0 %v4179
  %4361 = vmatprep.subr.bf16.mxu0 %v4178
  %4362 = vmatpush1.bf16.msra.mxu0 %v4177
  %4363 = vmatprep.subr.bf16.mxu0 %v4208
  %4364 = vmatpush2.bf16.msra.mxu0 %v4207
  %4365 = vmatprep.subr.bf16.mxu0 %v4206
  %4366 = vmatpush2.bf16.msra.mxu0 %v4205
  %4367 = vmatprep.subr.bf16.mxu0 %v4204
  %4368 = vmatpush2.bf16.msra.mxu0 %v4203
  %4369 = vmatprep.subr.bf16.mxu0 %v4202
  %4370 = vmatpush2.bf16.msra.mxu0 %v4201
  %4371 = vmatprep.subr.bf16.mxu0 %v4200
  %4372 = vmatpush2.bf16.msra.mxu0 %v4199
  %4373 = vmatprep.subr.bf16.mxu0 %v4198
  %4374 = vmatpush2.bf16.msra.mxu0 %v4197
  %4375 = vmatprep.subr.bf16.mxu0 %v4196
  %4376 = vmatpush2.bf16.msra.mxu0 %v4195
  %4377 = vmatprep.subr.bf16.mxu0 %v4194
  %4378 = vmatpush2.bf16.msra.mxu0 %v4193
  %4379 = vmatprep.mubr.bf16.mxu0 %v3917
  %4380 = vmatmul.mubr.bf16.gmra.mxu0 %v3916
  %v4381 = vpop.f32.mrf.mxu0
  %v4382 = vadd.f32 %v3909, %v4381
  %v4383 = vpop.f32.mrf.mxu0
  %v4384 = vadd.f32 %v3913, %v4383
  %v4385 = vpop.f32.mrf.mxu0
  %v4386 = vadd.f32 %v3909, %v4385
  %v4387 = vpop.f32.mrf.mxu0
  %v4388 = vadd.f32 %v3913, %v4387
  %4389 = vmatprep.mubr.bf16.mxu0 %v3922
  %4390 = vmatmul.mubr.bf16.gmra.mxu0 %v3921
  %v4391 = vpop.f32.mrf.mxu0
  %v4392 = vadd.f32 %v3909, %v4391
  %v4393 = vpop.f32.mrf.mxu0
  %v4394 = vadd.f32 %v3913, %v4393
  %v4395 = vpop.f32.mrf.mxu0
  %v4396 = vadd.f32 %v3909, %v4395
  %v4397 = vpop.f32.mrf.mxu0
  %v4398 = vadd.f32 %v3913, %v4397
  %4399 = vmatprep.mubr.bf16.mxu0 %v3927
  %4400 = vmatmul.mubr.bf16.gmra.mxu0 %v3926
  %v4401 = vpop.f32.mrf.mxu0
  %v4402 = vadd.f32 %v3909, %v4401
  %v4403 = vpop.f32.mrf.mxu0
  %v4404 = vadd.f32 %v3913, %v4403
  %v4405 = vpop.f32.mrf.mxu0
  %v4406 = vadd.f32 %v3909, %v4405
  %v4407 = vpop.f32.mrf.mxu0
  %v4408 = vadd.f32 %v3913, %v4407
  %4409 = vmatprep.mubr.bf16.mxu0 %v3932
  %4410 = vmatmul.mubr.bf16.gmra.mxu0 %v3931
  %v4411 = vpop.f32.mrf.mxu0
  %v4412 = vadd.f32 %v3909, %v4411
  %v4413 = vpop.f32.mrf.mxu0
  %v4414 = vadd.f32 %v3913, %v4413
  %v4415 = vpop.f32.mrf.mxu0
  %v4416 = vadd.f32 %v3909, %v4415
  %v4417 = vpop.f32.mrf.mxu0
  %v4418 = vadd.f32 %v3913, %v4417
  %4419 = vdwg.mxu0
  %4420 = vmatprep.subr.bf16.mxu0 %v4224
  %4421 = vmatpush1.bf16.msra.mxu0 %v4223
  %4422 = vmatprep.subr.bf16.mxu0 %v4222
  %4423 = vmatpush1.bf16.msra.mxu0 %v4221
  %4424 = vmatprep.subr.bf16.mxu0 %v4220
  %4425 = vmatpush1.bf16.msra.mxu0 %v4219
  %4426 = vmatprep.subr.bf16.mxu0 %v4218
  %4427 = vmatpush1.bf16.msra.mxu0 %v4217
  %4428 = vmatprep.subr.bf16.mxu0 %v4216
  %4429 = vmatpush1.bf16.msra.mxu0 %v4215
  %4430 = vmatprep.subr.bf16.mxu0 %v4214
  %4431 = vmatpush1.bf16.msra.mxu0 %v4213
  %4432 = vmatprep.subr.bf16.mxu0 %v4212
  %4433 = vmatpush1.bf16.msra.mxu0 %v4211
  %4434 = vmatprep.subr.bf16.mxu0 %v4210
  %4435 = vmatpush1.bf16.msra.mxu0 %v4209
  %4436 = vmatprep.subr.bf16.mxu0 %v4240
  %4437 = vmatpush2.bf16.msra.mxu0 %v4239
  %4438 = vmatprep.subr.bf16.mxu0 %v4238
  %4439 = vmatpush2.bf16.msra.mxu0 %v4237
  %4440 = vmatprep.subr.bf16.mxu0 %v4236
  %4441 = vmatpush2.bf16.msra.mxu0 %v4235
  %4442 = vmatprep.subr.bf16.mxu0 %v4234
  %4443 = vmatpush2.bf16.msra.mxu0 %v4233
  %4444 = vmatprep.subr.bf16.mxu0 %v4232
  %4445 = vmatpush2.bf16.msra.mxu0 %v4231
  %4446 = vmatprep.subr.bf16.mxu0 %v4230
  %4447 = vmatpush2.bf16.msra.mxu0 %v4229
  %4448 = vmatprep.subr.bf16.mxu0 %v4228
  %4449 = vmatpush2.bf16.msra.mxu0 %v4227
  %4450 = vmatprep.subr.bf16.mxu0 %v4226
  %4451 = vmatpush2.bf16.msra.mxu0 %v4225
  %4452 = vmatprep.mubr.bf16.mxu0 %v3919
  %4453 = vmatmul.mubr.bf16.gmra.mxu0 %v3918
  %v4454 = vpop.f32.mrf.mxu0
  %v4455 = vadd.f32 %v4382, %v4454
  %v4456 = vpop.f32.mrf.mxu0
  %v4457 = vadd.f32 %v4384, %v4456
  %v4458 = vpop.f32.mrf.mxu0
  %v4459 = vadd.f32 %v4386, %v4458
  %v4460 = vpop.f32.mrf.mxu0
  %v4461 = vadd.f32 %v4388, %v4460
  %4462 = vmatprep.mubr.bf16.mxu0 %v3924
  %4463 = vmatmul.mubr.bf16.gmra.mxu0 %v3923
  %v4464 = vpop.f32.mrf.mxu0
  %v4465 = vadd.f32 %v4392, %v4464
  %v4466 = vpop.f32.mrf.mxu0
  %v4467 = vadd.f32 %v4394, %v4466
  %v4468 = vpop.f32.mrf.mxu0
  %v4469 = vadd.f32 %v4396, %v4468
  %v4470 = vpop.f32.mrf.mxu0
  %v4471 = vadd.f32 %v4398, %v4470
  %4472 = vmatprep.mubr.bf16.mxu0 %v3929
  %4473 = vmatmul.mubr.bf16.gmra.mxu0 %v3928
  %v4474 = vpop.f32.mrf.mxu0
  %v4475 = vadd.f32 %v4402, %v4474
  %v4476 = vpop.f32.mrf.mxu0
  %v4477 = vadd.f32 %v4404, %v4476
  %v4478 = vpop.f32.mrf.mxu0
  %v4479 = vadd.f32 %v4406, %v4478
  %v4480 = vpop.f32.mrf.mxu0
  %v4481 = vadd.f32 %v4408, %v4480
  %4482 = vmatprep.mubr.bf16.mxu0 %v3934
  %4483 = vmatmul.mubr.bf16.gmra.mxu0 %v3933
  %v4484 = vpop.f32.mrf.mxu0
  %v4485 = vadd.f32 %v4412, %v4484
  %v4486 = vpop.f32.mrf.mxu0
  %v4487 = vadd.f32 %v4414, %v4486
  %v4488 = vpop.f32.mrf.mxu0
  %v4489 = vadd.f32 %v4416, %v4488
  %v4490 = vpop.f32.mrf.mxu0
  %v4491 = vadd.f32 %v4418, %v4490
  %4492 = vdwg.mxu0
  %4493 = vmatprep.subr.bf16.mxu0 0
  %4494 = vmatpush1.bf16.msra.mxu0 0
  %4495 = vmatprep.subr.bf16.mxu0 0
  %4496 = vmatpush1.bf16.msra.mxu0 0
  %4497 = vmatprep.subr.bf16.mxu0 %v4345
  %4498 = vmatpush1.bf16.msra.mxu0 %v4342
  %4499 = vmatprep.subr.bf16.mxu0 %v4250
  %4500 = vmatpush1.bf16.msra.mxu0 %v4249
  %4501 = vmatprep.subr.bf16.mxu0 %v4248
  %4502 = vmatpush1.bf16.msra.mxu0 %v4247
  %4503 = vmatprep.subr.bf16.mxu0 %v4246
  %4504 = vmatpush1.bf16.msra.mxu0 %v4245
  %4505 = vmatprep.subr.bf16.mxu0 %v4244
  %4506 = vmatpush1.bf16.msra.mxu0 %v4243
  %4507 = vmatprep.subr.bf16.mxu0 %v4242
  %4508 = vmatpush1.bf16.msra.mxu0 %v4241
  %4509 = vmatprep.subr.bf16.mxu0 0
  %4510 = vmatpush2.bf16.msra.mxu0 0
  %4511 = vmatprep.subr.bf16.mxu0 0
  %4512 = vmatpush2.bf16.msra.mxu0 0
  %4513 = vmatprep.subr.bf16.mxu0 0
  %4514 = vmatpush2.bf16.msra.mxu0 0
  %4515 = vmatprep.subr.bf16.mxu0 0
  %4516 = vmatpush2.bf16.msra.mxu0 0
  %4517 = vmatprep.subr.bf16.mxu0 0
  %4518 = vmatpush2.bf16.msra.mxu0 0
  %4519 = vmatprep.subr.bf16.mxu0 0
  %4520 = vmatpush2.bf16.msra.mxu0 0
  %4521 = vmatprep.subr.bf16.mxu0 0
  %4522 = vmatpush2.bf16.msra.mxu0 0
  %4523 = vmatprep.subr.bf16.mxu0 0
  %4524 = vmatpush2.bf16.msra.mxu0 0
  %4525 = vmatprep.mubr.bf16.mxu0 0
  %4526 = vmatmul.mubr.bf16.gmra.mxu0 %v4329
  %v4527 = vpop.f32.mrf.mxu0
  %v4528 = vadd.f32 %v4455, %v4527
  %v4529 = vpop.f32.mrf.mxu0
  %v4530 = vadd.f32 %v4457, %v4529
  %v4531 = vpop.f32.mrf.mxu0
  %v4532 = vadd.f32 %v4459, %v4531
  %v4533 = vpop.f32.mrf.mxu0
  %v4534 = vadd.f32 %v4461, %v4533
  %4535 = vmatprep.mubr.bf16.mxu0 0
  %4536 = vmatmul.mubr.bf16.gmra.mxu0 %v4332
  %v4537 = vpop.f32.mrf.mxu0
  %v4538 = vadd.f32 %v4465, %v4537
  %v4539 = vpop.f32.mrf.mxu0
  %v4540 = vadd.f32 %v4467, %v4539
  %v4541 = vpop.f32.mrf.mxu0
  %v4542 = vadd.f32 %v4469, %v4541
  %v4543 = vpop.f32.mrf.mxu0
  %v4544 = vadd.f32 %v4471, %v4543
  %4545 = vmatprep.mubr.bf16.mxu0 0
  %4546 = vmatmul.mubr.bf16.gmra.mxu0 %v4335
  %v4547 = vpop.f32.mrf.mxu0
  %v4548 = vadd.f32 %v4475, %v4547
  %v4549 = vpop.f32.mrf.mxu0
  %v4550 = vadd.f32 %v4477, %v4549
  %v4551 = vpop.f32.mrf.mxu0
  %v4552 = vadd.f32 %v4479, %v4551
  %v4553 = vpop.f32.mrf.mxu0
  %v4554 = vadd.f32 %v4481, %v4553
  %4555 = vmatprep.mubr.bf16.mxu0 0
  %4556 = vmatmul.mubr.bf16.gmra.mxu0 %v4338
  %v4557 = vpop.f32.mrf.mxu0
  %v4558 = vadd.f32 %v4485, %v4557
  %v4559 = vpop.f32.mrf.mxu0
  %v4560 = vadd.f32 %v4487, %v4559
  %v4561 = vpop.f32.mrf.mxu0
  %v4562 = vadd.f32 %v4489, %v4561
  %v4563 = vpop.f32.mrf.mxu0
  %v4564 = vadd.f32 %v4491, %v4563
  %4565 = vdwg.mxu0
  %v4582 = vcombine.low %v4528, %v4530
  %v4583 = vcombine.high %v4528, %v4530
  %v4585 = vunpack.c.l.s4 1983009808
  %v4586 = vunpack.c.0.s8 %v4585
  %v4587 = vlaneseq
  %v4588 = vshrl.u32 %v4587, 7
  %v4589 = vsub.s32 %v4586, %v4588
  %v4590 = vrot.slane %v4582, %v4589
  %v4592 = vunpack.c.l.s4 1983009808
  %v4593 = vunpack.c.0.s8 %v4592
  %v4594 = vlaneseq
  %v4595 = vshrl.u32 %v4594, 7
  %v4596 = vsub.s32 %v4593, %v4595
  %v4597 = vrot.slane %v4583, %v4596
  %v4598 = vcombine.high %v4590, %v4590
  %v4599 = vcombine.high %v4597, %v4597
  %v4600 = vcombine.low %v4532, %v4534
  %v4601 = vcombine.high %v4532, %v4534
  %v4603 = vunpack.c.l.s4 1983009808
  %v4604 = vunpack.c.0.s8 %v4603
  %v4605 = vlaneseq
  %v4606 = vshrl.u32 %v4605, 7
  %v4607 = vsub.s32 %v4604, %v4606
  %v4608 = vrot.slane %v4600, %v4607
  %v4610 = vunpack.c.l.s4 1983009808
  %v4611 = vunpack.c.0.s8 %v4610
  %v4612 = vlaneseq
  %v4613 = vshrl.u32 %v4612, 7
  %v4614 = vsub.s32 %v4611, %v4613
  %v4615 = vrot.slane %v4601, %v4614
  %v4616 = vcombine.high %v4608, %v4608
  %v4617 = vcombine.high %v4615, %v4615
  %v4618 = vcombine.low %v4538, %v4540
  %v4619 = vcombine.high %v4538, %v4540
  %v4621 = vunpack.c.l.s4 1983009808
  %v4622 = vunpack.c.0.s8 %v4621
  %v4623 = vlaneseq
  %v4624 = vshrl.u32 %v4623, 7
  %v4625 = vsub.s32 %v4622, %v4624
  %v4626 = vrot.slane %v4618, %v4625
  %v4628 = vunpack.c.l.s4 1983009808
  %v4629 = vunpack.c.0.s8 %v4628
  %v4630 = vlaneseq
  %v4631 = vshrl.u32 %v4630, 7
  %v4632 = vsub.s32 %v4629, %v4631
  %v4633 = vrot.slane %v4619, %v4632
  %v4634 = vcombine.high %v4626, %v4626
  %v4635 = vcombine.high %v4633, %v4633
  %v4636 = vcombine.low %v4542, %v4544
  %v4637 = vcombine.high %v4542, %v4544
  %v4639 = vunpack.c.l.s4 1983009808
  %v4640 = vunpack.c.0.s8 %v4639
  %v4641 = vlaneseq
  %v4642 = vshrl.u32 %v4641, 7
  %v4643 = vsub.s32 %v4640, %v4642
  %v4644 = vrot.slane %v4636, %v4643
  %v4646 = vunpack.c.l.s4 1983009808
  %v4647 = vunpack.c.0.s8 %v4646
  %v4648 = vlaneseq
  %v4649 = vshrl.u32 %v4648, 7
  %v4650 = vsub.s32 %v4647, %v4649
  %v4651 = vrot.slane %v4637, %v4650
  %v4652 = vcombine.high %v4644, %v4644
  %v4653 = vcombine.high %v4651, %v4651
  %v4654 = vcombine.low %v4548, %v4550
  %v4655 = vcombine.high %v4548, %v4550
  %v4657 = vunpack.c.l.s4 1983009808
  %v4658 = vunpack.c.0.s8 %v4657
  %v4659 = vlaneseq
  %v4660 = vshrl.u32 %v4659, 7
  %v4661 = vsub.s32 %v4658, %v4660
  %v4662 = vrot.slane %v4654, %v4661
  %v4664 = vunpack.c.l.s4 1983009808
  %v4665 = vunpack.c.0.s8 %v4664
  %v4666 = vlaneseq
  %v4667 = vshrl.u32 %v4666, 7
  %v4668 = vsub.s32 %v4665, %v4667
  %v4669 = vrot.slane %v4655, %v4668
  %v4670 = vcombine.high %v4662, %v4662
  %v4671 = vcombine.high %v4669, %v4669
  %v4672 = vcombine.low %v4552, %v4554
  %v4673 = vcombine.high %v4552, %v4554
  %v4675 = vunpack.c.l.s4 1983009808
  %v4676 = vunpack.c.0.s8 %v4675
  %v4677 = vlaneseq
  %v4678 = vshrl.u32 %v4677, 7
  %v4679 = vsub.s32 %v4676, %v4678
  %v4680 = vrot.slane %v4672, %v4679
  %v4682 = vunpack.c.l.s4 1983009808
  %v4683 = vunpack.c.0.s8 %v4682
  %v4684 = vlaneseq
  %v4685 = vshrl.u32 %v4684, 7
  %v4686 = vsub.s32 %v4683, %v4685
  %v4687 = vrot.slane %v4673, %v4686
  %v4688 = vcombine.high %v4680, %v4680
  %v4689 = vcombine.high %v4687, %v4687
  %v4690 = vcombine.low %v4558, %v4560
  %v4691 = vcombine.high %v4558, %v4560
  %v4693 = vunpack.c.l.s4 1983009808
  %v4694 = vunpack.c.0.s8 %v4693
  %v4695 = vlaneseq
  %v4696 = vshrl.u32 %v4695, 7
  %v4697 = vsub.s32 %v4694, %v4696
  %v4698 = vrot.slane %v4690, %v4697
  %v4700 = vunpack.c.l.s4 1983009808
  %v4701 = vunpack.c.0.s8 %v4700
  %v4702 = vlaneseq
  %v4703 = vshrl.u32 %v4702, 7
  %v4704 = vsub.s32 %v4701, %v4703
  %v4705 = vrot.slane %v4691, %v4704
  %v4706 = vcombine.high %v4698, %v4698
  %v4707 = vcombine.high %v4705, %v4705
  %v4708 = vcombine.low %v4562, %v4564
  %v4709 = vcombine.high %v4562, %v4564
  %v4711 = vunpack.c.l.s4 1983009808
  %v4712 = vunpack.c.0.s8 %v4711
  %v4713 = vlaneseq
  %v4714 = vshrl.u32 %v4713, 7
  %v4715 = vsub.s32 %v4712, %v4714
  %v4716 = vrot.slane %v4708, %v4715
  %v4718 = vunpack.c.l.s4 1983009808
  %v4719 = vunpack.c.0.s8 %v4718
  %v4720 = vlaneseq
  %v4721 = vshrl.u32 %v4720, 7
  %v4722 = vsub.s32 %v4719, %v4721
  %v4723 = vrot.slane %v4709, %v4722
  %v4724 = vcombine.high %v4716, %v4716
  %v4725 = vcombine.high %v4723, %v4723
  %v4758 = vrot.slane %v4590, 7
  %v4759 = vrot.slane %v4758, 2
  %v4760 = vrot.slane %v4598, 7
  %v4761 = vrot.slane %v4760, 2
  %v4762 = vrot.slane %v4597, 7
  %v4763 = vrot.slane %v4762, 2
  %v4764 = vrot.slane %v4599, 7
  %v4765 = vrot.slane %v4764, 2
  %v4766 = vrot.slane %v4608, 7
  %v4767 = vrot.slane %v4766, 2
  %v4768 = vrot.slane %v4616, 7
  %v4769 = vrot.slane %v4768, 2
  %v4770 = vrot.slane %v4615, 7
  %v4771 = vrot.slane %v4770, 2
  %v4772 = vrot.slane %v4617, 7
  %v4773 = vrot.slane %v4772, 2
  %v4774 = vrot.slane %v4626, 7
  %v4775 = vrot.slane %v4774, 2
  %v4776 = vrot.slane %v4634, 7
  %v4777 = vrot.slane %v4776, 2
  %v4778 = vrot.slane %v4633, 7
  %v4779 = vrot.slane %v4778, 2
  %v4780 = vrot.slane %v4635, 7
  %v4781 = vrot.slane %v4780, 2
  %v4782 = vrot.slane %v4644, 7
  %v4783 = vrot.slane %v4782, 2
  %v4784 = vrot.slane %v4652, 7
  %v4785 = vrot.slane %v4784, 2
  %v4786 = vrot.slane %v4651, 7
  %v4787 = vrot.slane %v4786, 2
  %v4788 = vrot.slane %v4653, 7
  %v4789 = vrot.slane %v4788, 2
  %v4790 = vrot.slane %v4662, 7
  %v4791 = vrot.slane %v4790, 2
  %v4792 = vrot.slane %v4670, 7
  %v4793 = vrot.slane %v4792, 2
  %v4794 = vrot.slane %v4669, 7
  %v4795 = vrot.slane %v4794, 2
  %v4796 = vrot.slane %v4671, 7
  %v4797 = vrot.slane %v4796, 2
  %v4798 = vrot.slane %v4680, 7
  %v4799 = vrot.slane %v4798, 2
  %v4800 = vrot.slane %v4688, 7
  %v4801 = vrot.slane %v4800, 2
  %v4802 = vrot.slane %v4687, 7
  %v4803 = vrot.slane %v4802, 2
  %v4804 = vrot.slane %v4689, 7
  %v4805 = vrot.slane %v4804, 2
  %v4806 = vrot.slane %v4698, 7
  %v4807 = vrot.slane %v4806, 2
  %v4808 = vrot.slane %v4706, 7
  %v4809 = vrot.slane %v4808, 2
  %v4810 = vrot.slane %v4705, 7
  %v4811 = vrot.slane %v4810, 2
  %v4812 = vrot.slane %v4707, 7
  %v4813 = vrot.slane %v4812, 2
  %v4814 = vrot.slane %v4716, 7
  %v4815 = vrot.slane %v4814, 2
  %v4816 = vrot.slane %v4724, 7
  %v4817 = vrot.slane %v4816, 2
  %v4818 = vrot.slane %v4723, 7
  %v4819 = vrot.slane %v4818, 2
  %v4820 = vrot.slane %v4725, 7
  %v4821 = vrot.slane %v4820, 2
  %v4854 = vmax.f32 %v4590, %v4759
  %v4855 = vmax.f32 %v4598, %v4761
  %v4856 = vmax.f32 %v4597, %v4763
  %v4857 = vmax.f32 %v4599, %v4765
  %v4858 = vmax.f32 %v4608, %v4767
  %v4859 = vmax.f32 %v4616, %v4769
  %v4860 = vmax.f32 %v4615, %v4771
  %v4861 = vmax.f32 %v4617, %v4773
  %v4862 = vmax.f32 %v4626, %v4775
  %v4863 = vmax.f32 %v4634, %v4777
  %v4864 = vmax.f32 %v4633, %v4779
  %v4865 = vmax.f32 %v4635, %v4781
  %v4866 = vmax.f32 %v4644, %v4783
  %v4867 = vmax.f32 %v4652, %v4785
  %v4868 = vmax.f32 %v4651, %v4787
  %v4869 = vmax.f32 %v4653, %v4789
  %v4870 = vmax.f32 %v4662, %v4791
  %v4871 = vmax.f32 %v4670, %v4793
  %v4872 = vmax.f32 %v4669, %v4795
  %v4873 = vmax.f32 %v4671, %v4797
  %v4874 = vmax.f32 %v4680, %v4799
  %v4875 = vmax.f32 %v4688, %v4801
  %v4876 = vmax.f32 %v4687, %v4803
  %v4877 = vmax.f32 %v4689, %v4805
  %v4878 = vmax.f32 %v4698, %v4807
  %v4879 = vmax.f32 %v4706, %v4809
  %v4880 = vmax.f32 %v4705, %v4811
  %v4881 = vmax.f32 %v4707, %v4813
  %v4882 = vmax.f32 %v4716, %v4815
  %v4883 = vmax.f32 %v4724, %v4817
  %v4884 = vmax.f32 %v4723, %v4819
  %v4885 = vmax.f32 %v4725, %v4821
  %4918 = vrot.lane.b32.xlu0 %v4854, 48
  %v4919 = vpop.permute.xlu0 %4918
  %4920 = vrot.lane.b32.xlu0 %v4855, 48
  %v4921 = vpop.permute.xlu0 %4920
  %4922 = vrot.lane.b32.xlu0 %v4856, 48
  %v4923 = vpop.permute.xlu0 %4922
  %4924 = vrot.lane.b32.xlu0 %v4857, 48
  %v4925 = vpop.permute.xlu0 %4924
  %4926 = vrot.lane.b32.xlu0 %v4858, 48
  %v4927 = vpop.permute.xlu0 %4926
  %4928 = vrot.lane.b32.xlu0 %v4859, 48
  %v4929 = vpop.permute.xlu0 %4928
  %4930 = vrot.lane.b32.xlu0 %v4860, 48
  %v4931 = vpop.permute.xlu0 %4930
  %4932 = vrot.lane.b32.xlu0 %v4861, 48
  %v4933 = vpop.permute.xlu0 %4932
  %4934 = vrot.lane.b32.xlu0 %v4862, 48
  %v4935 = vpop.permute.xlu0 %4934
  %4936 = vrot.lane.b32.xlu0 %v4863, 48
  %v4937 = vpop.permute.xlu0 %4936
  %4938 = vrot.lane.b32.xlu0 %v4864, 48
  %v4939 = vpop.permute.xlu0 %4938
  %4940 = vrot.lane.b32.xlu0 %v4865, 48
  %v4941 = vpop.permute.xlu0 %4940
  %4942 = vrot.lane.b32.xlu0 %v4866, 48
  %v4943 = vpop.permute.xlu0 %4942
  %4944 = vrot.lane.b32.xlu0 %v4867, 48
  %v4945 = vpop.permute.xlu0 %4944
  %4946 = vrot.lane.b32.xlu0 %v4868, 48
  %v4947 = vpop.permute.xlu0 %4946
  %4948 = vrot.lane.b32.xlu0 %v4869, 48
  %v4949 = vpop.permute.xlu0 %4948
  %4950 = vrot.lane.b32.xlu0 %v4870, 48
  %v4951 = vpop.permute.xlu0 %4950
  %4952 = vrot.lane.b32.xlu0 %v4871, 48
  %v4953 = vpop.permute.xlu0 %4952
  %4954 = vrot.lane.b32.xlu0 %v4872, 48
  %v4955 = vpop.permute.xlu0 %4954
  %4956 = vrot.lane.b32.xlu0 %v4873, 48
  %v4957 = vpop.permute.xlu0 %4956
  %4958 = vrot.lane.b32.xlu0 %v4874, 48
  %v4959 = vpop.permute.xlu0 %4958
  %4960 = vrot.lane.b32.xlu0 %v4875, 48
  %v4961 = vpop.permute.xlu0 %4960
  %4962 = vrot.lane.b32.xlu0 %v4876, 48
  %v4963 = vpop.permute.xlu0 %4962
  %4964 = vrot.lane.b32.xlu0 %v4877, 48
  %v4965 = vpop.permute.xlu0 %4964
  %4966 = vrot.lane.b32.xlu0 %v4878, 48
  %v4967 = vpop.permute.xlu0 %4966
  %4968 = vrot.lane.b32.xlu0 %v4879, 48
  %v4969 = vpop.permute.xlu0 %4968
  %4970 = vrot.lane.b32.xlu0 %v4880, 48
  %v4971 = vpop.permute.xlu0 %4970
  %4972 = vrot.lane.b32.xlu0 %v4881, 48
  %v4973 = vpop.permute.xlu0 %4972
  %4974 = vrot.lane.b32.xlu0 %v4882, 48
  %v4975 = vpop.permute.xlu0 %4974
  %4976 = vrot.lane.b32.xlu0 %v4883, 48
  %v4977 = vpop.permute.xlu0 %4976
  %4978 = vrot.lane.b32.xlu0 %v4884, 48
  %v4979 = vpop.permute.xlu0 %4978
  %4980 = vrot.lane.b32.xlu0 %v4885, 48
  %v4981 = vpop.permute.xlu0 %4980
  %v4982 = vrot.slane %v4919, 2
  %v4983 = vrot.slane %v4921, 2
  %v4984 = vrot.slane %v4923, 2
  %v4985 = vrot.slane %v4925, 2
  %v4986 = vrot.slane %v4927, 2
  %v4987 = vrot.slane %v4929, 2
  %v4988 = vrot.slane %v4931, 2
  %v4989 = vrot.slane %v4933, 2
  %v4990 = vrot.slane %v4935, 2
  %v4991 = vrot.slane %v4937, 2
  %v4992 = vrot.slane %v4939, 2
  %v4993 = vrot.slane %v4941, 2
  %v4994 = vrot.slane %v4943, 2
  %v4995 = vrot.slane %v4945, 2
  %v4996 = vrot.slane %v4947, 2
  %v4997 = vrot.slane %v4949, 2
  %v4998 = vrot.slane %v4951, 2
  %v4999 = vrot.slane %v4953, 2
  %v5000 = vrot.slane %v4955, 2
  %v5001 = vrot.slane %v4957, 2
  %v5002 = vrot.slane %v4959, 2
  %v5003 = vrot.slane %v4961, 2
  %v5004 = vrot.slane %v4963, 2
  %v5005 = vrot.slane %v4965, 2
  %v5006 = vrot.slane %v4967, 2
  %v5007 = vrot.slane %v4969, 2
  %v5008 = vrot.slane %v4971, 2
  %v5009 = vrot.slane %v4973, 2
  %v5010 = vrot.slane %v4975, 2
  %v5011 = vrot.slane %v4977, 2
  %v5012 = vrot.slane %v4979, 2
  %v5013 = vrot.slane %v4981, 2
  %vm5014 = vcmask 392192
  %v5015 = vsel %vm5014, %v4919, %v4982
  %v5016 = vsel %vm5014, %v4921, %v4983
  %v5017 = vsel %vm5014, %v4923, %v4984
  %v5018 = vsel %vm5014, %v4925, %v4985
  %v5019 = vsel %vm5014, %v4927, %v4986
  %v5020 = vsel %vm5014, %v4929, %v4987
  %v5021 = vsel %vm5014, %v4931, %v4988
  %v5022 = vsel %vm5014, %v4933, %v4989
  %v5023 = vsel %vm5014, %v4935, %v4990
  %v5024 = vsel %vm5014, %v4937, %v4991
  %v5025 = vsel %vm5014, %v4939, %v4992
  %v5026 = vsel %vm5014, %v4941, %v4993
  %v5027 = vsel %vm5014, %v4943, %v4994
  %v5028 = vsel %vm5014, %v4945, %v4995
  %v5029 = vsel %vm5014, %v4947, %v4996
  %v5030 = vsel %vm5014, %v4949, %v4997
  %v5031 = vsel %vm5014, %v4951, %v4998
  %v5032 = vsel %vm5014, %v4953, %v4999
  %v5033 = vsel %vm5014, %v4955, %v5000
  %v5034 = vsel %vm5014, %v4957, %v5001
  %v5035 = vsel %vm5014, %v4959, %v5002
  %v5036 = vsel %vm5014, %v4961, %v5003
  %v5037 = vsel %vm5014, %v4963, %v5004
  %v5038 = vsel %vm5014, %v4965, %v5005
  %v5039 = vsel %vm5014, %v4967, %v5006
  %v5040 = vsel %vm5014, %v4969, %v5007
  %v5041 = vsel %vm5014, %v4971, %v5008
  %v5042 = vsel %vm5014, %v4973, %v5009
  %v5043 = vsel %vm5014, %v4975, %v5010
  %v5044 = vsel %vm5014, %v4977, %v5011
  %v5045 = vsel %vm5014, %v4979, %v5012
  %v5046 = vsel %vm5014, %v4981, %v5013
  %v5079 = vmax.f32 %v4854, %v5015
  %v5080 = vmax.f32 %v4855, %v5016
  %v5081 = vmax.f32 %v4856, %v5017
  %v5082 = vmax.f32 %v4857, %v5018
  %v5083 = vmax.f32 %v4858, %v5019
  %v5084 = vmax.f32 %v4859, %v5020
  %v5085 = vmax.f32 %v4860, %v5021
  %v5086 = vmax.f32 %v4861, %v5022
  %v5087 = vmax.f32 %v4862, %v5023
  %v5088 = vmax.f32 %v4863, %v5024
  %v5089 = vmax.f32 %v4864, %v5025
  %v5090 = vmax.f32 %v4865, %v5026
  %v5091 = vmax.f32 %v4866, %v5027
  %v5092 = vmax.f32 %v4867, %v5028
  %v5093 = vmax.f32 %v4868, %v5029
  %v5094 = vmax.f32 %v4869, %v5030
  %v5095 = vmax.f32 %v4870, %v5031
  %v5096 = vmax.f32 %v4871, %v5032
  %v5097 = vmax.f32 %v4872, %v5033
  %v5098 = vmax.f32 %v4873, %v5034
  %v5099 = vmax.f32 %v4874, %v5035
  %v5100 = vmax.f32 %v4875, %v5036
  %v5101 = vmax.f32 %v4876, %v5037
  %v5102 = vmax.f32 %v4877, %v5038
  %v5103 = vmax.f32 %v4878, %v5039
  %v5104 = vmax.f32 %v4879, %v5040
  %v5105 = vmax.f32 %v4880, %v5041
  %v5106 = vmax.f32 %v4881, %v5042
  %v5107 = vmax.f32 %v4882, %v5043
  %v5108 = vmax.f32 %v4883, %v5044
  %v5109 = vmax.f32 %v4884, %v5045
  %v5110 = vmax.f32 %v4885, %v5046
  %v5111 = vmax.f32 %v5079, 0.0
  %v5112 = vmax.f32 %v5080, 0.0
  %v5113 = vmax.f32 %v5081, 0.0
  %v5114 = vmax.f32 %v5082, 0.0
  %v5115 = vmax.f32 %v5083, 0.0
  %v5116 = vmax.f32 %v5084, 0.0
  %v5117 = vmax.f32 %v5085, 0.0
  %v5118 = vmax.f32 %v5086, 0.0
  %v5119 = vmax.f32 %v5087, 0.0
  %v5120 = vmax.f32 %v5088, 0.0
  %v5121 = vmax.f32 %v5089, 0.0
  %v5122 = vmax.f32 %v5090, 0.0
  %v5123 = vmax.f32 %v5091, 0.0
  %v5124 = vmax.f32 %v5092, 0.0
  %v5125 = vmax.f32 %v5093, 0.0
  %v5126 = vmax.f32 %v5094, 0.0
  %v5127 = vmax.f32 %v5095, 0.0
  %v5128 = vmax.f32 %v5096, 0.0
  %v5129 = vmax.f32 %v5097, 0.0
  %v5130 = vmax.f32 %v5098, 0.0
  %v5131 = vmax.f32 %v5099, 0.0
  %v5132 = vmax.f32 %v5100, 0.0
  %v5133 = vmax.f32 %v5101, 0.0
  %v5134 = vmax.f32 %v5102, 0.0
  %v5135 = vmax.f32 %v5103, 0.0
  %v5136 = vmax.f32 %v5104, 0.0
  %v5137 = vmax.f32 %v5105, 0.0
  %v5138 = vmax.f32 %v5106, 0.0
  %v5139 = vmax.f32 %v5107, 0.0
  %v5140 = vmax.f32 %v5108, 0.0
  %v5141 = vmax.f32 %v5109, 0.0
  %v5142 = vmax.f32 %v5110, 0.0
  %v5151 = vlaneseq
  %v5152 = vshrl.u32 %v5151, 7
  %v5153 = vsub.s32 0, %v5152
  %v5154 = vrot.slane %v5111, %v5153
  %v5155 = vlaneseq
  %v5156 = vshrl.u32 %v5155, 7
  %v5157 = vsub.s32 0, %v5156
  %v5158 = vrot.slane %v5115, %v5157
  %v5159 = vlaneseq
  %v5160 = vshrl.u32 %v5159, 7
  %v5161 = vsub.s32 0, %v5160
  %v5162 = vrot.slane %v5119, %v5161
  %v5163 = vlaneseq
  %v5164 = vshrl.u32 %v5163, 7
  %v5165 = vsub.s32 0, %v5164
  %v5166 = vrot.slane %v5123, %v5165
  %v5167 = vlaneseq
  %v5168 = vshrl.u32 %v5167, 7
  %v5169 = vsub.s32 0, %v5168
  %v5170 = vrot.slane %v5127, %v5169
  %v5171 = vlaneseq
  %v5172 = vshrl.u32 %v5171, 7
  %v5173 = vsub.s32 0, %v5172
  %v5174 = vrot.slane %v5131, %v5173
  %v5175 = vlaneseq
  %v5176 = vshrl.u32 %v5175, 7
  %v5177 = vsub.s32 0, %v5176
  %v5178 = vrot.slane %v5135, %v5177
  %v5179 = vlaneseq
  %v5180 = vshrl.u32 %v5179, 7
  %v5181 = vsub.s32 0, %v5180
  %v5182 = vrot.slane %v5139, %v5181
  %v5183 = vsel %vm2948, %v5158, %v5154
  %v5184 = vsel %vm2951, %v5162, %v5183
  %v5185 = vsel %vm2954, %v5166, %v5184
  %v5186 = vsel %vm2957, %v5170, %v5185
  %v5187 = vsel %vm2960, %v5174, %v5186
  %v5188 = vsel %vm2963, %v5178, %v5187
  %v5189 = vsel %vm2966, %v5182, %v5188
  %v5199 = vlaneseq
  %v5200 = vshrl.u32 %v5199, 7
  %v5201 = vsub.s32 0, %v5200
  %v5202 = vrot.slane %v5112, %v5201
  %v5203 = vlaneseq
  %v5204 = vshrl.u32 %v5203, 7
  %v5205 = vsub.s32 0, %v5204
  %v5206 = vrot.slane %v5116, %v5205
  %v5207 = vlaneseq
  %v5208 = vshrl.u32 %v5207, 7
  %v5209 = vsub.s32 0, %v5208
  %v5210 = vrot.slane %v5120, %v5209
  %v5211 = vlaneseq
  %v5212 = vshrl.u32 %v5211, 7
  %v5213 = vsub.s32 0, %v5212
  %v5214 = vrot.slane %v5124, %v5213
  %v5215 = vlaneseq
  %v5216 = vshrl.u32 %v5215, 7
  %v5217 = vsub.s32 0, %v5216
  %v5218 = vrot.slane %v5128, %v5217
  %v5219 = vlaneseq
  %v5220 = vshrl.u32 %v5219, 7
  %v5221 = vsub.s32 0, %v5220
  %v5222 = vrot.slane %v5132, %v5221
  %v5223 = vlaneseq
  %v5224 = vshrl.u32 %v5223, 7
  %v5225 = vsub.s32 0, %v5224
  %v5226 = vrot.slane %v5136, %v5225
  %v5227 = vlaneseq
  %v5228 = vshrl.u32 %v5227, 7
  %v5229 = vsub.s32 0, %v5228
  %v5230 = vrot.slane %v5140, %v5229
  %v5231 = vsel %vm2948, %v5206, %v5202
  %v5232 = vsel %vm2951, %v5210, %v5231
  %v5233 = vsel %vm2954, %v5214, %v5232
  %v5234 = vsel %vm2957, %v5218, %v5233
  %v5235 = vsel %vm2960, %v5222, %v5234
  %v5236 = vsel %vm2963, %v5226, %v5235
  %v5237 = vsel %vm2966, %v5230, %v5236
  %5238 = vrot.lane.b32.xlu0 %v5237, 80
  %v5239 = vpop.permute.xlu0 %5238
  %v5249 = vlaneseq
  %v5250 = vshrl.u32 %v5249, 7
  %v5251 = vsub.s32 0, %v5250
  %v5252 = vrot.slane %v5113, %v5251
  %v5253 = vlaneseq
  %v5254 = vshrl.u32 %v5253, 7
  %v5255 = vsub.s32 0, %v5254
  %v5256 = vrot.slane %v5117, %v5255
  %v5257 = vlaneseq
  %v5258 = vshrl.u32 %v5257, 7
  %v5259 = vsub.s32 0, %v5258
  %v5260 = vrot.slane %v5121, %v5259
  %v5261 = vlaneseq
  %v5262 = vshrl.u32 %v5261, 7
  %v5263 = vsub.s32 0, %v5262
  %v5264 = vrot.slane %v5125, %v5263
  %v5265 = vlaneseq
  %v5266 = vshrl.u32 %v5265, 7
  %v5267 = vsub.s32 0, %v5266
  %v5268 = vrot.slane %v5129, %v5267
  %v5269 = vlaneseq
  %v5270 = vshrl.u32 %v5269, 7
  %v5271 = vsub.s32 0, %v5270
  %v5272 = vrot.slane %v5133, %v5271
  %v5273 = vlaneseq
  %v5274 = vshrl.u32 %v5273, 7
  %v5275 = vsub.s32 0, %v5274
  %v5276 = vrot.slane %v5137, %v5275
  %v5277 = vlaneseq
  %v5278 = vshrl.u32 %v5277, 7
  %v5279 = vsub.s32 0, %v5278
  %v5280 = vrot.slane %v5141, %v5279
  %v5281 = vsel %vm2948, %v5256, %v5252
  %v5282 = vsel %vm2951, %v5260, %v5281
  %v5283 = vsel %vm2954, %v5264, %v5282
  %v5284 = vsel %vm2957, %v5268, %v5283
  %v5285 = vsel %vm2960, %v5272, %v5284
  %v5286 = vsel %vm2963, %v5276, %v5285
  %v5287 = vsel %vm2966, %v5280, %v5286
  %5288 = vrot.lane.b32.xlu0 %v5287, 32
  %v5289 = vpop.permute.xlu0 %5288
  %v5299 = vlaneseq
  %v5300 = vshrl.u32 %v5299, 7
  %v5301 = vsub.s32 0, %v5300
  %v5302 = vrot.slane %v5114, %v5301
  %v5303 = vlaneseq
  %v5304 = vshrl.u32 %v5303, 7
  %v5305 = vsub.s32 0, %v5304
  %v5306 = vrot.slane %v5118, %v5305
  %v5307 = vlaneseq
  %v5308 = vshrl.u32 %v5307, 7
  %v5309 = vsub.s32 0, %v5308
  %v5310 = vrot.slane %v5122, %v5309
  %v5311 = vlaneseq
  %v5312 = vshrl.u32 %v5311, 7
  %v5313 = vsub.s32 0, %v5312
  %v5314 = vrot.slane %v5126, %v5313
  %v5315 = vlaneseq
  %v5316 = vshrl.u32 %v5315, 7
  %v5317 = vsub.s32 0, %v5316
  %v5318 = vrot.slane %v5130, %v5317
  %v5319 = vlaneseq
  %v5320 = vshrl.u32 %v5319, 7
  %v5321 = vsub.s32 0, %v5320
  %v5322 = vrot.slane %v5134, %v5321
  %v5323 = vlaneseq
  %v5324 = vshrl.u32 %v5323, 7
  %v5325 = vsub.s32 0, %v5324
  %v5326 = vrot.slane %v5138, %v5325
  %v5327 = vlaneseq
  %v5328 = vshrl.u32 %v5327, 7
  %v5329 = vsub.s32 0, %v5328
  %v5330 = vrot.slane %v5142, %v5329
  %v5331 = vsel %vm2948, %v5306, %v5302
  %v5332 = vsel %vm2951, %v5310, %v5331
  %v5333 = vsel %vm2954, %v5314, %v5332
  %v5334 = vsel %vm2957, %v5318, %v5333
  %v5335 = vsel %vm2960, %v5322, %v5334
  %v5336 = vsel %vm2963, %v5326, %v5335
  %v5337 = vsel %vm2966, %v5330, %v5336
  %5338 = vrot.lane.b32.xlu0 %v5337, 112
  %v5339 = vpop.permute.xlu0 %5338
  %vm5341 = vcmask 654336
  %v5342 = vsel %vm5341, %v5189, %v5239
  %vm5343 = vcmask 261120
  %v5344 = vsel %vm5343, %v5239, %v5289
  %v5345 = vsel %vm546, %v5344, %v5339
  %v5346 = vpack.c.bf16 %v5342, %v5342
  %v5347 = vpack.c.bf16 %v5345, %v5345
  %v5348 = vpack.c.bf16 %v5339, %v5339
  %v5349 = vld [vmem:[%s5] sm:$0xf]
  %v5350 = vld [vmem:[%s5 + $0x4] sm:$0xf]
  %v5351 = vld [vmem:[%s5 + $0x8] sm:$0xf]
  %v5352 = vld [vmem:[%s5 + $0xc] sm:$0xf]
  %v5353 = vld [vmem:[%s5 + $0x10] sm:$0xf]
  %v5354 = vld [vmem:[%s5 + $0x14] sm:$0xf]
  %v5355 = vld [vmem:[%s5 + $0x18] sm:$0xf]
  %v5356 = vld [vmem:[%s5 + $0x1c] sm:$0xf]
  %v5357 = vld [vmem:[%s5 + $0x20] sm:$0xf]
  %v5358 = vld [vmem:[%s5 + $0x24] sm:$0xf]
  %v5359 = vld [vmem:[%s5 + $0x28] sm:$0xf]
  %v5360 = vld [vmem:[%s5 + $0x2c] sm:$0xf]
  %v5361 = vld [vmem:[%s5 + $0x30] sm:$0xf]
  %v5362 = vld [vmem:[%s5 + $0x34] sm:$0xf]
  %v5363 = vld [vmem:[%s5 + $0x38] sm:$0xf]
  %v5364 = vld [vmem:[%s5 + $0x3c] sm:$0xf]
  %v5365 = vld [vmem:[%s5 + $0x40] sm:$0xf]
  %v5366 = vld [vmem:[%s5 + $0x44] sm:$0xf]
  %v5367 = vld [vmem:[%s5 + $0x48] sm:$0xf]
  %v5368 = vld [vmem:[%s5 + $0x4c] sm:$0xf]
  %v5369 = vld [vmem:[%s5 + $0x50] sm:$0xf]
  %v5370 = vld [vmem:[%s5 + $0x54] sm:$0xf]
  %v5371 = vld [vmem:[%s5 + $0x58] sm:$0xf]
  %v5372 = vld [vmem:[%s5 + $0x5c] sm:$0xf]
  %v5373 = vld [vmem:[%s5 + $0x60] sm:$0xf]
  %v5374 = vld [vmem:[%s5 + $0x64] sm:$0xf]
  %v5375 = vld [vmem:[%s5 + $0x68] sm:$0xf]
  %v5376 = vld [vmem:[%s5 + $0x6c] sm:$0xf]
  %v5377 = vld [vmem:[%s5 + $0x70] sm:$0xf]
  %v5378 = vld [vmem:[%s5 + $0x74] sm:$0xf]
  %v5379 = vld [vmem:[%s5 + $0x78] sm:$0xf]
  %v5380 = vld [vmem:[%s5 + $0x7c] sm:$0xf]
  %v5381 = vld [vmem:[%s5 + $0x80] sm:$0xf]
  %v5382 = vld [vmem:[%s5 + $0x84] sm:$0xf]
  %v5383 = vld [vmem:[%s5 + $0x88] sm:$0xf]
  %v5384 = vld [vmem:[%s5 + $0x8c] sm:$0xf]
  %v5385 = vld [vmem:[%s5 + $0x90] sm:$0xf]
  %v5386 = vld [vmem:[%s5 + $0x94] sm:$0xf]
  %v5387 = vld [vmem:[%s5 + $0x98] sm:$0xf]
  %v5388 = vld [vmem:[%s5 + $0x9c] sm:$0xf]
  %v5389 = vld [vmem:[%s6] sm:$0x1]
  %v5391 = vlaneseq
  %v5392 = vshrl.u32 %v5391, 7
  %v5393 = vsub.s32 0, %v5392
  %v5394 = vrot.slane %v5389, %v5393
  %v5436 = vunpack.c.l.b16 %v5349
  %v5437 = vunpack.c.l.b16 %v5350
  %v5438 = vunpack.c.l.b16 %v5351
  %v5439 = vunpack.c.l.b16 %v5352
  %v5440 = vunpack.c.l.b16 %v5353
  %v5441 = vunpack.c.l.b16 %v5354
  %v5442 = vunpack.c.l.b16 %v5355
  %v5443 = vunpack.c.l.b16 %v5356
  %v5444 = vunpack.c.l.b16 %v5357
  %v5445 = vunpack.c.l.b16 %v5358
  %v5446 = vunpack.c.l.b16 %v5359
  %v5447 = vunpack.c.l.b16 %v5360
  %v5448 = vunpack.c.l.b16 %v5361
  %v5449 = vunpack.c.l.b16 %v5362
  %v5450 = vunpack.c.l.b16 %v5363
  %v5451 = vunpack.c.l.b16 %v5364
  %v5452 = vunpack.c.l.b16 %v5365
  %v5453 = vunpack.c.l.b16 %v5366
  %v5454 = vunpack.c.l.b16 %v5367
  %v5455 = vunpack.c.l.b16 %v5368
  %v5456 = vunpack.c.l.b16 %v5369
  %v5457 = vunpack.c.l.b16 %v5370
  %v5458 = vunpack.c.l.b16 %v5371
  %v5459 = vunpack.c.l.b16 %v5372
  %v5460 = vunpack.c.l.b16 %v5373
  %v5461 = vunpack.c.l.b16 %v5374
  %v5462 = vunpack.c.l.b16 %v5375
  %v5463 = vunpack.c.l.b16 %v5376
  %v5464 = vunpack.c.l.b16 %v5377
  %v5465 = vunpack.c.l.b16 %v5378
  %v5466 = vunpack.c.l.b16 %v5379
  %v5467 = vunpack.c.l.b16 %v5380
  %v5468 = vunpack.c.l.b16 %v5381
  %v5469 = vunpack.c.l.b16 %v5382
  %v5470 = vunpack.c.l.b16 %v5383
  %v5471 = vunpack.c.l.b16 %v5384
  %v5472 = vunpack.c.l.b16 %v5385
  %v5473 = vunpack.c.l.b16 %v5386
  %v5474 = vunpack.c.l.b16 %v5387
  %v5475 = vunpack.c.l.b16 %v5388
  %v5476 = vpack.c.b16 %v5437, %v5436
  %v5477 = vpack.c.b16 %v5439, %v5438
  %v5478 = vpack.c.b16 %v5441, %v5440
  %v5479 = vpack.c.b16 %v5443, %v5442
  %v5480 = vpack.c.b16 %v5445, %v5444
  %v5481 = vpack.c.b16 %v5447, %v5446
  %v5482 = vpack.c.b16 %v5449, %v5448
  %v5483 = vpack.c.b16 %v5451, %v5450
  %v5484 = vpack.c.b16 %v5453, %v5452
  %v5485 = vpack.c.b16 %v5455, %v5454
  %v5486 = vpack.c.b16 %v5457, %v5456
  %v5487 = vpack.c.b16 %v5459, %v5458
  %v5488 = vpack.c.b16 %v5461, %v5460
  %v5489 = vpack.c.b16 %v5463, %v5462
  %v5490 = vpack.c.b16 %v5465, %v5464
  %v5491 = vpack.c.b16 %v5467, %v5466
  %v5492 = vpack.c.b16 %v5469, %v5468
  %v5493 = vpack.c.b16 %v5471, %v5470
  %v5494 = vpack.c.b16 %v5473, %v5472
  %v5495 = vpack.c.b16 %v5475, %v5474
  %vm5516 = vcmask 523264
  %v5518 = vsel %vm5516, %v5348, 0
  %5520 = vmatprep.subr.bf16.mxu0 0
  %5521 = vmatpush1.bf16.msra.mxu0 %v5483
  %5522 = vmatprep.subr.bf16.mxu0 0
  %5523 = vmatpush1.bf16.msra.mxu0 %v5482
  %5524 = vmatprep.subr.bf16.mxu0 0
  %5525 = vmatpush1.bf16.msra.mxu0 %v5481
  %5526 = vmatprep.subr.bf16.mxu0 0
  %5527 = vmatpush1.bf16.msra.mxu0 %v5480
  %5528 = vmatprep.subr.bf16.mxu0 0
  %5529 = vmatpush1.bf16.msra.mxu0 %v5479
  %5530 = vmatprep.subr.bf16.mxu0 0
  %5531 = vmatpush1.bf16.msra.mxu0 %v5478
  %5532 = vmatprep.subr.bf16.mxu0 0
  %5533 = vmatpush1.bf16.msra.mxu0 %v5477
  %5534 = vmatprep.subr.bf16.mxu0 0
  %5535 = vmatpush1.bf16.msra.mxu0 %v5476
  %5536 = vmatprep.subr.bf16.mxu0 0
  %5537 = vmatpush2.bf16.msra.mxu0 %v5491
  %5538 = vmatprep.subr.bf16.mxu0 0
  %5539 = vmatpush2.bf16.msra.mxu0 %v5490
  %5540 = vmatprep.subr.bf16.mxu0 0
  %5541 = vmatpush2.bf16.msra.mxu0 %v5489
  %5542 = vmatprep.subr.bf16.mxu0 0
  %5543 = vmatpush2.bf16.msra.mxu0 %v5488
  %5544 = vmatprep.subr.bf16.mxu0 0
  %5545 = vmatpush2.bf16.msra.mxu0 %v5487
  %5546 = vmatprep.subr.bf16.mxu0 0
  %5547 = vmatpush2.bf16.msra.mxu0 %v5486
  %5548 = vmatprep.subr.bf16.mxu0 0
  %5549 = vmatpush2.bf16.msra.mxu0 %v5485
  %5550 = vmatprep.subr.bf16.mxu0 0
  %5551 = vmatpush2.bf16.msra.mxu0 %v5484
  %5552 = vmatprep.mubr.bf16.mxu0 %v5347
  %5553 = vmatmul.mubr.bf16.gmra.mxu0 %v5346
  %v5554 = vpop.f32.mrf.mxu0
  %v5555 = vadd.f32 %v5394, %v5554
  %v5556 = vpop.f32.mrf.mxu0
  %v5557 = vpop.f32.mrf.mxu0
  %v5558 = vpop.f32.mrf.mxu0
  %5559 = vdwg.mxu0
  %5560 = vmatprep.subr.bf16.mxu0 0
  %5561 = vmatpush1.bf16.msra.mxu0 0
  %5562 = vmatprep.subr.bf16.mxu0 0
  %5563 = vmatpush1.bf16.msra.mxu0 0
  %5564 = vmatprep.subr.bf16.mxu0 0
  %5565 = vmatpush1.bf16.msra.mxu0 0
  %5566 = vmatprep.subr.bf16.mxu0 0
  %5567 = vmatpush1.bf16.msra.mxu0 0
  %5568 = vmatprep.subr.bf16.mxu0 0
  %5569 = vmatpush1.bf16.msra.mxu0 %v5495
  %5570 = vmatprep.subr.bf16.mxu0 0
  %5571 = vmatpush1.bf16.msra.mxu0 %v5494
  %5572 = vmatprep.subr.bf16.mxu0 0
  %5573 = vmatpush1.bf16.msra.mxu0 %v5493
  %5574 = vmatprep.subr.bf16.mxu0 0
  %5575 = vmatpush1.bf16.msra.mxu0 %v5492
  %5576 = vmatprep.subr.bf16.mxu0 0
  %5577 = vmatpush2.bf16.msra.mxu0 0
  %5578 = vmatprep.subr.bf16.mxu0 0
  %5579 = vmatpush2.bf16.msra.mxu0 0
  %5580 = vmatprep.subr.bf16.mxu0 0
  %5581 = vmatpush2.bf16.msra.mxu0 0
  %5582 = vmatprep.subr.bf16.mxu0 0
  %5583 = vmatpush2.bf16.msra.mxu0 0
  %5584 = vmatprep.subr.bf16.mxu0 0
  %5585 = vmatpush2.bf16.msra.mxu0 0
  %5586 = vmatprep.subr.bf16.mxu0 0
  %5587 = vmatpush2.bf16.msra.mxu0 0
  %5588 = vmatprep.subr.bf16.mxu0 0
  %5589 = vmatpush2.bf16.msra.mxu0 0
  %5590 = vmatprep.subr.bf16.mxu0 0
  %5591 = vmatpush2.bf16.msra.mxu0 0
  %5592 = vmatprep.mubr.bf16.mxu0 0
  %5593 = vmatmul.mubr.bf16.gmra.mxu0 %v5518
  %v5594 = vpop.f32.mrf.mxu0
  %v5595 = vadd.f32 %v5555, %v5594
  %v5596 = vpop.f32.mrf.mxu0
  %v5597 = vpop.f32.mrf.mxu0
  %v5598 = vpop.f32.mrf.mxu0
  %5599 = vdwg.mxu0
  %vm5600 = vcmask 80896
  %5601 = vst.msk [vmem:[%s7] sm:$0xff] %vm5600, %v5595
  // Predicated region
  $region30: #{net_forward.1} parent=0 // pred_check
    _
  $region31: #{net_forward.1} parent=0 // pred_check_branch
    %5603 = sbr.rel (0) target = $region33
  $region32: #{net_forward.1} parent=0 // pred_region
    _
  $region33: #{net_forward.1} parent=0 // pred_fallthru
    _
  // Predicated region
  $region34: #{net_forward.1} parent=0 // pred_check
    _
  $region35: #{net_forward.1} parent=0 // pred_check_branch
    %5605 = sbr.rel (0) target = $region37
  $region36: #{net_forward.1} parent=0 // pred_region
    _
  $region37: #{net_forward.1} parent=0 // pred_fallthru
    _

</llo_original>
